<compile_context>
chip_gen: v5e
topology: v5e:2x2
jax: 0.10.0
libtpu: 0.0.40
codegen_flags: <defaults>
</compile_context>

<pallas_src>
import functools

import numpy as np
import jax
import jax.numpy as jnp
from jax import lax
from jax.experimental import pallas as pl
from jax.experimental.pallas import tpu as pltpu

LANE = 128


# ---------------------------------------------------------------------------
# hardware probes (generation-aware tuning, graceful fallback)
# ---------------------------------------------------------------------------
@functools.lru_cache(maxsize=1)
def _vmem_capacity_bytes():
    try:
        return int(pltpu.get_tpu_info().vmem_capacity_bytes)
    except Exception:
        return 64 * 1024 * 1024            # conservative: v7x per-TC VMEM


def _vmem_limit_bytes():
    cap = _vmem_capacity_bytes()
    # ~5/8 of physical: ~40 MiB on 64 MiB parts (v7x), ~80 MiB on 128 MiB parts
    # (v5e/v6e); leaves headroom for implicit scratch + output double buffers.
    return min(cap * 5 // 8, 96 * 1024 * 1024)


def _probe_copy_kernel(x_ref, o_ref):
    o_ref[...] = x_ref[...]


@functools.lru_cache(maxsize=1)
def _single_buffer_supported():
    """True iff BlockSpec(pipeline_mode=pl.Buffered(1)) lowers on this JAX/TPU."""
    try:
        spec = pl.BlockSpec((8, LANE), lambda i: (0, 0),
                            pipeline_mode=pl.Buffered(1))
        f = pl.pallas_call(
            _probe_copy_kernel,
            out_shape=jax.ShapeDtypeStruct((8, LANE), jnp.float32),
            grid=(1,),
            in_specs=[spec],
            out_specs=pl.BlockSpec((8, LANE), lambda i: (0, 0)))
        jax.block_until_ready(f(jnp.zeros((8, LANE), jnp.float32)))
        return True
    except Exception:
        return False


def _in_spec(shape, index_map, *, single=False):
    """BlockSpec; blocks whose index_map does not vary along the inner grid axis
    get single buffering so the big residents are not duplicated in VMEM."""
    if single and _single_buffer_supported():
        return pl.BlockSpec(shape, index_map, pipeline_mode=pl.Buffered(1))
    return pl.BlockSpec(shape, index_map)


def _cparams():
    return pltpu.CompilerParams(
        dimension_semantics=("parallel", "parallel"),
        vmem_limit_bytes=_vmem_limit_bytes(),
    )


# ---------------------------------------------------------------------------
# small helpers (host side)
# ---------------------------------------------------------------------------
def _round_up(x, m):
    return (x + m - 1) // m * m


def _pick_row_tile(h2, max_tr):
    """Largest divisor of h2 that is <= max_tr (output rows per grid step)."""
    for tr in range(min(h2, max_tr), 0, -1):
        if h2 % tr == 0:
            return tr
    return h2


def _default_max_row_tile(w2, coutp):
    """Generation-aware row-tile cap: more rows per step on big-VMEM parts."""
    cap = _vmem_capacity_bytes()
    small_vmem = cap <= (64 << 20)
    row_cap = 16 if small_vmem else 32
    budget = (4 << 20) if small_vmem else (8 << 20)
    by_bytes = budget // max(1, w2 * coutp * 2 * 2)   # bf16 out, double-buffered
    return max(1, min(row_cap, int(by_bytes)))


def bilinear_matrix(out_size, in_size):
    """numpy interpolation matrix for UpsamplingBilinear2d (align_corners=True)."""
    M = np.zeros((out_size, in_size), np.float32)
    if in_size == 1:
        M[:, 0] = 1.0
        return M
    scale = (in_size - 1) / (out_size - 1)
    for o in range(out_size):
        s = o * scale
        i0 = min(int(np.floor(s)), in_size - 2)
        f = s - i0
        M[o, i0] = 1.0 - f
        M[o, i0 + 1] = f
    return M


def _wh_tiles(h2, h, tr, dtype=jnp.bfloat16):
    """Per-row-tile (tr+2, h) slices of the zero-padded H interpolation matrix.
    Rows 0 and h2+1 are all-zero -> they realize the 3x3 conv's zero padding."""
    M = np.zeros((h2 + 2, h), np.float32)
    M[1:h2 + 1] = bilinear_matrix(h2, h)
    n = h2 // tr
    return jnp.asarray(np.stack([M[r * tr: r * tr + tr + 2] for r in range(n)]),
                       dtype=dtype)


def _ww_pad(w2, w, dtype=jnp.float32):
    """Zero-padded W interpolation matrix: (w2+2, w); zero first/last rows give
    the conv's left/right zero padding for free."""
    M = np.zeros((w2 + 2, w), np.float32)
    M[1:w2 + 1] = bilinear_matrix(w2, w)
    return jnp.asarray(M, dtype=dtype)


def _fold_weight(w_hwio, coutp):
    """(3,3,Ci,Co) -> zero-pad Co to coutp (lane-dense) and fold the kw taps
    into the contraction dim: (3, 3*Ci, coutp), bf16."""
    kh, kw, ci, co = w_hwio.shape
    w = jnp.pad(w_hwio, ((0, 0), (0, 0), (0, 0), (0, coutp - co)))
    return w.reshape(kh, kw * ci, coutp).astype(jnp.bfloat16)


def _pad_vec(v, coutp):
    return jnp.pad(v, (0, coutp - v.shape[0])).reshape(1, coutp).astype(jnp.float32)


# ---------------------------------------------------------------------------
# in-kernel helpers
# ---------------------------------------------------------------------------
def _rows_with_halo(ref, row0, tr, h_total):
    """Gather rows [row0-1, row0+tr+1) of ref[0] (block (1, Ht, Wt, C)),
    zero-filling halo rows that fall outside the image (conv zero padding).
    Returns a (tr+2, Wt, C) value."""
    body = ref[0, pl.ds(row0, tr), :, :]
    top = ref[0, pl.ds(jnp.maximum(row0 - 1, 0), 1), :, :]
    top = jnp.where(row0 > 0, top, jnp.zeros_like(top))
    bot = ref[0, pl.ds(jnp.minimum(row0 + tr, h_total - 1), 1), :, :]
    bot = jnp.where(row0 + tr < h_total, bot, jnp.zeros_like(bot))
    return jnp.concatenate([top, body, bot], axis=0)


def _pad_cols(t):
    """Add one zero column on each side (conv left/right zero padding)."""
    z = jnp.zeros((t.shape[0], 1, t.shape[2]), t.dtype)
    return jnp.concatenate([z, t, z], axis=1)


def _accum_conv3x3(acc, xt, w_ref):
    """xt: (tr+2, w2+2, cin) bf16 activations incl. row halo and column pad.
    w_ref: (3, 3*cin, coutp) bf16 with the kw taps folded into K.
    The im2col column-shift concat is hoisted OUT of the dh loop (one concat
    per source tile instead of three); per-dh slicing is a free leading-dim
    slice.  3 MXU matmuls (K = 3*cin) instead of 9; f32 accumulation."""
    tr = xt.shape[0] - 2
    w2 = xt.shape[1] - 2
    cin = xt.shape[2]
    xt_cat = jnp.concatenate(
        [xt[:, 0:w2, :], xt[:, 1:w2 + 1, :], xt[:, 2:w2 + 2, :]],
        axis=-1)                                                # (tr+2, w2, 3*cin)
    for dh in range(3):
        patch = xt_cat[dh:dh + tr]                              # free leading slice
        acc = acc + jnp.dot(patch.reshape(tr * w2, 3 * cin), w_ref[dh],
                            preferred_element_type=jnp.float32)
    return acc


# ---------------------------------------------------------------------------
# Kernel 1: fused bilinear-2x upsample (H pass) + channel concat + conv1+BN+ReLU
# ---------------------------------------------------------------------------
def _up_concat_conv1_kernel(*refs, has_skip):
    if has_skip:
        (wh_ref, xw_ref, skip_ref, w_up_ref, w_sk_ref,
         scale_ref, shift_ref, o_ref) = refs
    else:
        (wh_ref, xw_ref, w_up_ref, scale_ref, shift_ref, o_ref) = refs
        skip_ref = w_sk_ref = None

    tr, w2, coutp = o_ref.shape[1], o_ref.shape[2], o_ref.shape[3]
    r = pl.program_id(1)
    row0 = pl.multiple_of(r * tr, tr)

    # H-direction bilinear pass only (the W pass + left/right zero padding are
    # precomputed in the wrapper as xw).  Zero first/last rows of wh on the
    # boundary tiles realize the conv's top/bottom zero padding for free, so
    # neither the upsampled tensor nor a padded copy ever touches HBM.
    wh = wh_ref[0]                                   # (tr+2, H) bf16
    xw = xw_ref[0]                                   # (H, W2+2, Cin) bf16
    u = jnp.einsum("rH,HvC->rvC", wh, xw,
                   preferred_element_type=jnp.float32)
    u = u.astype(jnp.bfloat16)                       # (tr+2, w2+2, Cin)

    # conv1 as a K-split: upsampled part + skip part (channel concat).
    acc = jnp.zeros((tr * w2, coutp), jnp.float32)
    acc = _accum_conv3x3(acc, u, w_up_ref)
    if has_skip:
        h2 = skip_ref.shape[1]
        sk = _rows_with_halo(skip_ref, row0, tr, h2)       # (tr+2, w2, Cs) bf16
        acc = _accum_conv3x3(acc, _pad_cols(sk), w_sk_ref)

    y = acc * scale_ref[...] + shift_ref[...]              # folded BN (inference)
    y = jnp.maximum(y, 0.0)                                 # ReLU
    o_ref[0] = y.reshape(tr, w2, coutp).astype(o_ref.dtype)


# ---------------------------------------------------------------------------
# Kernel 2: 3x3 conv (pad=1, no bias) + folded BN + ReLU, row-tiled
# ---------------------------------------------------------------------------
def _conv3x3_bn_relu_kernel(x_ref, w_ref, scale_ref, shift_ref, o_ref):
    tr, w2, coutp = o_ref.shape[1], o_ref.shape[2], o_ref.shape[3]
    h2 = x_ref.shape[1]
    r = pl.program_id(1)
    row0 = pl.multiple_of(r * tr, tr)

    # TODO(synk): kernel 1 could write y1 with a 1-column zero border so this
    #             _pad_cols copy disappears (v5e vst-slot optimization).
    xt = _pad_cols(_rows_with_halo(x_ref, row0, tr, h2))   # (tr+2, w2+2, C) bf16
    acc = jnp.zeros((tr * w2, coutp), jnp.float32)
    acc = _accum_conv3x3(acc, xt, w_ref)

    y = acc * scale_ref[...] + shift_ref[...]
    y = jnp.maximum(y, 0.0)
    o_ref[0] = y.reshape(tr, w2, coutp).astype(o_ref.dtype)


# ---------------------------------------------------------------------------
# Wrapper: PyTorch-layout forward pass
# ---------------------------------------------------------------------------
def decoder_block_forward(x_nchw, skip_nchw, params, max_row_tile=None):
    """Pallas DecoderBlock forward.  Inputs NCHW (PyTorch), output NCHW f32."""
    x = jnp.transpose(x_nchw, (0, 2, 3, 1)).astype(jnp.float32)      # NHWC
    N, H, W, Cin = x.shape
    H2, W2 = 2 * H, 2 * W
    Cout = params["w1"].shape[-1]
    coutp = _round_up(Cout, LANE)            # lane-dense output channels
    if max_row_tile is None:
        max_row_tile = _default_max_row_tile(W2, coutp)
    TR = _pick_row_tile(H2, max_row_tile)    # output rows per grid step
    n_tiles = H2 // TR
    grid = (N, n_tiles)

    # W-direction bilinear pass (and the conv's left/right zero padding, via
    # zero first/last matrix rows) hoisted out of the kernel: the in-kernel
    # version contracted over the sublane axis -> one XLU relayout per step.
    ww_p = _ww_pad(W2, W, jnp.float32)                       # (W2+2, W)
    xw = jnp.einsum("vW,nHWC->nHvC", ww_p, x,
                    preferred_element_type=jnp.float32).astype(jnp.bfloat16)
    wh_t = _wh_tiles(H2, H, TR, jnp.bfloat16)                # (n_tiles, TR+2, H)

    has_skip = skip_nchw is not None

    in_specs = [
        pl.BlockSpec((1, TR + 2, H), lambda n, r: (r, 0, 0)),          # varies w/ r
        _in_spec((1, H, W2 + 2, Cin), lambda n, r: (n, 0, 0, 0), single=True),
    ]
    args = [wh_t, xw]
    if has_skip:
        skip = jnp.transpose(skip_nchw, (0, 2, 3, 1)).astype(jnp.bfloat16)
        Cs = skip.shape[-1]
        in_specs.append(_in_spec((1, H2, W2, Cs), lambda n, r: (n, 0, 0, 0),
                                 single=True))
        args.append(skip)

    w_up = _fold_weight(params["w1"][:, :, :Cin, :], coutp)
    in_specs.append(_in_spec(w_up.shape, lambda n, r: (0, 0, 0), single=True))
    args.append(w_up)
    if has_skip:
        w_sk = _fold_weight(params["w1"][:, :, Cin:, :], coutp)
        in_specs.append(_in_spec(w_sk.shape, lambda n, r: (0, 0, 0), single=True))
        args.append(w_sk)

    scale1 = _pad_vec(params["scale1"], coutp)
    shift1 = _pad_vec(params["shift1"], coutp)
    in_specs += [_in_spec((1, coutp), lambda n, r: (0, 0), single=True)] * 2
    args += [scale1, shift1]

    y1 = pl.pallas_call(
        functools.partial(_up_concat_conv1_kernel, has_skip=has_skip),
        out_shape=jax.ShapeDtypeStruct((N, H2, W2, coutp), jnp.bfloat16),
        grid_spec=pltpu.PrefetchScalarGridSpec(
            num_scalar_prefetch=0, grid=grid,
            in_specs=in_specs,
            out_specs=pl.BlockSpec((1, TR, W2, coutp), lambda n, r: (n, r, 0, 0))),
        compiler_params=_cparams(),
    )(*args)

    # conv2 on the lane-dense bf16 intermediate (padded channels are exactly 0
    # and their weights are 0, so the padding is mathematically inert).
    w2_pad_in = jnp.pad(params["w2"], ((0, 0), (0, 0), (0, coutp - Cout), (0, 0)))
    w2k = _fold_weight(w2_pad_in, coutp)                  # (3, 3*coutp, coutp)
    scale2 = _pad_vec(params["scale2"], coutp)
    shift2 = _pad_vec(params["shift2"], coutp)

    out_p = pl.pallas_call(
        _conv3x3_bn_relu_kernel,
        out_shape=jax.ShapeDtypeStruct((N, H2, W2, coutp), jnp.bfloat16),
        grid_spec=pltpu.PrefetchScalarGridSpec(
            num_scalar_prefetch=0, grid=grid,
            in_specs=[
                _in_spec((1, H2, W2, coutp), lambda n, r: (n, 0, 0, 0), single=True),
                _in_spec(w2k.shape, lambda n, r: (0, 0, 0), single=True),
                _in_spec((1, coutp), lambda n, r: (0, 0), single=True),
                _in_spec((1, coutp), lambda n, r: (0, 0), single=True),
            ],
            out_specs=pl.BlockSpec((1, TR, W2, coutp), lambda n, r: (n, r, 0, 0))),
        compiler_params=_cparams(),
    )(y1, w2k, scale2, shift2)

    # channel-slice + NCHW transpose at bf16 (half the bytes), then widen to f32.
    out = out_p[:, :, :, :Cout]
    return jnp.transpose(out, (0, 3, 1, 2)).astype(jnp.float32)


# ---------------------------------------------------------------------------
# Parameters + pure-JAX f32 reference for verification
# ---------------------------------------------------------------------------
def make_params(key, in_channels, out_channels, skip_channels):
    k1, k2 = jax.random.split(key)
    c1_in = in_channels + skip_channels
    # PyTorch Conv2d weights are (Cout, Cin, kh, kw); store as HWIO for NHWC conv.
    w1 = jax.random.normal(k1, (out_channels, c1_in, 3, 3), jnp.float32) * 0.1
    w2 = jax.random.normal(k2, (out_channels, out_channels, 3, 3), jnp.float32) * 0.1
    w1_hwio = jnp.transpose(w1, (2, 3, 1, 0))
    w2_hwio = jnp.transpose(w2, (2, 3, 1, 0))
    # BatchNorm2d defaults: gamma=1, beta=0, running_mean=0, running_var=1, eps=1e-5.
    eps = 1e-5
    gamma = jnp.ones((out_channels,), jnp.float32)
    beta = jnp.zeros((out_channels,), jnp.float32)
    rmean = jnp.zeros((out_channels,), jnp.float32)
    rvar = jnp.ones((out_channels,), jnp.float32)
    scale = gamma / jnp.sqrt(rvar + eps)
    shift = beta - rmean * scale
    return dict(w1=w1_hwio, w2=w2_hwio, scale1=scale, shift1=shift,
                scale2=scale, shift2=shift)


def reference_forward(x_nchw, skip_nchw, params):
    x = jnp.transpose(x_nchw, (0, 2, 3, 1))
    N, H, W, C = x.shape
    wh = jnp.asarray(bilinear_matrix(2 * H, H))
    ww = jnp.asarray(bilinear_matrix(2 * W, W))
    x = jnp.einsum("hH,nHWC->nhWC", wh, x)
    x = jnp.einsum("wW,nhWC->nhwC", ww, x)
    if skip_nchw is not None:
        x = jnp.concatenate([x, jnp.transpose(skip_nchw, (0, 2, 3, 1))], axis=-1)

    def conv_bn_relu(x, w, scale, shift):
        y = lax.conv_general_dilated(
            x, w, window_strides=(1, 1), padding="SAME",
            dimension_numbers=("NHWC", "HWIO", "NHWC"))
        y = y * scale + shift
        return jnp.maximum(y, 0.0)

    x = conv_bn_relu(x, params["w1"], params["scale1"], params["shift1"])
    x = conv_bn_relu(x, params["w2"], params["scale2"], params["shift2"])
    return jnp.transpose(x, (0, 3, 1, 2))


if __name__ == "__main__":
    key = jax.random.PRNGKey(0)
    k_x, k_skip, k_p = jax.random.split(key, 3)

    # Small shapes: batch=2, in_channels=4, skip_channels=4, out_channels=8,
    # spatial 16x16 (upsampled to 32x32).
    N, Cin, Cskip, Cout, H, W = 2, 4, 4, 8, 16, 16
    x = jax.random.normal(k_x, (N, Cin, H, W), jnp.float32)              # NCHW
    skip = jax.random.normal(k_skip, (N, Cskip, 2 * H, 2 * W), jnp.float32)

    params = make_params(k_p, Cin, Cout, Cskip)

    # max_row_tile=8 -> 4 row tiles per image, so the interior-halo paths of
    # both convs are exercised regardless of the generation-aware default.
    out = jax.block_until_ready(
        decoder_block_forward(x, skip, params, max_row_tile=8))
    ref = jax.block_until_ready(reference_forward(x, skip, params))

    assert out.shape == (N, Cout, 2 * H, 2 * W), out.shape
    # bf16 MXU matmuls, bf16 intermediates/outputs (f32 accumulation) ->
    # compare at bf16-chain tolerance.
    max_err = float(jnp.max(jnp.abs(out - ref)))
    assert jnp.allclose(out, ref, atol=3e-2, rtol=3e-2), max_err

    print("KERNEL_OK")
</pallas_src>

<mosaic_0001>
module attributes {stable_mosaic.version = 11 : i64} {
  func.func @_probe_copy_kernel(%arg0: i32, %arg1: memref<8x128xf32, #tpu.memory_space<vmem>>, %arg2: memref<8x128xf32, #tpu.memory_space<vmem>>) attributes {dimension_semantics = [#tpu.dimension_semantics<arbitrary>], iteration_bounds = array<i64: 1>, scalar_prefetch = 0 : i64, scratch_operands = 0 : i64, tpu.core_type = #tpu.core_type<tc>, window_params = [{pipeline_mode = #tpu.pipeline_mode<synchronous>, transform_indices = @transform_0, window_bounds = array<i64: 8, 128>}, {pipeline_mode = #tpu.pipeline_mode<synchronous>, transform_indices = @transform_1, window_bounds = array<i64: 8, 128>}]} {
    %c0 = arith.constant 0 : index
    %c0_0 = arith.constant 0 : index
    %0 = vector.load %arg1[%c0, %c0_0] : memref<8x128xf32, #tpu.memory_space<vmem>>, vector<8x128xf32>
    %c0_1 = arith.constant 0 : index
    %c0_2 = arith.constant 0 : index
    %1 = vector.load %arg2[%c0_1, %c0_2] : memref<8x128xf32, #tpu.memory_space<vmem>>, vector<8x128xf32>
    tpu.vector_store %arg2[%c0_1, %c0_2], %0 {strides = array<i32>} : memref<8x128xf32, #tpu.memory_space<vmem>>, vector<8x128xf32>,
    return
  }
  func.func @transform_0(%arg0: i32) -> (i32, i32) {
    %c0_i32 = arith.constant 0 : i32
    %c0_i32_0 = arith.constant 0 : i32
    %c0_i32_1 = arith.constant 0 : i32
    return %c0_i32, %c0_i32_0 : i32, i32
  }
  func.func @transform_1(%arg0: i32) -> (i32, i32) {
    %c0_i32 = arith.constant 0 : i32
    %c0_i32_0 = arith.constant 0 : i32
    %c0_i32_1 = arith.constant 0 : i32
    return %c0_i32, %c0_i32_0 : i32, i32
  }
}

module attributes {stable_mosaic.version = 11 : i64} {
  func.func @_up_concat_conv1_kernel(%arg0: i32, %arg1: i32, %arg2: memref<1x10x16xbf16, #tpu.memory_space<vmem>>, %arg3: memref<1x16x34x4xbf16, #tpu.memory_space<vmem>>, %arg4: memref<1x32x32x4xbf16, #tpu.memory_space<vmem>>, %arg5: memref<3x12x128xbf16, #tpu.memory_space<vmem>>, %arg6: memref<3x12x128xbf16, #tpu.memory_space<vmem>>, %arg7: memref<1x128xf32, #tpu.memory_space<vmem>>, %arg8: memref<1x128xf32, #tpu.memory_space<vmem>>, %arg9: memref<1x8x32x128xbf16, #tpu.memory_space<vmem>>) attributes {dimension_semantics = [#tpu.dimension_semantics<parallel>, #tpu.dimension_semantics<parallel>], iteration_bounds = array<i64: 2, 4>, scalar_prefetch = 0 : i64, scratch_operands = 0 : i64, tpu.core_type = #tpu.core_type<tc>, window_params = [{transform_indices = @transform_0, window_bounds = array<i64: 1, 10, 16>}, {transform_indices = @transform_1, window_bounds = array<i64: 1, 16, 34, 4>}, {transform_indices = @transform_2, window_bounds = array<i64: 1, 32, 32, 4>}, {pipeline_mode = #tpu.pipeline_mode<synchronous>, transform_indices = @transform_3, window_bounds = array<i64: 3, 12, 128>}, {pipeline_mode = #tpu.pipeline_mode<synchronous>, transform_indices = @transform_4, window_bounds = array<i64: 3, 12, 128>}, {pipeline_mode = #tpu.pipeline_mode<synchronous>, transform_indices = @transform_5, window_bounds = array<i64: 1, 128>}, {pipeline_mode = #tpu.pipeline_mode<synchronous>, transform_indices = @transform_6, window_bounds = array<i64: 1, 128>}, {transform_indices = @transform_7, window_bounds = array<i64: 1, 8, 32, 128>}]} {
    %c8_i32 = arith.constant 8 : i32
    %0 = arith.muli %arg1, %c8_i32 : i32
    %1 = tpu.assume_multiple %0, 8 : i32
    %c0 = arith.constant 0 : index
    %c0_0 = arith.constant 0 : index
    %c0_1 = arith.constant 0 : index
    %2 = vector.load %arg2[%c0, %c0_0, %c0_1] : memref<1x10x16xbf16, #tpu.memory_space<vmem>>, vector<1x10x16xbf16>
    %3 = vector.shape_cast %2 : vector<1x10x16xbf16> to vector<10x16xbf16>
    %c0_2 = arith.constant 0 : index
    %c0_3 = arith.constant 0 : index
    %c0_4 = arith.constant 0 : index
    %c0_5 = arith.constant 0 : index
    %4 = vector.load %arg3[%c0_2, %c0_3, %c0_4, %c0_5] : memref<1x16x34x4xbf16, #tpu.memory_space<vmem>>, vector<1x16x34x4xbf16>
    %5 = vector.shape_cast %4 : vector<1x16x34x4xbf16> to vector<16x34x4xbf16>
    "tpu.trace_start"() <{level = 10 : i32, message = "rH,HvC->rvC"}> : () -> ()
    %cst = arith.constant dense<0.000000e+00> : vector<10x34x4xf32>
    %6 = tpu.matmul %3, %5, %cst {dimension_numbers = #tpu.dot_dimension_numbers<[1], [0], [0], [1, 2], [0, 0, 1, 1, 1, 2], [], []>} : vector<10x16xbf16>, vector<16x34x4xbf16>, vector<10x34x4xf32> -> vector<10x34x4xf32>
    "tpu.trace_stop"() : () -> ()
    %7 = arith.truncf %6 : vector<10x34x4xf32> to vector<10x34x4xbf16>
    %cst_6 = arith.constant 0.000000e+00 : f32
    %8 = vector.broadcast %cst_6 : f32 to vector<256x128xf32>
    %9 = vector.extract_strided_slice %7 {offsets = [0, 0, 0], sizes = [10, 32, 4], strides = [1, 1, 1]} : vector<10x34x4xbf16> to vector<10x32x4xbf16>
    %10 = vector.extract_strided_slice %7 {offsets = [0, 1, 0], sizes = [10, 32, 4], strides = [1, 1, 1]} : vector<10x34x4xbf16> to vector<10x32x4xbf16>
    %11 = vector.extract_strided_slice %7 {offsets = [0, 2, 0], sizes = [10, 32, 4], strides = [1, 1, 1]} : vector<10x34x4xbf16> to vector<10x32x4xbf16>
    %12 = tpu.concatenate %9, %10, %11 in 2 : vector<10x32x4xbf16>, vector<10x32x4xbf16>, vector<10x32x4xbf16> -> vector<10x32x12xbf16>
    %13 = vector.extract_strided_slice %12 {offsets = [0, 0, 0], sizes = [8, 32, 12], strides = [1, 1, 1]} : vector<10x32x12xbf16> to vector<8x32x12xbf16>
    %14 = vector.shape_cast %13 : vector<8x32x12xbf16> to vector<256x12xbf16>
    %c0_7 = arith.constant 0 : index
    %c0_8 = arith.constant 0 : index
    %c0_9 = arith.constant 0 : index
    %15 = vector.load %arg5[%c0_7, %c0_8, %c0_9] : memref<3x12x128xbf16, #tpu.memory_space<vmem>>, vector<1x12x128xbf16>
    %16 = vector.shape_cast %15 : vector<1x12x128xbf16> to vector<12x128xbf16>
    %cst_10 = arith.constant dense<0.000000e+00> : vector<256x128xf32>
    %17 = tpu.matmul %14, %16, %cst_10 {dimension_numbers = #tpu.dot_dimension_numbers<[1], [0], [0], [1], [0, 0, 1, 1], [], []>} : vector<256x12xbf16>, vector<12x128xbf16>, vector<256x128xf32> -> vector<256x128xf32>
    %18 = arith.addf %8, %17 : vector<256x128xf32>
    %19 = vector.extract_strided_slice %12 {offsets = [1, 0, 0], sizes = [8, 32, 12], strides = [1, 1, 1]} : vector<10x32x12xbf16> to vector<8x32x12xbf16>
    %20 = vector.shape_cast %19 : vector<8x32x12xbf16> to vector<256x12xbf16>
    %c1 = arith.constant 1 : index
    %c0_11 = arith.constant 0 : index
    %c0_12 = arith.constant 0 : index
    %21 = vector.load %arg5[%c1, %c0_11, %c0_12] : memref<3x12x128xbf16, #tpu.memory_space<vmem>>, vector<1x12x128xbf16>
    %22 = vector.shape_cast %21 : vector<1x12x128xbf16> to vector<12x128xbf16>
    %cst_13 = arith.constant dense<0.000000e+00> : vector<256x128xf32>
    %23 = tpu.matmul %20, %22, %cst_13 {dimension_numbers = #tpu.dot_dimension_numbers<[1], [0], [0], [1], [0, 0, 1, 1], [], []>} : vector<256x12xbf16>, vector<12x128xbf16>, vector<256x128xf32> -> vector<256x128xf32>
    %24 = arith.addf %18, %23 : vector<256x128xf32>
    %25 = vector.extract_strided_slice %12 {offsets = [2, 0, 0], sizes = [8, 32, 12], strides = [1, 1, 1]} : vector<10x32x12xbf16> to vector<8x32x12xbf16>
    %26 = vector.shape_cast %25 : vector<8x32x12xbf16> to vector<256x12xbf16>
    %c2 = arith.constant 2 : index
    %c0_14 = arith.constant 0 : index
    %c0_15 = arith.constant 0 : index
    %27 = vector.load %arg5[%c2, %c0_14, %c0_15] : memref<3x12x128xbf16, #tpu.memory_space<vmem>>, vector<1x12x128xbf16>
    %28 = vector.shape_cast %27 : vector<1x12x128xbf16> to vector<12x128xbf16>
    %cst_16 = arith.constant dense<0.000000e+00> : vector<256x128xf32>
    %29 = tpu.matmul %26, %28, %cst_16 {dimension_numbers = #tpu.dot_dimension_numbers<[1], [0], [0], [1], [0, 0, 1, 1], [], []>} : vector<256x12xbf16>, vector<12x128xbf16>, vector<256x128xf32> -> vector<256x128xf32>
    %30 = arith.addf %24, %29 : vector<256x128xf32>
    %c0_17 = arith.constant 0 : index
    %31 = arith.index_cast %1 : i32 to index
    %c0_18 = arith.constant 0 : index
    %c0_19 = arith.constant 0 : index
    %32 = vector.load %arg4[%c0_17, %31, %c0_18, %c0_19] : memref<1x32x32x4xbf16, #tpu.memory_space<vmem>>, vector<1x8x32x4xbf16>
    %33 = vector.shape_cast %32 : vector<1x8x32x4xbf16> to vector<8x32x4xbf16>
    %c1_i32 = arith.constant 1 : i32
    %34 = arith.subi %1, %c1_i32 : i32
    %c0_i32 = arith.constant 0 : i32
    %35 = arith.maxsi %34, %c0_i32 : i32
    %c0_20 = arith.constant 0 : index
    %36 = arith.index_cast %35 : i32 to index
    %c0_21 = arith.constant 0 : index
    %c0_22 = arith.constant 0 : index
    %37 = vector.load %arg4[%c0_20, %36, %c0_21, %c0_22] : memref<1x32x32x4xbf16, #tpu.memory_space<vmem>>, vector<1x1x32x4xbf16>
    %38 = vector.shape_cast %37 : vector<1x1x32x4xbf16> to vector<1x32x4xbf16>
    %c0_i32_23 = arith.constant 0 : i32
    %39 = arith.cmpi sgt, %1, %c0_i32_23 : i32
    %cst_24 = arith.constant 0.000000e+00 : bf16
    %40 = vector.broadcast %cst_24 : bf16 to vector<1x32x4xbf16>
    %41 = arith.select %39, %38, %40 : vector<1x32x4xbf16>
    %c8_i32_25 = arith.constant 8 : i32
    %42 = arith.addi %1, %c8_i32_25 : i32
    %c31_i32 = arith.constant 31 : i32
    %43 = arith.minsi %42, %c31_i32 : i32
    %c0_26 = arith.constant 0 : index
    %44 = arith.index_cast %43 : i32 to index
    %c0_27 = arith.constant 0 : index
    %c0_28 = arith.constant 0 : index
    %45 = vector.load %arg4[%c0_26, %44, %c0_27, %c0_28] : memref<1x32x32x4xbf16, #tpu.memory_space<vmem>>, vector<1x1x32x4xbf16>
    %46 = vector.shape_cast %45 : vector<1x1x32x4xbf16> to vector<1x32x4xbf16>
    %c8_i32_29 = arith.constant 8 : i32
    %47 = arith.addi %1, %c8_i32_29 : i32
    %c32_i32 = arith.constant 32 : i32
    %48 = arith.cmpi slt, %47, %c32_i32 : i32
    %cst_30 = arith.constant 0.000000e+00 : bf16
    %49 = vector.broadcast %cst_30 : bf16 to vector<1x32x4xbf16>
    %50 = arith.select %48, %46, %49 : vector<1x32x4xbf16>
    %51 = tpu.concatenate %41, %33, %50 in 0 : vector<1x32x4xbf16>, vector<8x32x4xbf16>, vector<1x32x4xbf16> -> vector<10x32x4xbf16>
    %cst_31 = arith.constant 0.000000e+00 : bf16
    %52 = vector.broadcast %cst_31 : bf16 to vector<10x1x4xbf16>
    %53 = tpu.concatenate %52, %51, %52 in 1 : vector<10x1x4xbf16>, vector<10x32x4xbf16>, vector<10x1x4xbf16> -> vector<10x34x4xbf16>
    %54 = vector.extract_strided_slice %53 {offsets = [0, 0, 0], sizes = [10, 32, 4], strides = [1, 1, 1]} : vector<10x34x4xbf16> to vector<10x32x4xbf16>
    %55 = vector.extract_strided_slice %53 {offsets = [0, 1, 0], sizes = [10, 32, 4], strides = [1, 1, 1]} : vector<10x34x4xbf16> to vector<10x32x4xbf16>
    %56 = vector.extract_strided_slice %53 {offsets = [0, 2, 0], sizes = [10, 32, 4], strides = [1, 1, 1]} : vector<10x34x4xbf16> to vector<10x32x4xbf16>
    %57 = tpu.concatenate %54, %55, %56 in 2 : vector<10x32x4xbf16>, vector<10x32x4xbf16>, vector<10x32x4xbf16> -> vector<10x32x12xbf16>
    %58 = vector.extract_strided_slice %57 {offsets = [0, 0, 0], sizes = [8, 32, 12], strides = [1, 1, 1]} : vector<10x32x12xbf16> to vector<8x32x12xbf16>
    %59 = vector.shape_cast %58 : vector<8x32x12xbf16> to vector<256x12xbf16>
    %c0_32 = arith.constant 0 : index
    %c0_33 = arith.constant 0 : index
    %c0_34 = arith.constant 0 : index
    %60 = vector.load %arg6[%c0_32, %c0_33, %c0_34] : memref<3x12x128xbf16, #tpu.memory_space<vmem>>, vector<1x12x128xbf16>
    %61 = vector.shape_cast %60 : vector<1x12x128xbf16> to vector<12x128xbf16>
    %cst_35 = arith.constant dense<0.000000e+00> : vector<256x128xf32>
    %62 = tpu.matmul %59, %61, %cst_35 {dimension_numbers = #tpu.dot_dimension_numbers<[1], [0], [0], [1], [0, 0, 1, 1], [], []>} : vector<256x12xbf16>, vector<12x128xbf16>, vector<256x128xf32> -> vector<256x128xf32>
    %63 = arith.addf %30, %62 : vector<256x128xf32>
    %64 = vector.extract_strided_slice %57 {offsets = [1, 0, 0], sizes = [8, 32, 12], strides = [1, 1, 1]} : vector<10x32x12xbf16> to vector<8x32x12xbf16>
    %65 = vector.shape_cast %64 : vector<8x32x12xbf16> to vector<256x12xbf16>
    %c1_36 = arith.constant 1 : index
    %c0_37 = arith.constant 0 : index
    %c0_38 = arith.constant 0 : index
    %66 = vector.load %arg6[%c1_36, %c0_37, %c0_38] : memref<3x12x128xbf16, #tpu.memory_space<vmem>>, vector<1x12x128xbf16>
    %67 = vector.shape_cast %66 : vector<1x12x128xbf16> to vector<12x128xbf16>
    %cst_39 = arith.constant dense<0.000000e+00> : vector<256x128xf32>
    %68 = tpu.matmul %65, %67, %cst_39 {dimension_numbers = #tpu.dot_dimension_numbers<[1], [0], [0], [1], [0, 0, 1, 1], [], []>} : vector<256x12xbf16>, vector<12x128xbf16>, vector<256x128xf32> -> vector<256x128xf32>
    %69 = arith.addf %63, %68 : vector<256x128xf32>
    %70 = vector.extract_strided_slice %57 {offsets = [2, 0, 0], sizes = [8, 32, 12], strides = [1, 1, 1]} : vector<10x32x12xbf16> to vector<8x32x12xbf16>
    %71 = vector.shape_cast %70 : vector<8x32x12xbf16> to vector<256x12xbf16>
    %c2_40 = arith.constant 2 : index
    %c0_41 = arith.constant 0 : index
    %c0_42 = arith.constant 0 : index
    %72 = vector.load %arg6[%c2_40, %c0_41, %c0_42] : memref<3x12x128xbf16, #tpu.memory_space<vmem>>, vector<1x12x128xbf16>
    %73 = vector.shape_cast %72 : vector<1x12x128xbf16> to vector<12x128xbf16>
    %cst_43 = arith.constant dense<0.000000e+00> : vector<256x128xf32>
    %74 = tpu.matmul %71, %73, %cst_43 {dimension_numbers = #tpu.dot_dimension_numbers<[1], [0], [0], [1], [0, 0, 1, 1], [], []>} : vector<256x12xbf16>, vector<12x128xbf16>, vector<256x128xf32> -> vector<256x128xf32>
    %75 = arith.addf %69, %74 : vector<256x128xf32>
    %c0_44 = arith.constant 0 : index
    %c0_45 = arith.constant 0 : index
    %76 = vector.load %arg7[%c0_44, %c0_45] : memref<1x128xf32, #tpu.memory_space<vmem>>, vector<1x128xf32>
    %77 = vector.broadcast %76 : vector<1x128xf32> to vector<256x128xf32>
    %78 = arith.mulf %75, %77 : vector<256x128xf32>
    %c0_46 = arith.constant 0 : index
    %c0_47 = arith.constant 0 : index
    %79 = vector.load %arg8[%c0_46, %c0_47] : memref<1x128xf32, #tpu.memory_space<vmem>>, vector<1x128xf32>
    %80 = vector.broadcast %79 : vector<1x128xf32> to vector<256x128xf32>
    %81 = arith.addf %78, %80 : vector<256x128xf32>
    %cst_48 = arith.constant 0.000000e+00 : f32
    %82 = vector.broadcast %cst_48 : f32 to vector<256x128xf32>
    %83 = arith.maximumf %81, %82 : vector<256x128xf32>
    %84 = vector.shape_cast %83 : vector<256x128xf32> to vector<8x32x128xf32>
    %85 = arith.truncf %84 : vector<8x32x128xf32> to vector<8x32x128xbf16>
    %c0_49 = arith.constant 0 : index
    %c0_50 = arith.constant 0 : index
    %c0_51 = arith.constant 0 : index
    %c0_52 = arith.constant 0 : index
    %86 = vector.load %arg9[%c0_49, %c0_50, %c0_51, %c0_52] : memref<1x8x32x128xbf16, #tpu.memory_space<vmem>>, vector<1x8x32x128xbf16>
    %87 = vector.shape_cast %86 : vector<1x8x32x128xbf16> to vector<8x32x128xbf16>
    %88 = vector.shape_cast %85 : vector<8x32x128xbf16> to vector<1x8x32x128xbf16>
    tpu.vector_store %arg9[%c0_49, %c0_50, %c0_51, %c0_52], %88 {strides = array<i32>} : memref<1x8x32x128xbf16, #tpu.memory_space<vmem>>, vector<1x8x32x128xbf16>,
    return
  }
  func.func @transform_0(%arg0: i32, %arg1: i32) -> (i32, i32, i32) {
    %c0_i32 = arith.constant 0 : i32
    %c0_i32_0 = arith.constant 0 : i32
    %c0_i32_1 = arith.constant 0 : i32
    return %arg1, %c0_i32, %c0_i32_0 : i32, i32, i32
  }
  func.func @transform_1(%arg0: i32, %arg1: i32) -> (i32, i32, i32, i32) {
    %c0_i32 = arith.constant 0 : i32
    %c0_i32_0 = arith.constant 0 : i32
    %c0_i32_1 = arith.constant 0 : i32
    %c0_i32_2 = arith.constant 0 : i32
    return %arg0, %c0_i32, %c0_i32_0, %c0_i32_1 : i32, i32, i32, i32
  }
  func.func @transform_2(%arg0: i32, %arg1: i32) -> (i32, i32, i32, i32) {
    %c0_i32 = arith.constant 0 : i32
    %c0_i32_0 = arith.constant 0 : i32
    %c0_i32_1 = arith.constant 0 : i32
    %c0_i32_2 = arith.constant 0 : i32
    return %arg0, %c0_i32, %c0_i32_0, %c0_i32_1 : i32, i32, i32, i32
  }
  func.func @transform_3(%arg0: i32, %arg1: i32) -> (i32, i32, i32) {
    %c0_i32 = arith.constant 0 : i32
    %c0_i32_0 = arith.constant 0 : i32
    %c0_i32_1 = arith.constant 0 : i32
    %c0_i32_2 = arith.constant 0 : i32
    return %c0_i32, %c0_i32_0, %c0_i32_1 : i32, i32, i32
  }
  func.func @transform_4(%arg0: i32, %arg1: i32) -> (i32, i32, i32) {
    %c0_i32 = arith.constant 0 : i32
    %c0_i32_0 = arith.constant 0 : i32
    %c0_i32_1 = arith.constant 0 : i32
    %c0_i32_2 = arith.constant 0 : i32
    return %c0_i32, %c0_i32_0, %c0_i32_1 : i32, i32, i32
  }
  func.func @transform_5(%arg0: i32, %arg1: i32) -> (i32, i32) {
    %c0_i32 = arith.constant 0 : i32
    %c0_i32_0 = arith.constant 0 : i32
    %c0_i32_1 = arith.constant 0 : i32
    return %c0_i32, %c0_i32_0 : i32, i32
  }
  func.func @transform_6(%arg0: i32, %arg1: i32) -> (i32, i32) {
    %c0_i32 = arith.constant 0 : i32
    %c0_i32_0 = arith.constant 0 : i32
    %c0_i32_1 = arith.constant 0 : i32
    return %c0_i32, %c0_i32_0 : i32, i32
  }
  func.func @transform_7(%arg0: i32, %arg1: i32) -> (i32, i32, i32, i32) {
    %c0_i32 = arith.constant 0 : i32
    %c0_i32_0 = arith.constant 0 : i32
    %c0_i32_1 = arith.constant 0 : i32
    return %arg0, %arg1, %c0_i32, %c0_i32_0 : i32, i32, i32, i32
  }
}

</mosaic_0001>

<llo_original>
// kernel: tpu_custom_call.1
$region0: #{tpu_custom_call.1}
  #allocation0 [shape = 'u32[]', space=smem, size = 0x4, offset = 0x4, fixed_abs, tag = 'smem constant byte address 0x4 - core index']
  #allocation1 [shape = 'u32[72,128]{1,0:T(1,128)}', space=vmem, size = 0x9000, scoped, tag = 'internal scratch']
  %s0 = inlined_call_operand.hbm [shape: f32[8,128], index: 0, kind: input, shape index: {}]
  %s1 = inlined_call_operand.hbm [shape: f32[8,128], index: 1, kind: output, shape index: {}]
  %s2 = sld [smem:[#allocation0]]
  $region18: #{tpu_custom_call.1} parent=0
    _
  %s4 = ssub.s32 1, %s2
  %s5 = scalar_select 0, %s4, %s2
  $region1: #{tpu_custom_call.1} parent=0
    #allocation2 [shape = 'u8[4096]{0}', space=vmem, size = 0x1000, scoped, tag = 'input window, operand 0, single buffered']
    #allocation3 [shape = 's32[1]{0}', space=sflag, size = 0x4, scoped, tag = 'scoped memory for tpu_custom_call.1']
    #allocation4 [shape = 's32[1]{0}', space=sflag, size = 0x4, scoped, tag = 'scoped memory for tpu_custom_call.1']
    #allocation5 [shape = 'u8[4096]{0}', space=vmem, size = 0x1000, scoped, tag = 'output window, operand 0, single buffered']
    %6 = vsyncpa [#allocation3], 0
    %7 = vsyncpa [#allocation4], 0
    // Predicated region
    $region2: #{tpu_custom_call.1} parent=1 // pred_check
      _
    $region3: #{tpu_custom_call.1} parent=1 // pred_check_branch
      %9 = sbr.rel (0) target = $region5
    $region4: #{tpu_custom_call.1} parent=1 // pred_region
      %11 = vsyncadd [#allocation3], 0
      %s13 = sshll.u32 %s0, 4
      %s14 = int_to_ptr.hbm [resolvable:$true] %s13
      %s15 = sshll.u32 [#allocation2], 4
      %s16 = int_to_ptr.vmem [resolvable:$true] %s15
      %18 = dma.hbm_to_vmem [thread:$0]  %s14, 128, %s16, [#allocation3]
    $region5: #{tpu_custom_call.1} parent=1 // pred_fallthru
      _
    // Predicated region
    $region6: #{tpu_custom_call.1} parent=1 // pred_check
      _
    $region7: #{tpu_custom_call.1} parent=1 // pred_check_branch
      %20 = sbr.rel (0) target = $region9
    $region8: #{tpu_custom_call.1} parent=1 // pred_region
      %22 = dma.done [#allocation3], 128
    $region9: #{tpu_custom_call.1} parent=1 // pred_fallthru
      _
    %v23 = vld [vmem:[#allocation2] sm:$0xff]
    %24 = vst [vmem:[#allocation5] sm:$0xff] %v23
    // Predicated region
    $region10: #{tpu_custom_call.1} parent=1 // pred_check
      _
    $region11: #{tpu_custom_call.1} parent=1 // pred_check_branch
      %26 = sbr.rel (0) target = $region13
    $region12: #{tpu_custom_call.1} parent=1 // pred_region
      %28 = vsyncadd [#allocation4], 0
      %s30 = sshll.u32 [#allocation5], 4
      %s31 = int_to_ptr.vmem [resolvable:$true] %s30
      %s32 = sshll.u32 %s1, 4
      %s33 = int_to_ptr.hbm [resolvable:$true] %s32
      %35 = dma.vmem_to_hbm [thread:$0]  %s31, 128, %s33, [#allocation4]
    $region13: #{tpu_custom_call.1} parent=1 // pred_fallthru
      _
    // Predicated region
    $region14: #{tpu_custom_call.1} parent=1 // pred_check
      _
    $region15: #{tpu_custom_call.1} parent=1 // pred_check_branch
      %37 = sbr.rel (0) target = $region17
    $region16: #{tpu_custom_call.1} parent=1 // pred_region
      %39 = dma.done [#allocation4], 128
    $region17: #{tpu_custom_call.1} parent=1 // pred_fallthru
      _
    %40 = vsyncpa [#allocation3], 1
    %41 = vsyncpa [#allocation4], 1

// kernel: tpu_custom_call.1
$region0: #{tpu_custom_call.1}
  #allocation0 [shape = 'u32[]', space=smem, size = 0x4, offset = 0x4, fixed_abs, tag = 'smem constant byte address 0x4 - core index']
  #allocation1 [shape = 'u32[72,128]{1,0:T(1,128)}', space=vmem, size = 0x9000, scoped, tag = 'internal scratch']
  %s0 = inlined_call_operand.vmem [shape: bf16[4,10,16], index: 0, kind: input, shape index: {}]
  %s1 = inlined_call_operand.vmem [shape: bf16[2,16,34,4], index: 1, kind: input, shape index: {}]
  %s2 = inlined_call_operand.vmem [shape: bf16[2,32,32,4], index: 2, kind: input, shape index: {}]
  %s3 = inlined_call_operand.vmem [shape: bf16[3,12,128], index: 3, kind: input, shape index: {}]
  %s4 = inlined_call_operand.vmem [shape: bf16[3,12,128], index: 4, kind: input, shape index: {}]
  %s5 = inlined_call_operand.vmem [shape: f32[1,128], index: 5, kind: input, shape index: {}]
  %s6 = inlined_call_operand.vmem [shape: f32[1,128], index: 6, kind: input, shape index: {}]
  %s7 = inlined_call_operand.hbm [shape: bf16[2,32,32,128], index: 7, kind: output, shape index: {}]
  %s8 = sld [smem:[#allocation0]]
  $region61: #{tpu_custom_call.1} parent=0
    _
  %s10 = ssub.s32 1, %s8
  %s11 = scalar_select 0, %s10, %s8
  $region1: #{tpu_custom_call.1} parent=0
    #allocation2 [shape = 'u8[131072]{0}', space=vmem, size = 0x20000, scoped, tag = 'output window, operand 0']
    #allocation3 [shape = 's32[2]{0}', space=sflag, size = 0x8, scoped, tag = 'scoped memory for tpu_custom_call.1']
    %12 = vsyncpa [#allocation3], 0
    %s13 = scalar_lea.sflag [#allocation3], 1
    %14 = vsyncpa %s13, 0
    loop: start=0, step=1, limit=10
    $region2: #{tpu_custom_call.1} parent=1 // loop_pre_header
      _
    $region3: #{tpu_custom_call.1} parent=1 // loop_header
      %s16 = sphi 0, %s20
      %p17 = scmp.ge.s32.totalorder %s16, 10
      %s23 = sphi 0, %s35
      %s24 = sphi 0, %s31
      %s25 = sphi 0, %s23
      %s26 = sphi 0, %s24
      %s27 = sphi 0, %s25
      %s28 = sphi 0, %s26
      %s38 = sphi 0, %s40
      %s41 = sphi 0, %s38
      %s42 = sphi 0, %s41
      %s58 = sphi 0, %s42
      %s64 = sphi 0, %s66
      %s67 = sphi 0, %s64
      %s68 = sphi 0, %s67
      %s84 = sphi 0, %s68
      %s90 = sphi 0, %s92
      %s93 = sphi 0, %s90
      %s94 = sphi 0, %s93
      %s110 = sphi 0, %s94
      %s114 = sphi 0, %s114
      %s116 = sphi 0, %s114
      %s117 = sphi 0, %s116
      %s131 = sphi 0, %s117
      %s135 = sphi 0, %s135
      %s137 = sphi 0, %s135
      %s138 = sphi 0, %s137
      %s152 = sphi 0, %s138
      %s156 = sphi 0, %s156
      %s158 = sphi 0, %s156
      %s159 = sphi 0, %s158
      %s173 = sphi 0, %s159
      %s177 = sphi 0, %s177
      %s179 = sphi 0, %s177
      %s180 = sphi 0, %s179
      %s194 = sphi 0, %s180
      %s202 = sphi 0, %s204
      %s205 = sphi 0, %s202
      %s206 = sphi 0, %s205
      %s222 = sphi 0, %s206
    $region4: #{tpu_custom_call.1} parent=1 // loop_header_branch
      %19 = sbr.rel (%p17) target = $region8
    $region5: #{tpu_custom_call.1} parent=1 // loop_body
      %s21 = ssub.s32 %s16, 1
      %s22 = ssub.s32 %s16, 2
      %s29 = sadd.s32 1, %s24
      %p30 = scmp.ge.s32.totalorder %s29, 4
      %s31 = scalar_select %p30, 0, %s29
      %s32 = sadd.s32 1, %s23
      %s33 = scalar_select %p30, %s32, %s23
      %p34 = scmp.ge.s32.totalorder %s33, 2
      %s35 = scalar_select %p34, 0, %s33
      %s36 = ssub.s32 %s24, %s31
      %p37 = scmp.eq.s32.totalorder %s36, 0
      %s39 = sadd.s32 %s38, 1
      %s40 = scalar_select %p37, %s38, %s39
      %p43 = pneg %p37
      %p44 = scmp.eq.s32.totalorder %s16, 7
      %p45 = por %p43, %p44
      %p46 = scmp.ne.s32.totalorder %s38, %s41
      %p47 = scmp.eq.s32.totalorder %s16, 0
      %p48 = por %p46, %p47
      %p49 = scmp.ne.s32.totalorder %s38, %s41
      %p50 = scmp.eq.s32.totalorder %s21, 7
      %p51 = por %p49, %p50
      %p52 = scmp.ne.s32.totalorder %s41, %s42
      %p53 = scmp.eq.s32.totalorder %s21, 0
      %p54 = por %p52, %p53
      %p55 = scmp.ne.s32.totalorder %s41, %s42
      %p56 = scmp.eq.s32.totalorder %s22, 7
      %p57 = por %p55, %p56
      %p59 = scmp.ne.s32.totalorder %s42, %s58
      %p60 = scmp.eq.s32.totalorder %s22, 0
      %p61 = por %p59, %p60
      %s62 = ssub.s32 %s23, %s35
      %p63 = scmp.eq.s32.totalorder %s62, 0
      %s65 = sadd.s32 %s64, 1
      %s66 = scalar_select %p63, %s64, %s65
      %p69 = pneg %p63
      %p70 = scmp.eq.s32.totalorder %s16, 7
      %p71 = por %p69, %p70
      %p72 = scmp.ne.s32.totalorder %s64, %s67
      %p73 = scmp.eq.s32.totalorder %s16, 0
      %p74 = por %p72, %p73
      %p75 = scmp.ne.s32.totalorder %s64, %s67
      %p76 = scmp.eq.s32.totalorder %s21, 7
      %p77 = por %p75, %p76
      %p78 = scmp.ne.s32.totalorder %s67, %s68
      %p79 = scmp.eq.s32.totalorder %s21, 0
      %p80 = por %p78, %p79
      %p81 = scmp.ne.s32.totalorder %s67, %s68
      %p82 = scmp.eq.s32.totalorder %s22, 7
      %p83 = por %p81, %p82
      %p85 = scmp.ne.s32.totalorder %s68, %s84
      %p86 = scmp.eq.s32.totalorder %s22, 0
      %p87 = por %p85, %p86
      %s88 = ssub.s32 %s23, %s35
      %p89 = scmp.eq.s32.totalorder %s88, 0
      %s91 = sadd.s32 %s90, 1
      %s92 = scalar_select %p89, %s90, %s91
      %p95 = pneg %p89
      %p96 = scmp.eq.s32.totalorder %s16, 7
      %p97 = por %p95, %p96
      %p98 = scmp.ne.s32.totalorder %s90, %s93
      %p99 = scmp.eq.s32.totalorder %s16, 0
      %p100 = por %p98, %p99
      %p101 = scmp.ne.s32.totalorder %s90, %s93
      %p102 = scmp.eq.s32.totalorder %s21, 7
      %p103 = por %p101, %p102
      %p104 = scmp.ne.s32.totalorder %s93, %s94
      %p105 = scmp.eq.s32.totalorder %s21, 0
      %p106 = por %p104, %p105
      %p107 = scmp.ne.s32.totalorder %s93, %s94
      %p108 = scmp.eq.s32.totalorder %s22, 7
      %p109 = por %p107, %p108
      %p111 = scmp.ne.s32.totalorder %s94, %s110
      %p112 = scmp.eq.s32.totalorder %s22, 0
      %p113 = por %p111, %p112
      %s115 = sadd.s32 %s114, 1
      %p118 = scmp.eq.s32.totalorder %s16, 7
      %p119 = scmp.ne.s32.totalorder %s114, %s116
      %p120 = scmp.eq.s32.totalorder %s16, 0
      %p121 = por %p119, %p120
      %p122 = scmp.ne.s32.totalorder %s114, %s116
      %p123 = scmp.eq.s32.totalorder %s21, 7
      %p124 = por %p122, %p123
      %p125 = scmp.ne.s32.totalorder %s116, %s117
      %p126 = scmp.eq.s32.totalorder %s21, 0
      %p127 = por %p125, %p126
      %p128 = scmp.ne.s32.totalorder %s116, %s117
      %p129 = scmp.eq.s32.totalorder %s22, 7
      %p130 = por %p128, %p129
      %p132 = scmp.ne.s32.totalorder %s117, %s131
      %p133 = scmp.eq.s32.totalorder %s22, 0
      %p134 = por %p132, %p133
      %s136 = sadd.s32 %s135, 1
      %p139 = scmp.eq.s32.totalorder %s16, 7
      %p140 = scmp.ne.s32.totalorder %s135, %s137
      %p141 = scmp.eq.s32.totalorder %s16, 0
      %p142 = por %p140, %p141
      %p143 = scmp.ne.s32.totalorder %s135, %s137
      %p144 = scmp.eq.s32.totalorder %s21, 7
      %p145 = por %p143, %p144
      %p146 = scmp.ne.s32.totalorder %s137, %s138
      %p147 = scmp.eq.s32.totalorder %s21, 0
      %p148 = por %p146, %p147
      %p149 = scmp.ne.s32.totalorder %s137, %s138
      %p150 = scmp.eq.s32.totalorder %s22, 7
      %p151 = por %p149, %p150
      %p153 = scmp.ne.s32.totalorder %s138, %s152
      %p154 = scmp.eq.s32.totalorder %s22, 0
      %p155 = por %p153, %p154
      %s157 = sadd.s32 %s156, 1
      %p160 = scmp.eq.s32.totalorder %s16, 7
      %p161 = scmp.ne.s32.totalorder %s156, %s158
      %p162 = scmp.eq.s32.totalorder %s16, 0
      %p163 = por %p161, %p162
      %p164 = scmp.ne.s32.totalorder %s156, %s158
      %p165 = scmp.eq.s32.totalorder %s21, 7
      %p166 = por %p164, %p165
      %p167 = scmp.ne.s32.totalorder %s158, %s159
      %p168 = scmp.eq.s32.totalorder %s21, 0
      %p169 = por %p167, %p168
      %p170 = scmp.ne.s32.totalorder %s158, %s159
      %p171 = scmp.eq.s32.totalorder %s22, 7
      %p172 = por %p170, %p171
      %p174 = scmp.ne.s32.totalorder %s159, %s173
      %p175 = scmp.eq.s32.totalorder %s22, 0
      %p176 = por %p174, %p175
      %s178 = sadd.s32 %s177, 1
      %p181 = scmp.eq.s32.totalorder %s16, 7
      %p182 = scmp.ne.s32.totalorder %s177, %s179
      %p183 = scmp.eq.s32.totalorder %s16, 0
      %p184 = por %p182, %p183
      %p185 = scmp.ne.s32.totalorder %s177, %s179
      %p186 = scmp.eq.s32.totalorder %s21, 7
      %p187 = por %p185, %p186
      %p188 = scmp.ne.s32.totalorder %s179, %s180
      %p189 = scmp.eq.s32.totalorder %s21, 0
      %p190 = por %p188, %p189
      %p191 = scmp.ne.s32.totalorder %s179, %s180
      %p192 = scmp.eq.s32.totalorder %s22, 7
      %p193 = por %p191, %p192
      %p195 = scmp.ne.s32.totalorder %s180, %s194
      %p196 = scmp.eq.s32.totalorder %s22, 0
      %p197 = por %p195, %p196
      %s198 = ssub.s32 %s23, %s35
      %s199 = ssub.s32 %s24, %s31
      %s200 = sor.u32 %s198, %s199
      %p201 = scmp.eq.s32.totalorder %s200, 0
      %s203 = sadd.s32 %s202, 1
      %s204 = scalar_select %p201, %s202, %s203
      %p207 = pneg %p201
      %p208 = scmp.eq.s32.totalorder %s16, 7
      %p209 = por %p207, %p208
      %p210 = scmp.ne.s32.totalorder %s202, %s205
      %p211 = scmp.eq.s32.totalorder %s16, 0
      %p212 = por %p210, %p211
      %p213 = scmp.ne.s32.totalorder %s202, %s205
      %p214 = scmp.eq.s32.totalorder %s21, 7
      %p215 = por %p213, %p214
      %p216 = scmp.ne.s32.totalorder %s205, %s206
      %p217 = scmp.eq.s32.totalorder %s21, 0
      %p218 = por %p216, %p217
      %p219 = scmp.ne.s32.totalorder %s205, %s206
      %p220 = scmp.eq.s32.totalorder %s22, 7
      %p221 = por %p219, %p220
      %p223 = scmp.ne.s32.totalorder %s206, %s222
      %p224 = scmp.eq.s32.totalorder %s22, 0
      %p225 = por %p223, %p224
      %p226 = scmp.le.s32.totalorder 1, %s16
      %p227 = scmp.lt.s32.totalorder %s16, 9
      %p228 = pnand %p226, %p227
      %p229 = pneg %p228
      // Predicated region
      $region9: #{tpu_custom_call.1} parent=5 // pred_check
        _
      $region10: #{tpu_custom_call.1} parent=5 // pred_check_branch
        %231 = sbr.rel (%p228) target = $region12
      $region11: #{tpu_custom_call.1} parent=5 // pred_region
        %s232 = ssub.s32 %s16, 1
        // Predicated region
        $region13: #{tpu_custom_call.1} parent=11 // pred_check
          %p233 = pneg %p127
        $region14: #{tpu_custom_call.1} parent=11 // pred_check_branch
          %235 = sbr.rel (%p233) target = $region16
        $region15: #{tpu_custom_call.1} parent=11 // pred_region
          _
        $region16: #{tpu_custom_call.1} parent=11 // pred_fallthru
          _
        // Predicated region
        $region17: #{tpu_custom_call.1} parent=11 // pred_check
          %p236 = pneg %p148
        $region18: #{tpu_custom_call.1} parent=11 // pred_check_branch
          %238 = sbr.rel (%p236) target = $region20
        $region19: #{tpu_custom_call.1} parent=11 // pred_region
          _
        $region20: #{tpu_custom_call.1} parent=11 // pred_fallthru
          _
        // Predicated region
        $region21: #{tpu_custom_call.1} parent=11 // pred_check
          %p239 = pneg %p169
        $region22: #{tpu_custom_call.1} parent=11 // pred_check_branch
          %241 = sbr.rel (%p239) target = $region24
        $region23: #{tpu_custom_call.1} parent=11 // pred_region
          _
        $region24: #{tpu_custom_call.1} parent=11 // pred_fallthru
          _
        // Predicated region
        $region25: #{tpu_custom_call.1} parent=11 // pred_check
          %p242 = pneg %p190
        $region26: #{tpu_custom_call.1} parent=11 // pred_check_branch
          %244 = sbr.rel (%p242) target = $region28
        $region27: #{tpu_custom_call.1} parent=11 // pred_region
          _
        $region28: #{tpu_custom_call.1} parent=11 // pred_fallthru
          _
      $region12: #{tpu_custom_call.1} parent=5 // pred_fallthru
        _
      %p245 = scmp.lt.s32.totalorder %s16, 8
      // Predicated region
      $region29: #{tpu_custom_call.1} parent=5 // pred_check
        %p246 = pneg %p245
      $region30: #{tpu_custom_call.1} parent=5 // pred_check_branch
        %248 = sbr.rel (%p246) target = $region32
      $region31: #{tpu_custom_call.1} parent=5 // pred_region
        // Predicated region
        $region33: #{tpu_custom_call.1} parent=31 // pred_check
          %p249 = pneg %p48
        $region34: #{tpu_custom_call.1} parent=31 // pred_check_branch
          %251 = sbr.rel (%p249) target = $region36
        $region35: #{tpu_custom_call.1} parent=31 // pred_region
          %p252 = scmp.lt.s32.totalorder %s24, 3
          %s253 = scalar_select %p252, %s24, 3
          %s254 = smul.addr %s253, 2
          %s255 = smul.addr %s254, 4
          %s256 = scalar_lea.vmem %s0, %s255
        $region36: #{tpu_custom_call.1} parent=31 // pred_fallthru
          _
        // Predicated region
        $region37: #{tpu_custom_call.1} parent=31 // pred_check
          %p257 = pneg %p74
        $region38: #{tpu_custom_call.1} parent=31 // pred_check_branch
          %259 = sbr.rel (%p257) target = $region40
        $region39: #{tpu_custom_call.1} parent=31 // pred_region
          %p260 = scmp.lt.s32.totalorder %s23, 1
          %s261 = scalar_select %p260, %s23, 1
          %s262 = smul.addr %s261, 80
          %s263 = smul.addr %s262, 4
          %s264 = scalar_lea.vmem %s1, %s263
        $region40: #{tpu_custom_call.1} parent=31 // pred_fallthru
          _
        // Predicated region
        $region41: #{tpu_custom_call.1} parent=31 // pred_check
          %p265 = pneg %p100
        $region42: #{tpu_custom_call.1} parent=31 // pred_check_branch
          %267 = sbr.rel (%p265) target = $region44
        $region43: #{tpu_custom_call.1} parent=31 // pred_region
          %p268 = scmp.lt.s32.totalorder %s23, 1
          %s269 = scalar_select %p268, %s23, 1
          %s270 = smul.addr %s269, 128
          %s271 = smul.addr %s270, 4
          %s272 = scalar_lea.vmem %s2, %s271
        $region44: #{tpu_custom_call.1} parent=31 // pred_fallthru
          _
      $region32: #{tpu_custom_call.1} parent=5 // pred_fallthru
        _
      %p273 = scmp.le.s32.totalorder 1, %s16
      %p274 = scmp.lt.s32.totalorder %s16, 9
      %p275 = pnand %p273, %p274
      %p276 = pneg %p275
      // Predicated region
      $region45: #{tpu_custom_call.1} parent=5 // pred_check
        _
      $region46: #{tpu_custom_call.1} parent=5 // pred_check_branch
        %278 = sbr.rel (%p275) target = $region48
      $region47: #{tpu_custom_call.1} parent=5 // pred_region
        %s279 = ssub.s32 %s16, 1
        %p280 = scmp.lt.s32.totalorder %s26, 3
        %s281 = scalar_select %p280, %s26, 3
        %s282 = smul.addr %s281, 2
        %s283 = smul.addr %s282, 4
        %s284 = scalar_lea.vmem %s0, %s283
        %p285 = pneg %p54
        %p286 = pneg %p51
        %p287 = scmp.lt.s32.totalorder %s25, 1
        %s288 = scalar_select %p287, %s25, 1
        %s289 = smul.addr %s288, 80
        %s290 = smul.addr %s289, 4
        %s291 = scalar_lea.vmem %s1, %s290
        %p292 = pneg %p80
        %p293 = pneg %p77
        %p294 = scmp.lt.s32.totalorder %s25, 1
        %s295 = scalar_select %p294, %s25, 1
        %s296 = smul.addr %s295, 128
        %s297 = smul.addr %s296, 4
        %s298 = scalar_lea.vmem %s2, %s297
        %p299 = pneg %p106
        %p300 = pneg %p103
        %p301 = pneg %p127
        %p302 = pneg %p124
        %p303 = pneg %p148
        %p304 = pneg %p145
        %p305 = pneg %p169
        %p306 = pneg %p166
        %p307 = pneg %p190
        %p308 = pneg %p187
        %p309 = pneg %p218
        %p310 = pneg %p215
        %s311 = sand.u32 %s205, 1
        %s312 = scalar_lea.sflag [#allocation3], %s311
        %s313 = sand.u32 %s205, 1
        %s314 = smul.addr %s313, 128
        %s315 = scalar_lea.vmem [#allocation2], %s314
        %p316 = scmp.lt.s32.totalorder %s26, 3
        %s317 = scalar_select %p316, %s26, 3
        %s318 = smul.addr %s317, 2
        %s319 = smul.addr %s318, 4
        %s320 = scalar_lea.vmem %s0, %s319
        %p321 = scmp.lt.s32.totalorder %s25, 1
        %s322 = scalar_select %p321, %s25, 1
        %s323 = smul.addr %s322, 80
        %s324 = smul.addr %s323, 4
        %s325 = scalar_lea.vmem %s1, %s324
        %p326 = scmp.lt.s32.totalorder %s25, 1
        %s327 = scalar_select %p326, %s25, 1
        %s328 = smul.addr %s327, 128
        %s329 = smul.addr %s328, 4
        %s330 = scalar_lea.vmem %s2, %s329
        %s331 = smul.u32 8, %s26
        %s333 = smul.u32 %s26, 8
        %v334 = vld [vmem:[%s320] sm:$0xf]
        %v335 = vld [vmem:[%s320 + $0x4] sm:$0x1]
        %v336 = vld [vmem:[%s325] sm:$0xf]
        %v337 = vld [vmem:[%s325 + $0x4] sm:$0xf]
        %v338 = vld [vmem:[%s325 + $0x8] sm:$0xf]
        %v339 = vld [vmem:[%s325 + $0xc] sm:$0xf]
        %v340 = vld [vmem:[%s325 + $0x10] sm:$0x1]
        %v341 = vld [vmem:[%s325 + $0x14] sm:$0xf]
        %v342 = vld [vmem:[%s325 + $0x18] sm:$0xf]
        %v343 = vld [vmem:[%s325 + $0x1c] sm:$0xf]
        %v344 = vld [vmem:[%s325 + $0x20] sm:$0xf]
        %v345 = vld [vmem:[%s325 + $0x24] sm:$0x1]
        %v346 = vld [vmem:[%s325 + $0x28] sm:$0xf]
        %v347 = vld [vmem:[%s325 + $0x2c] sm:$0xf]
        %v348 = vld [vmem:[%s325 + $0x30] sm:$0xf]
        %v349 = vld [vmem:[%s325 + $0x34] sm:$0xf]
        %v350 = vld [vmem:[%s325 + $0x38] sm:$0x1]
        %v351 = vld [vmem:[%s325 + $0x3c] sm:$0xf]
        %v352 = vld [vmem:[%s325 + $0x40] sm:$0xf]
        %v353 = vld [vmem:[%s325 + $0x44] sm:$0xf]
        %v354 = vld [vmem:[%s325 + $0x48] sm:$0xf]
        %v355 = vld [vmem:[%s325 + $0x4c] sm:$0x1]
        %v356 = vld [vmem:[%s325 + $0x50] sm:$0xf]
        %v357 = vld [vmem:[%s325 + $0x54] sm:$0xf]
        %v358 = vld [vmem:[%s325 + $0x58] sm:$0xf]
        %v359 = vld [vmem:[%s325 + $0x5c] sm:$0xf]
        %v360 = vld [vmem:[%s325 + $0x60] sm:$0x1]
        %v361 = vld [vmem:[%s325 + $0x64] sm:$0xf]
        %v362 = vld [vmem:[%s325 + $0x68] sm:$0xf]
        %v363 = vld [vmem:[%s325 + $0x6c] sm:$0xf]
        %v364 = vld [vmem:[%s325 + $0x70] sm:$0xf]
        %v365 = vld [vmem:[%s325 + $0x74] sm:$0x1]
        %v366 = vld [vmem:[%s325 + $0x78] sm:$0xf]
        %v367 = vld [vmem:[%s325 + $0x7c] sm:$0xf]
        %v368 = vld [vmem:[%s325 + $0x80] sm:$0xf]
        %v369 = vld [vmem:[%s325 + $0x84] sm:$0xf]
        %v370 = vld [vmem:[%s325 + $0x88] sm:$0x1]
        %v371 = vld [vmem:[%s325 + $0x8c] sm:$0xf]
        %v372 = vld [vmem:[%s325 + $0x90] sm:$0xf]
        %v373 = vld [vmem:[%s325 + $0x94] sm:$0xf]
        %v374 = vld [vmem:[%s325 + $0x98] sm:$0xf]
        %v375 = vld [vmem:[%s325 + $0x9c] sm:$0x1]
        %v376 = vld [vmem:[%s325 + $0xa0] sm:$0xf]
        %v377 = vld [vmem:[%s325 + $0xa4] sm:$0xf]
        %v378 = vld [vmem:[%s325 + $0xa8] sm:$0xf]
        %v379 = vld [vmem:[%s325 + $0xac] sm:$0xf]
        %v380 = vld [vmem:[%s325 + $0xb0] sm:$0x1]
        %v381 = vld [vmem:[%s325 + $0xb4] sm:$0xf]
        %v382 = vld [vmem:[%s325 + $0xb8] sm:$0xf]
        %v383 = vld [vmem:[%s325 + $0xbc] sm:$0xf]
        %v384 = vld [vmem:[%s325 + $0xc0] sm:$0xf]
        %v385 = vld [vmem:[%s325 + $0xc4] sm:$0x1]
        %v386 = vld [vmem:[%s325 + $0xc8] sm:$0xf]
        %v387 = vld [vmem:[%s325 + $0xcc] sm:$0xf]
        %v388 = vld [vmem:[%s325 + $0xd0] sm:$0xf]
        %v389 = vld [vmem:[%s325 + $0xd4] sm:$0xf]
        %v390 = vld [vmem:[%s325 + $0xd8] sm:$0x1]
        %v391 = vld [vmem:[%s325 + $0xdc] sm:$0xf]
        %v392 = vld [vmem:[%s325 + $0xe0] sm:$0xf]
        %v393 = vld [vmem:[%s325 + $0xe4] sm:$0xf]
        %v394 = vld [vmem:[%s325 + $0xe8] sm:$0xf]
        %v395 = vld [vmem:[%s325 + $0xec] sm:$0x1]
        %v396 = vld [vmem:[%s325 + $0xf0] sm:$0xf]
        %v397 = vld [vmem:[%s325 + $0xf4] sm:$0xf]
        %v398 = vld [vmem:[%s325 + $0xf8] sm:$0xf]
        %v399 = vld [vmem:[%s325 + $0xfc] sm:$0xf]
        %v400 = vld [vmem:[%s325 + $0x100] sm:$0x1]
        %v401 = vld [vmem:[%s325 + $0x104] sm:$0xf]
        %v402 = vld [vmem:[%s325 + $0x108] sm:$0xf]
        %v403 = vld [vmem:[%s325 + $0x10c] sm:$0xf]
        %v404 = vld [vmem:[%s325 + $0x110] sm:$0xf]
        %v405 = vld [vmem:[%s325 + $0x114] sm:$0x1]
        %v406 = vld [vmem:[%s325 + $0x118] sm:$0xf]
        %v407 = vld [vmem:[%s325 + $0x11c] sm:$0xf]
        %v408 = vld [vmem:[%s325 + $0x120] sm:$0xf]
        %v409 = vld [vmem:[%s325 + $0x124] sm:$0xf]
        %v410 = vld [vmem:[%s325 + $0x128] sm:$0x1]
        %v411 = vld [vmem:[%s325 + $0x12c] sm:$0xf]
        %v412 = vld [vmem:[%s325 + $0x130] sm:$0xf]
        %v413 = vld [vmem:[%s325 + $0x134] sm:$0xf]
        %v414 = vld [vmem:[%s325 + $0x138] sm:$0xf]
        %v415 = vld [vmem:[%s325 + $0x13c] sm:$0x1]
        %v416 = vrot.slane %v356, 4
        %vm417 = vcmask 1047556
        %v418 = vsel %vm417, %v416, %v336
        %v420 = vunpack.c.l.s4 1983009808
        %v421 = vunpack.c.0.s8 %v420
        %v422 = vperm.slane %v418, %v421
        %v423 = vrot.slane %v366, 4
        %v424 = vsel %vm417, %v423, %v346
        %v426 = vunpack.c.l.s4 1983009808
        %v427 = vunpack.c.0.s8 %v426
        %v428 = vperm.slane %v424, %v427
        %v429 = vrot.slane %v428, 4
        %v430 = vsel %vm417, %v429, %v422
        %v431 = vrot.slane %v422, 4
        %v432 = vsel %vm417, %v428, %v431
        %v434 = vunpack.c.l.s4 1934713408
        %v435 = vunpack.c.0.s8 %v434
        %v436 = vperm.slane %v430, %v435
        %v438 = vunpack.c.l.s4 1934713408
        %v439 = vunpack.c.0.s8 %v438
        %v440 = vperm.slane %v432, %v439
        %v441 = vrot.slane %v436, 4
        %v442 = vsel %vm417, 0, %v441
        %v443 = vrot.slane %v440, 4
        %v444 = vsel %vm417, 0, %v443
        %v445 = vrot.slane %v361, 4
        %v446 = vsel %vm417, %v445, %v341
        %v448 = vunpack.c.l.s4 1983009808
        %v449 = vunpack.c.0.s8 %v448
        %v450 = vperm.slane %v446, %v449
        %v451 = vrot.slane %v371, 4
        %v452 = vsel %vm417, %v451, %v351
        %v454 = vunpack.c.l.s4 1983009808
        %v455 = vunpack.c.0.s8 %v454
        %v456 = vperm.slane %v452, %v455
        %v457 = vrot.slane %v456, 4
        %v458 = vsel %vm417, %v457, %v450
        %v459 = vrot.slane %v450, 4
        %v460 = vsel %vm417, %v456, %v459
        %v462 = vunpack.c.l.s4 1934713408
        %v463 = vunpack.c.0.s8 %v462
        %v464 = vperm.slane %v458, %v463
        %v466 = vunpack.c.l.s4 1934713408
        %v467 = vunpack.c.0.s8 %v466
        %v468 = vperm.slane %v460, %v467
        %v469 = vrot.slane %v464, 4
        %v470 = vsel %vm417, 0, %v469
        %v471 = vrot.slane %v468, 4
        %v472 = vsel %vm417, 0, %v471
        %v473 = vrot.slane %v396, 4
        %v474 = vsel %vm417, %v473, %v376
        %v476 = vunpack.c.l.s4 1983009808
        %v477 = vunpack.c.0.s8 %v476
        %v478 = vperm.slane %v474, %v477
        %v479 = vrot.slane %v406, 4
        %v480 = vsel %vm417, %v479, %v386
        %v482 = vunpack.c.l.s4 1983009808
        %v483 = vunpack.c.0.s8 %v482
        %v484 = vperm.slane %v480, %v483
        %v485 = vrot.slane %v484, 4
        %v486 = vsel %vm417, %v485, %v478
        %v487 = vrot.slane %v478, 4
        %v488 = vsel %vm417, %v484, %v487
        %v490 = vunpack.c.l.s4 1934713408
        %v491 = vunpack.c.0.s8 %v490
        %v492 = vperm.slane %v486, %v491
        %v494 = vunpack.c.l.s4 1934713408
        %v495 = vunpack.c.0.s8 %v494
        %v496 = vperm.slane %v488, %v495
        %v497 = vrot.slane %v492, 4
        %v498 = vsel %vm417, 0, %v497
        %v499 = vrot.slane %v496, 4
        %v500 = vsel %vm417, 0, %v499
        %v501 = vrot.slane %v401, 4
        %v502 = vsel %vm417, %v501, %v381
        %v504 = vunpack.c.l.s4 1983009808
        %v505 = vunpack.c.0.s8 %v504
        %v506 = vperm.slane %v502, %v505
        %v507 = vrot.slane %v411, 4
        %v508 = vsel %vm417, %v507, %v391
        %v510 = vunpack.c.l.s4 1983009808
        %v511 = vunpack.c.0.s8 %v510
        %v512 = vperm.slane %v508, %v511
        %v513 = vrot.slane %v512, 4
        %v514 = vsel %vm417, %v513, %v506
        %v515 = vrot.slane %v506, 4
        %v516 = vsel %vm417, %v512, %v515
        %v518 = vunpack.c.l.s4 1934713408
        %v519 = vunpack.c.0.s8 %v518
        %v520 = vperm.slane %v514, %v519
        %v522 = vunpack.c.l.s4 1934713408
        %v523 = vunpack.c.0.s8 %v522
        %v524 = vperm.slane %v516, %v523
        %v525 = vrot.slane %v520, 4
        %v526 = vsel %vm417, 0, %v525
        %v527 = vrot.slane %v524, 4
        %v528 = vsel %vm417, 0, %v527
        %v529 = vrot.slane %v357, 4
        %v530 = vsel %vm417, %v529, %v337
        %v532 = vunpack.c.l.s4 1983009808
        %v533 = vunpack.c.0.s8 %v532
        %v534 = vperm.slane %v530, %v533
        %v535 = vrot.slane %v367, 4
        %v536 = vsel %vm417, %v535, %v347
        %v538 = vunpack.c.l.s4 1983009808
        %v539 = vunpack.c.0.s8 %v538
        %v540 = vperm.slane %v536, %v539
        %v541 = vrot.slane %v540, 4
        %v542 = vsel %vm417, %v541, %v534
        %v543 = vrot.slane %v534, 4
        %v544 = vsel %vm417, %v540, %v543
        %v546 = vunpack.c.l.s4 1934713408
        %v547 = vunpack.c.0.s8 %v546
        %v548 = vperm.slane %v542, %v547
        %v550 = vunpack.c.l.s4 1934713408
        %v551 = vunpack.c.0.s8 %v550
        %v552 = vperm.slane %v544, %v551
        %v553 = vrot.slane %v548, 4
        %v554 = vsel %vm417, 0, %v553
        %v555 = vrot.slane %v552, 4
        %v556 = vsel %vm417, 0, %v555
        %v557 = vrot.slane %v362, 4
        %v558 = vsel %vm417, %v557, %v342
        %v560 = vunpack.c.l.s4 1983009808
        %v561 = vunpack.c.0.s8 %v560
        %v562 = vperm.slane %v558, %v561
        %v563 = vrot.slane %v372, 4
        %v564 = vsel %vm417, %v563, %v352
        %v566 = vunpack.c.l.s4 1983009808
        %v567 = vunpack.c.0.s8 %v566
        %v568 = vperm.slane %v564, %v567
        %v569 = vrot.slane %v568, 4
        %v570 = vsel %vm417, %v569, %v562
        %v571 = vrot.slane %v562, 4
        %v572 = vsel %vm417, %v568, %v571
        %v574 = vunpack.c.l.s4 1934713408
        %v575 = vunpack.c.0.s8 %v574
        %v576 = vperm.slane %v570, %v575
        %v578 = vunpack.c.l.s4 1934713408
        %v579 = vunpack.c.0.s8 %v578
        %v580 = vperm.slane %v572, %v579
        %v581 = vrot.slane %v576, 4
        %v582 = vsel %vm417, 0, %v581
        %v583 = vrot.slane %v580, 4
        %v584 = vsel %vm417, 0, %v583
        %v585 = vrot.slane %v397, 4
        %v586 = vsel %vm417, %v585, %v377
        %v588 = vunpack.c.l.s4 1983009808
        %v589 = vunpack.c.0.s8 %v588
        %v590 = vperm.slane %v586, %v589
        %v591 = vrot.slane %v407, 4
        %v592 = vsel %vm417, %v591, %v387
        %v594 = vunpack.c.l.s4 1983009808
        %v595 = vunpack.c.0.s8 %v594
        %v596 = vperm.slane %v592, %v595
        %v597 = vrot.slane %v596, 4
        %v598 = vsel %vm417, %v597, %v590
        %v599 = vrot.slane %v590, 4
        %v600 = vsel %vm417, %v596, %v599
        %v602 = vunpack.c.l.s4 1934713408
        %v603 = vunpack.c.0.s8 %v602
        %v604 = vperm.slane %v598, %v603
        %v606 = vunpack.c.l.s4 1934713408
        %v607 = vunpack.c.0.s8 %v606
        %v608 = vperm.slane %v600, %v607
        %v609 = vrot.slane %v604, 4
        %v610 = vsel %vm417, 0, %v609
        %v611 = vrot.slane %v608, 4
        %v612 = vsel %vm417, 0, %v611
        %v613 = vrot.slane %v402, 4
        %v614 = vsel %vm417, %v613, %v382
        %v616 = vunpack.c.l.s4 1983009808
        %v617 = vunpack.c.0.s8 %v616
        %v618 = vperm.slane %v614, %v617
        %v619 = vrot.slane %v412, 4
        %v620 = vsel %vm417, %v619, %v392
        %v622 = vunpack.c.l.s4 1983009808
        %v623 = vunpack.c.0.s8 %v622
        %v624 = vperm.slane %v620, %v623
        %v625 = vrot.slane %v624, 4
        %v626 = vsel %vm417, %v625, %v618
        %v627 = vrot.slane %v618, 4
        %v628 = vsel %vm417, %v624, %v627
        %v630 = vunpack.c.l.s4 1934713408
        %v631 = vunpack.c.0.s8 %v630
        %v632 = vperm.slane %v626, %v631
        %v634 = vunpack.c.l.s4 1934713408
        %v635 = vunpack.c.0.s8 %v634
        %v636 = vperm.slane %v628, %v635
        %v637 = vrot.slane %v632, 4
        %v638 = vsel %vm417, 0, %v637
        %v639 = vrot.slane %v636, 4
        %v640 = vsel %vm417, 0, %v639
        %v641 = vrot.slane %v358, 4
        %v642 = vsel %vm417, %v641, %v338
        %v644 = vunpack.c.l.s4 1983009808
        %v645 = vunpack.c.0.s8 %v644
        %v646 = vperm.slane %v642, %v645
        %v647 = vrot.slane %v368, 4
        %v648 = vsel %vm417, %v647, %v348
        %v650 = vunpack.c.l.s4 1983009808
        %v651 = vunpack.c.0.s8 %v650
        %v652 = vperm.slane %v648, %v651
        %v653 = vrot.slane %v652, 4
        %v654 = vsel %vm417, %v653, %v646
        %v655 = vrot.slane %v646, 4
        %v656 = vsel %vm417, %v652, %v655
        %v658 = vunpack.c.l.s4 1934713408
        %v659 = vunpack.c.0.s8 %v658
        %v660 = vperm.slane %v654, %v659
        %v662 = vunpack.c.l.s4 1934713408
        %v663 = vunpack.c.0.s8 %v662
        %v664 = vperm.slane %v656, %v663
        %v665 = vrot.slane %v660, 4
        %v666 = vsel %vm417, 0, %v665
        %v667 = vrot.slane %v664, 4
        %v668 = vsel %vm417, 0, %v667
        %v669 = vrot.slane %v363, 4
        %v670 = vsel %vm417, %v669, %v343
        %v672 = vunpack.c.l.s4 1983009808
        %v673 = vunpack.c.0.s8 %v672
        %v674 = vperm.slane %v670, %v673
        %v675 = vrot.slane %v373, 4
        %v676 = vsel %vm417, %v675, %v353
        %v678 = vunpack.c.l.s4 1983009808
        %v679 = vunpack.c.0.s8 %v678
        %v680 = vperm.slane %v676, %v679
        %v681 = vrot.slane %v680, 4
        %v682 = vsel %vm417, %v681, %v674
        %v683 = vrot.slane %v674, 4
        %v684 = vsel %vm417, %v680, %v683
        %v686 = vunpack.c.l.s4 1934713408
        %v687 = vunpack.c.0.s8 %v686
        %v688 = vperm.slane %v682, %v687
        %v690 = vunpack.c.l.s4 1934713408
        %v691 = vunpack.c.0.s8 %v690
        %v692 = vperm.slane %v684, %v691
        %v693 = vrot.slane %v688, 4
        %v694 = vsel %vm417, 0, %v693
        %v695 = vrot.slane %v692, 4
        %v696 = vsel %vm417, 0, %v695
        %v697 = vrot.slane %v398, 4
        %v698 = vsel %vm417, %v697, %v378
        %v700 = vunpack.c.l.s4 1983009808
        %v701 = vunpack.c.0.s8 %v700
        %v702 = vperm.slane %v698, %v701
        %v703 = vrot.slane %v408, 4
        %v704 = vsel %vm417, %v703, %v388
        %v706 = vunpack.c.l.s4 1983009808
        %v707 = vunpack.c.0.s8 %v706
        %v708 = vperm.slane %v704, %v707
        %v709 = vrot.slane %v708, 4
        %v710 = vsel %vm417, %v709, %v702
        %v711 = vrot.slane %v702, 4
        %v712 = vsel %vm417, %v708, %v711
        %v714 = vunpack.c.l.s4 1934713408
        %v715 = vunpack.c.0.s8 %v714
        %v716 = vperm.slane %v710, %v715
        %v718 = vunpack.c.l.s4 1934713408
        %v719 = vunpack.c.0.s8 %v718
        %v720 = vperm.slane %v712, %v719
        %v721 = vrot.slane %v716, 4
        %v722 = vsel %vm417, 0, %v721
        %v723 = vrot.slane %v720, 4
        %v724 = vsel %vm417, 0, %v723
        %v725 = vrot.slane %v403, 4
        %v726 = vsel %vm417, %v725, %v383
        %v728 = vunpack.c.l.s4 1983009808
        %v729 = vunpack.c.0.s8 %v728
        %v730 = vperm.slane %v726, %v729
        %v731 = vrot.slane %v413, 4
        %v732 = vsel %vm417, %v731, %v393
        %v734 = vunpack.c.l.s4 1983009808
        %v735 = vunpack.c.0.s8 %v734
        %v736 = vperm.slane %v732, %v735
        %v737 = vrot.slane %v736, 4
        %v738 = vsel %vm417, %v737, %v730
        %v739 = vrot.slane %v730, 4
        %v740 = vsel %vm417, %v736, %v739
        %v742 = vunpack.c.l.s4 1934713408
        %v743 = vunpack.c.0.s8 %v742
        %v744 = vperm.slane %v738, %v743
        %v746 = vunpack.c.l.s4 1934713408
        %v747 = vunpack.c.0.s8 %v746
        %v748 = vperm.slane %v740, %v747
        %v749 = vrot.slane %v744, 4
        %v750 = vsel %vm417, 0, %v749
        %v751 = vrot.slane %v748, 4
        %v752 = vsel %vm417, 0, %v751
        %v753 = vrot.slane %v359, 4
        %v754 = vsel %vm417, %v753, %v339
        %v756 = vunpack.c.l.s4 1983009808
        %v757 = vunpack.c.0.s8 %v756
        %v758 = vperm.slane %v754, %v757
        %v759 = vrot.slane %v369, 4
        %v760 = vsel %vm417, %v759, %v349
        %v762 = vunpack.c.l.s4 1983009808
        %v763 = vunpack.c.0.s8 %v762
        %v764 = vperm.slane %v760, %v763
        %v765 = vrot.slane %v764, 4
        %v766 = vsel %vm417, %v765, %v758
        %v767 = vrot.slane %v758, 4
        %v768 = vsel %vm417, %v764, %v767
        %v770 = vunpack.c.l.s4 1934713408
        %v771 = vunpack.c.0.s8 %v770
        %v772 = vperm.slane %v766, %v771
        %v774 = vunpack.c.l.s4 1934713408
        %v775 = vunpack.c.0.s8 %v774
        %v776 = vperm.slane %v768, %v775
        %v777 = vrot.slane %v772, 4
        %v778 = vsel %vm417, 0, %v777
        %v779 = vrot.slane %v776, 4
        %v780 = vsel %vm417, 0, %v779
        %v781 = vrot.slane %v364, 4
        %v782 = vsel %vm417, %v781, %v344
        %v784 = vunpack.c.l.s4 1983009808
        %v785 = vunpack.c.0.s8 %v784
        %v786 = vperm.slane %v782, %v785
        %v787 = vrot.slane %v374, 4
        %v788 = vsel %vm417, %v787, %v354
        %v790 = vunpack.c.l.s4 1983009808
        %v791 = vunpack.c.0.s8 %v790
        %v792 = vperm.slane %v788, %v791
        %v793 = vrot.slane %v792, 4
        %v794 = vsel %vm417, %v793, %v786
        %v795 = vrot.slane %v786, 4
        %v796 = vsel %vm417, %v792, %v795
        %v798 = vunpack.c.l.s4 1934713408
        %v799 = vunpack.c.0.s8 %v798
        %v800 = vperm.slane %v794, %v799
        %v802 = vunpack.c.l.s4 1934713408
        %v803 = vunpack.c.0.s8 %v802
        %v804 = vperm.slane %v796, %v803
        %v805 = vrot.slane %v800, 4
        %v806 = vsel %vm417, 0, %v805
        %v807 = vrot.slane %v804, 4
        %v808 = vsel %vm417, 0, %v807
        %v809 = vrot.slane %v399, 4
        %v810 = vsel %vm417, %v809, %v379
        %v812 = vunpack.c.l.s4 1983009808
        %v813 = vunpack.c.0.s8 %v812
        %v814 = vperm.slane %v810, %v813
        %v815 = vrot.slane %v409, 4
        %v816 = vsel %vm417, %v815, %v389
        %v818 = vunpack.c.l.s4 1983009808
        %v819 = vunpack.c.0.s8 %v818
        %v820 = vperm.slane %v816, %v819
        %v821 = vrot.slane %v820, 4
        %v822 = vsel %vm417, %v821, %v814
        %v823 = vrot.slane %v814, 4
        %v824 = vsel %vm417, %v820, %v823
        %v826 = vunpack.c.l.s4 1934713408
        %v827 = vunpack.c.0.s8 %v826
        %v828 = vperm.slane %v822, %v827
        %v830 = vunpack.c.l.s4 1934713408
        %v831 = vunpack.c.0.s8 %v830
        %v832 = vperm.slane %v824, %v831
        %v833 = vrot.slane %v828, 4
        %v834 = vsel %vm417, 0, %v833
        %v835 = vrot.slane %v832, 4
        %v836 = vsel %vm417, 0, %v835
        %v837 = vrot.slane %v404, 4
        %v838 = vsel %vm417, %v837, %v384
        %v840 = vunpack.c.l.s4 1983009808
        %v841 = vunpack.c.0.s8 %v840
        %v842 = vperm.slane %v838, %v841
        %v843 = vrot.slane %v414, 4
        %v844 = vsel %vm417, %v843, %v394
        %v846 = vunpack.c.l.s4 1983009808
        %v847 = vunpack.c.0.s8 %v846
        %v848 = vperm.slane %v844, %v847
        %v849 = vrot.slane %v848, 4
        %v850 = vsel %vm417, %v849, %v842
        %v851 = vrot.slane %v842, 4
        %v852 = vsel %vm417, %v848, %v851
        %v854 = vunpack.c.l.s4 1934713408
        %v855 = vunpack.c.0.s8 %v854
        %v856 = vperm.slane %v850, %v855
        %v858 = vunpack.c.l.s4 1934713408
        %v859 = vunpack.c.0.s8 %v858
        %v860 = vperm.slane %v852, %v859
        %v861 = vrot.slane %v856, 4
        %v862 = vsel %vm417, 0, %v861
        %v863 = vrot.slane %v860, 4
        %v864 = vsel %vm417, 0, %v863
        %v865 = vrot.slane %v360, 4
        %v866 = vsel %vm417, %v865, %v340
        %v868 = vunpack.c.l.s4 1983009808
        %v869 = vunpack.c.0.s8 %v868
        %v870 = vperm.slane %v866, %v869
        %v871 = vrot.slane %v370, 4
        %v872 = vsel %vm417, %v871, %v350
        %v874 = vunpack.c.l.s4 1983009808
        %v875 = vunpack.c.0.s8 %v874
        %v876 = vperm.slane %v872, %v875
        %v877 = vrot.slane %v876, 4
        %v878 = vsel %vm417, %v877, %v870
        %v880 = vunpack.c.l.s4 1934713408
        %v881 = vunpack.c.0.s8 %v880
        %v882 = vperm.slane %v878, %v881
        %v883 = vrot.slane %v365, 4
        %v884 = vsel %vm417, %v883, %v345
        %v886 = vunpack.c.l.s4 1983009808
        %v887 = vunpack.c.0.s8 %v886
        %v888 = vperm.slane %v884, %v887
        %v889 = vrot.slane %v375, 4
        %v890 = vsel %vm417, %v889, %v355
        %v892 = vunpack.c.l.s4 1983009808
        %v893 = vunpack.c.0.s8 %v892
        %v894 = vperm.slane %v890, %v893
        %v895 = vrot.slane %v894, 4
        %v896 = vsel %vm417, %v895, %v888
        %v898 = vunpack.c.l.s4 1934713408
        %v899 = vunpack.c.0.s8 %v898
        %v900 = vperm.slane %v896, %v899
        %v901 = vrot.slane %v400, 4
        %v902 = vsel %vm417, %v901, %v380
        %v904 = vunpack.c.l.s4 1983009808
        %v905 = vunpack.c.0.s8 %v904
        %v906 = vperm.slane %v902, %v905
        %v907 = vrot.slane %v410, 4
        %v908 = vsel %vm417, %v907, %v390
        %v910 = vunpack.c.l.s4 1983009808
        %v911 = vunpack.c.0.s8 %v910
        %v912 = vperm.slane %v908, %v911
        %v913 = vrot.slane %v912, 4
        %v914 = vsel %vm417, %v913, %v906
        %v916 = vunpack.c.l.s4 1934713408
        %v917 = vunpack.c.0.s8 %v916
        %v918 = vperm.slane %v914, %v917
        %v919 = vrot.slane %v405, 4
        %v920 = vsel %vm417, %v919, %v385
        %v922 = vunpack.c.l.s4 1983009808
        %v923 = vunpack.c.0.s8 %v922
        %v924 = vperm.slane %v920, %v923
        %v925 = vrot.slane %v415, 4
        %v926 = vsel %vm417, %v925, %v395
        %v928 = vunpack.c.l.s4 1983009808
        %v929 = vunpack.c.0.s8 %v928
        %v930 = vperm.slane %v926, %v929
        %v931 = vrot.slane %v930, 4
        %v932 = vsel %vm417, %v931, %v924
        %v934 = vunpack.c.l.s4 1934713408
        %v935 = vunpack.c.0.s8 %v934
        %v936 = vperm.slane %v932, %v935
        %v939 = vpack.i.b16 %v464, %v436
        %v940 = vshrl.u32 %v436, 16
        %v941 = vshrl.u32 %v464, 16
        %v942 = vpack.i.b16 %v941, %v940
        %v945 = vpack.i.b16 %v470, %v442
        %v946 = vshrl.u32 %v442, 16
        %v947 = vshrl.u32 %v470, 16
        %v948 = vpack.i.b16 %v947, %v946
        %v951 = vpack.i.b16 %v468, %v440
        %v952 = vshrl.u32 %v440, 16
        %v953 = vshrl.u32 %v468, 16
        %v954 = vpack.i.b16 %v953, %v952
        %v957 = vpack.i.b16 %v472, %v444
        %v958 = vshrl.u32 %v444, 16
        %v959 = vshrl.u32 %v472, 16
        %v960 = vpack.i.b16 %v959, %v958
        %v963 = vpack.i.b16 %v576, %v548
        %v964 = vshrl.u32 %v548, 16
        %v965 = vshrl.u32 %v576, 16
        %v966 = vpack.i.b16 %v965, %v964
        %v969 = vpack.i.b16 %v582, %v554
        %v970 = vshrl.u32 %v554, 16
        %v971 = vshrl.u32 %v582, 16
        %v972 = vpack.i.b16 %v971, %v970
        %v975 = vpack.i.b16 %v580, %v552
        %v976 = vshrl.u32 %v552, 16
        %v977 = vshrl.u32 %v580, 16
        %v978 = vpack.i.b16 %v977, %v976
        %v981 = vpack.i.b16 %v584, %v556
        %v982 = vshrl.u32 %v556, 16
        %v983 = vshrl.u32 %v584, 16
        %v984 = vpack.i.b16 %v983, %v982
        %v987 = vpack.i.b16 %v688, %v660
        %v988 = vshrl.u32 %v660, 16
        %v989 = vshrl.u32 %v688, 16
        %v990 = vpack.i.b16 %v989, %v988
        %v993 = vpack.i.b16 %v694, %v666
        %v994 = vshrl.u32 %v666, 16
        %v995 = vshrl.u32 %v694, 16
        %v996 = vpack.i.b16 %v995, %v994
        %v999 = vpack.i.b16 %v692, %v664
        %v1000 = vshrl.u32 %v664, 16
        %v1001 = vshrl.u32 %v692, 16
        %v1002 = vpack.i.b16 %v1001, %v1000
        %v1005 = vpack.i.b16 %v696, %v668
        %v1006 = vshrl.u32 %v668, 16
        %v1007 = vshrl.u32 %v696, 16
        %v1008 = vpack.i.b16 %v1007, %v1006
        %v1011 = vpack.i.b16 %v800, %v772
        %v1012 = vshrl.u32 %v772, 16
        %v1013 = vshrl.u32 %v800, 16
        %v1014 = vpack.i.b16 %v1013, %v1012
        %v1017 = vpack.i.b16 %v806, %v778
        %v1018 = vshrl.u32 %v778, 16
        %v1019 = vshrl.u32 %v806, 16
        %v1020 = vpack.i.b16 %v1019, %v1018
        %v1023 = vpack.i.b16 %v804, %v776
        %v1024 = vshrl.u32 %v776, 16
        %v1025 = vshrl.u32 %v804, 16
        %v1026 = vpack.i.b16 %v1025, %v1024
        %v1029 = vpack.i.b16 %v808, %v780
        %v1030 = vshrl.u32 %v780, 16
        %v1031 = vshrl.u32 %v808, 16
        %v1032 = vpack.i.b16 %v1031, %v1030
        %v1035 = vpack.i.b16 %v900, %v882
        %v1036 = vshrl.u32 %v882, 16
        %v1037 = vshrl.u32 %v900, 16
        %v1038 = vpack.i.b16 %v1037, %v1036
        %v1041 = vpack.i.b16 %v520, %v492
        %v1042 = vshrl.u32 %v492, 16
        %v1043 = vshrl.u32 %v520, 16
        %v1044 = vpack.i.b16 %v1043, %v1042
        %v1047 = vpack.i.b16 %v526, %v498
        %v1048 = vshrl.u32 %v498, 16
        %v1049 = vshrl.u32 %v526, 16
        %v1050 = vpack.i.b16 %v1049, %v1048
        %v1053 = vpack.i.b16 %v524, %v496
        %v1054 = vshrl.u32 %v496, 16
        %v1055 = vshrl.u32 %v524, 16
        %v1056 = vpack.i.b16 %v1055, %v1054
        %v1059 = vpack.i.b16 %v528, %v500
        %v1060 = vshrl.u32 %v500, 16
        %v1061 = vshrl.u32 %v528, 16
        %v1062 = vpack.i.b16 %v1061, %v1060
        %v1065 = vpack.i.b16 %v632, %v604
        %v1066 = vshrl.u32 %v604, 16
        %v1067 = vshrl.u32 %v632, 16
        %v1068 = vpack.i.b16 %v1067, %v1066
        %v1071 = vpack.i.b16 %v638, %v610
        %v1072 = vshrl.u32 %v610, 16
        %v1073 = vshrl.u32 %v638, 16
        %v1074 = vpack.i.b16 %v1073, %v1072
        %v1077 = vpack.i.b16 %v636, %v608
        %v1078 = vshrl.u32 %v608, 16
        %v1079 = vshrl.u32 %v636, 16
        %v1080 = vpack.i.b16 %v1079, %v1078
        %v1083 = vpack.i.b16 %v640, %v612
        %v1084 = vshrl.u32 %v612, 16
        %v1085 = vshrl.u32 %v640, 16
        %v1086 = vpack.i.b16 %v1085, %v1084
        %v1089 = vpack.i.b16 %v744, %v716
        %v1090 = vshrl.u32 %v716, 16
        %v1091 = vshrl.u32 %v744, 16
        %v1092 = vpack.i.b16 %v1091, %v1090
        %v1095 = vpack.i.b16 %v750, %v722
        %v1096 = vshrl.u32 %v722, 16
        %v1097 = vshrl.u32 %v750, 16
        %v1098 = vpack.i.b16 %v1097, %v1096
        %v1101 = vpack.i.b16 %v748, %v720
        %v1102 = vshrl.u32 %v720, 16
        %v1103 = vshrl.u32 %v748, 16
        %v1104 = vpack.i.b16 %v1103, %v1102
        %v1107 = vpack.i.b16 %v752, %v724
        %v1108 = vshrl.u32 %v724, 16
        %v1109 = vshrl.u32 %v752, 16
        %v1110 = vpack.i.b16 %v1109, %v1108
        %v1113 = vpack.i.b16 %v856, %v828
        %v1114 = vshrl.u32 %v828, 16
        %v1115 = vshrl.u32 %v856, 16
        %v1116 = vpack.i.b16 %v1115, %v1114
        %v1119 = vpack.i.b16 %v862, %v834
        %v1120 = vshrl.u32 %v834, 16
        %v1121 = vshrl.u32 %v862, 16
        %v1122 = vpack.i.b16 %v1121, %v1120
        %v1125 = vpack.i.b16 %v860, %v832
        %v1126 = vshrl.u32 %v832, 16
        %v1127 = vshrl.u32 %v860, 16
        %v1128 = vpack.i.b16 %v1127, %v1126
        %v1131 = vpack.i.b16 %v864, %v836
        %v1132 = vshrl.u32 %v836, 16
        %v1133 = vshrl.u32 %v864, 16
        %v1134 = vpack.i.b16 %v1133, %v1132
        %v1137 = vpack.i.b16 %v936, %v918
        %v1138 = vshrl.u32 %v918, 16
        %v1139 = vshrl.u32 %v936, 16
        %v1140 = vpack.i.b16 %v1139, %v1138
        %v1141 = vunpack.c.l.b16 %v939
        %v1142 = vunpack.c.l.b16 %v1041
        %v1143 = vpack.c.b16 %v1142, %v1141
        %v1144 = vunpack.c.l.b16 %v942
        %v1145 = vunpack.c.l.b16 %v1044
        %v1146 = vpack.c.b16 %v1145, %v1144
        %1147 = vrot.lane.b32.xlu0 %v1146, 4
        %v1148 = vpop.permute.xlu0 %1147
        %v1149 = vunpack.c.l.b16 %v945
        %v1150 = vunpack.c.l.b16 %v1047
        %v1151 = vpack.c.b16 %v1150, %v1149
        %1152 = vrot.lane.b32.xlu0 %v1151, 8
        %v1153 = vpop.permute.xlu0 %1152
        %v1154 = vunpack.c.l.b16 %v948
        %v1155 = vunpack.c.l.b16 %v1050
        %v1156 = vpack.c.b16 %v1155, %v1154
        %1157 = vrot.lane.b32.xlu0 %v1156, 12
        %v1158 = vpop.permute.xlu0 %1157
        %v1159 = vunpack.c.l.b16 %v951
        %v1160 = vunpack.c.l.b16 %v1053
        %v1161 = vpack.c.b16 %v1160, %v1159
        %1162 = vrot.lane.b32.xlu0 %v1161, 16
        %v1163 = vpop.permute.xlu0 %1162
        %v1164 = vunpack.c.l.b16 %v954
        %v1165 = vunpack.c.l.b16 %v1056
        %v1166 = vpack.c.b16 %v1165, %v1164
        %1167 = vrot.lane.b32.xlu0 %v1166, 20
        %v1168 = vpop.permute.xlu0 %1167
        %v1169 = vunpack.c.l.b16 %v957
        %v1170 = vunpack.c.l.b16 %v1059
        %v1171 = vpack.c.b16 %v1170, %v1169
        %1172 = vrot.lane.b32.xlu0 %v1171, 24
        %v1173 = vpop.permute.xlu0 %1172
        %v1174 = vunpack.c.l.b16 %v960
        %v1175 = vunpack.c.l.b16 %v1062
        %v1176 = vpack.c.b16 %v1175, %v1174
        %1177 = vrot.lane.b32.xlu0 %v1176, 28
        %v1178 = vpop.permute.xlu0 %1177
        %v1179 = vunpack.c.l.b16 %v963
        %v1180 = vunpack.c.l.b16 %v1065
        %v1181 = vpack.c.b16 %v1180, %v1179
        %1182 = vrot.lane.b32.xlu0 %v1181, 32
        %v1183 = vpop.permute.xlu0 %1182
        %v1184 = vunpack.c.l.b16 %v966
        %v1185 = vunpack.c.l.b16 %v1068
        %v1186 = vpack.c.b16 %v1185, %v1184
        %1187 = vrot.lane.b32.xlu0 %v1186, 36
        %v1188 = vpop.permute.xlu0 %1187
        %v1189 = vunpack.c.l.b16 %v969
        %v1190 = vunpack.c.l.b16 %v1071
        %v1191 = vpack.c.b16 %v1190, %v1189
        %1192 = vrot.lane.b32.xlu0 %v1191, 40
        %v1193 = vpop.permute.xlu0 %1192
        %v1194 = vunpack.c.l.b16 %v972
        %v1195 = vunpack.c.l.b16 %v1074
        %v1196 = vpack.c.b16 %v1195, %v1194
        %1197 = vrot.lane.b32.xlu0 %v1196, 44
        %v1198 = vpop.permute.xlu0 %1197
        %v1199 = vunpack.c.l.b16 %v975
        %v1200 = vunpack.c.l.b16 %v1077
        %v1201 = vpack.c.b16 %v1200, %v1199
        %1202 = vrot.lane.b32.xlu0 %v1201, 48
        %v1203 = vpop.permute.xlu0 %1202
        %v1204 = vunpack.c.l.b16 %v978
        %v1205 = vunpack.c.l.b16 %v1080
        %v1206 = vpack.c.b16 %v1205, %v1204
        %1207 = vrot.lane.b32.xlu0 %v1206, 52
        %v1208 = vpop.permute.xlu0 %1207
        %v1209 = vunpack.c.l.b16 %v981
        %v1210 = vunpack.c.l.b16 %v1083
        %v1211 = vpack.c.b16 %v1210, %v1209
        %1212 = vrot.lane.b32.xlu0 %v1211, 56
        %v1213 = vpop.permute.xlu0 %1212
        %v1214 = vunpack.c.l.b16 %v984
        %v1215 = vunpack.c.l.b16 %v1086
        %v1216 = vpack.c.b16 %v1215, %v1214
        %1217 = vrot.lane.b32.xlu0 %v1216, 60
        %v1218 = vpop.permute.xlu0 %1217
        %v1219 = vunpack.c.l.b16 %v987
        %v1220 = vunpack.c.l.b16 %v1089
        %v1221 = vpack.c.b16 %v1220, %v1219
        %1222 = vrot.lane.b32.xlu0 %v1221, 64
        %v1223 = vpop.permute.xlu0 %1222
        %v1224 = vunpack.c.l.b16 %v990
        %v1225 = vunpack.c.l.b16 %v1092
        %v1226 = vpack.c.b16 %v1225, %v1224
        %1227 = vrot.lane.b32.xlu0 %v1226, 68
        %v1228 = vpop.permute.xlu0 %1227
        %v1229 = vunpack.c.l.b16 %v993
        %v1230 = vunpack.c.l.b16 %v1095
        %v1231 = vpack.c.b16 %v1230, %v1229
        %1232 = vrot.lane.b32.xlu0 %v1231, 72
        %v1233 = vpop.permute.xlu0 %1232
        %v1234 = vunpack.c.l.b16 %v996
        %v1235 = vunpack.c.l.b16 %v1098
        %v1236 = vpack.c.b16 %v1235, %v1234
        %1237 = vrot.lane.b32.xlu0 %v1236, 76
        %v1238 = vpop.permute.xlu0 %1237
        %v1239 = vunpack.c.l.b16 %v999
        %v1240 = vunpack.c.l.b16 %v1101
        %v1241 = vpack.c.b16 %v1240, %v1239
        %1242 = vrot.lane.b32.xlu0 %v1241, 80
        %v1243 = vpop.permute.xlu0 %1242
        %v1244 = vunpack.c.l.b16 %v1002
        %v1245 = vunpack.c.l.b16 %v1104
        %v1246 = vpack.c.b16 %v1245, %v1244
        %1247 = vrot.lane.b32.xlu0 %v1246, 84
        %v1248 = vpop.permute.xlu0 %1247
        %v1249 = vunpack.c.l.b16 %v1005
        %v1250 = vunpack.c.l.b16 %v1107
        %v1251 = vpack.c.b16 %v1250, %v1249
        %1252 = vrot.lane.b32.xlu0 %v1251, 88
        %v1253 = vpop.permute.xlu0 %1252
        %v1254 = vunpack.c.l.b16 %v1008
        %v1255 = vunpack.c.l.b16 %v1110
        %v1256 = vpack.c.b16 %v1255, %v1254
        %1257 = vrot.lane.b32.xlu0 %v1256, 92
        %v1258 = vpop.permute.xlu0 %1257
        %v1259 = vunpack.c.l.b16 %v1011
        %v1260 = vunpack.c.l.b16 %v1113
        %v1261 = vpack.c.b16 %v1260, %v1259
        %1262 = vrot.lane.b32.xlu0 %v1261, 96
        %v1263 = vpop.permute.xlu0 %1262
        %v1264 = vunpack.c.l.b16 %v1014
        %v1265 = vunpack.c.l.b16 %v1116
        %v1266 = vpack.c.b16 %v1265, %v1264
        %1267 = vrot.lane.b32.xlu0 %v1266, 100
        %v1268 = vpop.permute.xlu0 %1267
        %v1269 = vunpack.c.l.b16 %v1017
        %v1270 = vunpack.c.l.b16 %v1119
        %v1271 = vpack.c.b16 %v1270, %v1269
        %1272 = vrot.lane.b32.xlu0 %v1271, 104
        %v1273 = vpop.permute.xlu0 %1272
        %v1274 = vunpack.c.l.b16 %v1020
        %v1275 = vunpack.c.l.b16 %v1122
        %v1276 = vpack.c.b16 %v1275, %v1274
        %1277 = vrot.lane.b32.xlu0 %v1276, 108
        %v1278 = vpop.permute.xlu0 %1277
        %v1279 = vunpack.c.l.b16 %v1023
        %v1280 = vunpack.c.l.b16 %v1125
        %v1281 = vpack.c.b16 %v1280, %v1279
        %1282 = vrot.lane.b32.xlu0 %v1281, 112
        %v1283 = vpop.permute.xlu0 %1282
        %v1284 = vunpack.c.l.b16 %v1026
        %v1285 = vunpack.c.l.b16 %v1128
        %v1286 = vpack.c.b16 %v1285, %v1284
        %1287 = vrot.lane.b32.xlu0 %v1286, 116
        %v1288 = vpop.permute.xlu0 %1287
        %v1289 = vunpack.c.l.b16 %v1029
        %v1290 = vunpack.c.l.b16 %v1131
        %v1291 = vpack.c.b16 %v1290, %v1289
        %1292 = vrot.lane.b32.xlu0 %v1291, 120
        %v1293 = vpop.permute.xlu0 %1292
        %v1294 = vunpack.c.l.b16 %v1032
        %v1295 = vunpack.c.l.b16 %v1134
        %v1296 = vpack.c.b16 %v1295, %v1294
        %1297 = vrot.lane.b32.xlu0 %v1296, 124
        %v1298 = vpop.permute.xlu0 %1297
        %v1299 = vunpack.c.l.b16 %v1035
        %v1300 = vunpack.c.l.b16 %v1137
        %v1301 = vpack.c.b16 %v1300, %v1299
        %v1302 = vunpack.c.l.b16 %v1038
        %v1303 = vunpack.c.l.b16 %v1140
        %v1304 = vpack.c.b16 %v1303, %v1302
        %1305 = vrot.lane.b32.xlu0 %v1304, 4
        %v1306 = vpop.permute.xlu0 %1305
        %vm1307 = vcmask 31744
        %v1310 = vsel %vm1307, %v1143, %v1148
        %vm1311 = vcmask 64512
        %v1313 = vsel %vm1311, %v1310, %v1153
        %vm1314 = vcmask 97280
        %v1316 = vsel %vm1314, %v1313, %v1158
        %vm1317 = vcmask 130048
        %v1319 = vsel %vm1317, %v1316, %v1163
        %vm1320 = vcmask 162816
        %v1322 = vsel %vm1320, %v1319, %v1168
        %vm1323 = vcmask 195584
        %v1325 = vsel %vm1323, %v1322, %v1173
        %vm1326 = vcmask 228352
        %v1328 = vsel %vm1326, %v1325, %v1178
        %vm1329 = vcmask 261120
        %v1331 = vsel %vm1329, %v1328, %v1183
        %vm1332 = vcmask 293888
        %v1334 = vsel %vm1332, %v1331, %v1188
        %vm1335 = vcmask 326656
        %v1337 = vsel %vm1335, %v1334, %v1193
        %vm1338 = vcmask 359424
        %v1340 = vsel %vm1338, %v1337, %v1198
        %vm1341 = vcmask 392192
        %v1343 = vsel %vm1341, %v1340, %v1203
        %vm1344 = vcmask 424960
        %v1346 = vsel %vm1344, %v1343, %v1208
        %vm1347 = vcmask 457728
        %v1349 = vsel %vm1347, %v1346, %v1213
        %vm1350 = vcmask 490496
        %v1352 = vsel %vm1350, %v1349, %v1218
        %vm1353 = vcmask 523264
        %v1355 = vsel %vm1353, %v1352, %v1223
        %vm1356 = vcmask 556032
        %v1358 = vsel %vm1356, %v1355, %v1228
        %vm1359 = vcmask 588800
        %v1361 = vsel %vm1359, %v1358, %v1233
        %vm1362 = vcmask 621568
        %v1364 = vsel %vm1362, %v1361, %v1238
        %vm1365 = vcmask 654336
        %v1367 = vsel %vm1365, %v1364, %v1243
        %vm1368 = vcmask 687104
        %v1370 = vsel %vm1368, %v1367, %v1248
        %vm1371 = vcmask 719872
        %v1373 = vsel %vm1371, %v1370, %v1253
        %vm1374 = vcmask 752640
        %v1376 = vsel %vm1374, %v1373, %v1258
        %vm1377 = vcmask 785408
        %v1379 = vsel %vm1377, %v1376, %v1263
        %vm1380 = vcmask 818176
        %v1382 = vsel %vm1380, %v1379, %v1268
        %vm1383 = vcmask 850944
        %v1385 = vsel %vm1383, %v1382, %v1273
        %vm1386 = vcmask 883712
        %v1388 = vsel %vm1386, %v1385, %v1278
        %vm1389 = vcmask 916480
        %v1391 = vsel %vm1389, %v1388, %v1283
        %vm1392 = vcmask 949248
        %v1394 = vsel %vm1392, %v1391, %v1288
        %vm1395 = vcmask 982016
        %v1397 = vsel %vm1395, %v1394, %v1293
        %vm1398 = vcmask 1014784
        %v1400 = vsel %vm1398, %v1397, %v1298
        %v1404 = vsel %vm1307, %v1301, %v1306
        %vm1406 = vcmask 1047556
        %v1407 = vsel %vm1406, 0.0, 0.0
        %v1409 = vunpack.c.l.s4 1983009808
        %v1410 = vunpack.c.0.s8 %v1409
        %v1411 = vperm.slane %v1407, %v1410
        %v1412 = vrot.slane %v1411, 4
        %v1413 = vsel %vm1406, %v1412, %v1411
        %v1415 = vunpack.c.l.s4 1934713408
        %v1416 = vunpack.c.0.s8 %v1415
        %v1417 = vperm.slane %v1413, %v1416
        %v1418 = vrot.slane %v1417, 4
        %v1419 = vsel %vm1406, %v1418, %v1417
        %v1420 = vsel %vm1406, %v1417, %v1418
        %v1422 = vunpack.c.l.s4 1934713408
        %v1423 = vunpack.c.0.s8 %v1422
        %v1424 = vperm.slane %v1407, %v1423
        %v1425 = vrot.slane %v1424, 4
        %v1426 = vsel %vm1406, 0.0, %v1425
        %1429 = vrot.lane.b32.xlu0 %v1420, 4
        %v1430 = vpop.permute.xlu0 %1429
        %1431 = vrot.lane.b32.xlu0 %v1426, 4
        %v1432 = vpop.permute.xlu0 %1431
        %1436 = vrot.lane.b32.xlu0 0.0, 8
        %v1437 = vpop.permute.xlu0 %1436
        %1439 = vrot.lane.b32.xlu0 0.0, 12
        %v1440 = vpop.permute.xlu0 %1439
        %1442 = vrot.lane.b32.xlu0 0.0, 16
        %v1443 = vpop.permute.xlu0 %1442
        %1445 = vrot.lane.b32.xlu0 0.0, 20
        %v1446 = vpop.permute.xlu0 %1445
        %1448 = vrot.lane.b32.xlu0 0.0, 24
        %v1449 = vpop.permute.xlu0 %1448
        %1451 = vrot.lane.b32.xlu0 0.0, 28
        %v1452 = vpop.permute.xlu0 %1451
        %1456 = vrot.lane.b32.xlu0 %v1419, 32
        %v1457 = vpop.permute.xlu0 %1456
        %1458 = vrot.lane.b32.xlu0 %v1424, 32
        %v1459 = vpop.permute.xlu0 %1458
        %1462 = vrot.lane.b32.xlu0 %v1420, 36
        %v1463 = vpop.permute.xlu0 %1462
        %1464 = vrot.lane.b32.xlu0 %v1426, 36
        %v1465 = vpop.permute.xlu0 %1464
        %1468 = vrot.lane.b32.xlu0 0.0, 40
        %v1469 = vpop.permute.xlu0 %1468
        %1471 = vrot.lane.b32.xlu0 0.0, 44
        %v1472 = vpop.permute.xlu0 %1471
        %1474 = vrot.lane.b32.xlu0 0.0, 48
        %v1475 = vpop.permute.xlu0 %1474
        %1477 = vrot.lane.b32.xlu0 0.0, 52
        %v1478 = vpop.permute.xlu0 %1477
        %1480 = vrot.lane.b32.xlu0 0.0, 56
        %v1481 = vpop.permute.xlu0 %1480
        %1483 = vrot.lane.b32.xlu0 0.0, 60
        %v1484 = vpop.permute.xlu0 %1483
        %1486 = vrot.lane.b32.xlu0 %v1419, 64
        %v1487 = vpop.permute.xlu0 %1486
        %1488 = vrot.lane.b32.xlu0 %v1424, 64
        %v1489 = vpop.permute.xlu0 %1488
        %1492 = vrot.lane.b32.xlu0 %v1420, 68
        %v1493 = vpop.permute.xlu0 %1492
        %1494 = vrot.lane.b32.xlu0 %v1426, 68
        %v1495 = vpop.permute.xlu0 %1494
        %1498 = vrot.lane.b32.xlu0 0.0, 72
        %v1499 = vpop.permute.xlu0 %1498
        %1501 = vrot.lane.b32.xlu0 0.0, 76
        %v1502 = vpop.permute.xlu0 %1501
        %1504 = vrot.lane.b32.xlu0 0.0, 80
        %v1505 = vpop.permute.xlu0 %1504
        %1507 = vrot.lane.b32.xlu0 0.0, 84
        %v1508 = vpop.permute.xlu0 %1507
        %1510 = vrot.lane.b32.xlu0 0.0, 88
        %v1511 = vpop.permute.xlu0 %1510
        %1513 = vrot.lane.b32.xlu0 0.0, 92
        %v1514 = vpop.permute.xlu0 %1513
        %1516 = vrot.lane.b32.xlu0 %v1419, 96
        %v1517 = vpop.permute.xlu0 %1516
        %1518 = vrot.lane.b32.xlu0 %v1424, 96
        %v1519 = vpop.permute.xlu0 %1518
        %1522 = vrot.lane.b32.xlu0 %v1420, 100
        %v1523 = vpop.permute.xlu0 %1522
        %1524 = vrot.lane.b32.xlu0 %v1426, 100
        %v1525 = vpop.permute.xlu0 %1524
        %1528 = vrot.lane.b32.xlu0 0.0, 104
        %v1529 = vpop.permute.xlu0 %1528
        %1531 = vrot.lane.b32.xlu0 0.0, 108
        %v1532 = vpop.permute.xlu0 %1531
        %1534 = vrot.lane.b32.xlu0 0.0, 112
        %v1535 = vpop.permute.xlu0 %1534
        %1537 = vrot.lane.b32.xlu0 0.0, 116
        %v1538 = vpop.permute.xlu0 %1537
        %1540 = vrot.lane.b32.xlu0 0.0, 120
        %v1541 = vpop.permute.xlu0 %1540
        %1543 = vrot.lane.b32.xlu0 0.0, 124
        %v1544 = vpop.permute.xlu0 %1543
        %v1546 = vsel %vm1307, %v1419, %v1430
        %v1547 = vsel %vm1307, %v1424, %v1432
        %v1548 = vsel %vm1311, %v1546, %v1437
        %v1549 = vsel %vm1311, %v1547, %v1437
        %v1550 = vsel %vm1314, %v1548, %v1440
        %v1551 = vsel %vm1314, %v1549, %v1440
        %v1552 = vsel %vm1317, %v1550, %v1443
        %v1553 = vsel %vm1317, %v1551, %v1443
        %v1554 = vsel %vm1320, %v1552, %v1446
        %v1555 = vsel %vm1320, %v1553, %v1446
        %v1556 = vsel %vm1323, %v1554, %v1449
        %v1557 = vsel %vm1323, %v1555, %v1449
        %v1558 = vsel %vm1326, %v1556, %v1452
        %v1559 = vsel %vm1326, %v1557, %v1452
        %v1560 = vsel %vm1329, %v1558, %v1457
        %v1561 = vsel %vm1329, %v1559, %v1459
        %v1562 = vsel %vm1332, %v1560, %v1463
        %v1563 = vsel %vm1332, %v1561, %v1465
        %v1564 = vsel %vm1335, %v1562, %v1469
        %v1565 = vsel %vm1335, %v1563, %v1469
        %v1566 = vsel %vm1338, %v1564, %v1472
        %v1567 = vsel %vm1338, %v1565, %v1472
        %v1568 = vsel %vm1341, %v1566, %v1475
        %v1569 = vsel %vm1341, %v1567, %v1475
        %v1570 = vsel %vm1344, %v1568, %v1478
        %v1571 = vsel %vm1344, %v1569, %v1478
        %v1572 = vsel %vm1347, %v1570, %v1481
        %v1573 = vsel %vm1347, %v1571, %v1481
        %v1574 = vsel %vm1350, %v1572, %v1484
        %v1575 = vsel %vm1350, %v1573, %v1484
        %v1576 = vsel %vm1353, %v1574, %v1487
        %v1577 = vsel %vm1353, %v1575, %v1489
        %v1578 = vsel %vm1356, %v1576, %v1493
        %v1579 = vsel %vm1356, %v1577, %v1495
        %v1580 = vsel %vm1359, %v1578, %v1499
        %v1581 = vsel %vm1359, %v1579, %v1499
        %v1582 = vsel %vm1362, %v1580, %v1502
        %v1583 = vsel %vm1362, %v1581, %v1502
        %v1584 = vsel %vm1365, %v1582, %v1505
        %v1585 = vsel %vm1365, %v1583, %v1505
        %v1586 = vsel %vm1368, %v1584, %v1508
        %v1587 = vsel %vm1368, %v1585, %v1508
        %v1588 = vsel %vm1371, %v1586, %v1511
        %v1589 = vsel %vm1371, %v1587, %v1511
        %v1590 = vsel %vm1374, %v1588, %v1514
        %v1591 = vsel %vm1374, %v1589, %v1514
        %v1592 = vsel %vm1377, %v1590, %v1517
        %v1593 = vsel %vm1377, %v1591, %v1519
        %v1594 = vsel %vm1380, %v1592, %v1523
        %v1595 = vsel %vm1380, %v1593, %v1525
        %v1596 = vsel %vm1383, %v1594, %v1529
        %v1597 = vsel %vm1383, %v1595, %v1529
        %v1598 = vsel %vm1386, %v1596, %v1532
        %v1599 = vsel %vm1386, %v1597, %v1532
        %v1600 = vsel %vm1389, %v1598, %v1535
        %v1601 = vsel %vm1389, %v1599, %v1535
        %v1602 = vsel %vm1392, %v1600, %v1538
        %v1603 = vsel %vm1392, %v1601, %v1538
        %v1604 = vsel %vm1395, %v1602, %v1541
        %v1605 = vsel %vm1395, %v1603, %v1541
        %v1606 = vsel %vm1398, %v1604, %v1544
        %v1607 = vsel %vm1398, %v1605, %v1544
        %v1610 = vunpack.c.l.b16 %v334
        %v1611 = vunpack.c.l.b16 %v335
        %v1612 = vpack.c.b16 %v1611, %v1610
        %v1614 = vsel %vm1317, %v1612, 0
        %1616 = vmatpush.bf16.msra.mxu0 0
        %1617 = vmatpush.bf16.msra.mxu0 0
        %1618 = vmatpush.bf16.msra.mxu0 0
        %1619 = vmatpush.bf16.msra.mxu0 0
        %1620 = vmatpush.bf16.msra.mxu0 0
        %1621 = vmatpush.bf16.msra.mxu0 0
        %1622 = vmatpush.bf16.msra.mxu0 0
        %1623 = vmatpush.bf16.msra.mxu0 %v1400
        %1624 = vmatmul.bf16.gmra.mxu0 %v1614
        %v1625 = vpop.f32.mrf.mxu0
        %v1626 = vadd.f32 %v1606, %v1625
        %v1627 = vpop.f32.mrf.mxu0
        %v1628 = vadd.f32 %v1607, %v1627
        %1629 = vdwg.mxu0
        %1630 = vmatpush.bf16.msra.mxu0 0
        %1631 = vmatpush.bf16.msra.mxu0 0
        %1632 = vmatpush.bf16.msra.mxu0 0
        %1633 = vmatpush.bf16.msra.mxu0 0
        %1634 = vmatpush.bf16.msra.mxu0 0
        %1635 = vmatpush.bf16.msra.mxu0 0
        %1636 = vmatpush.bf16.msra.mxu0 0
        %1637 = vmatpush.bf16.msra.mxu0 %v1404
        %1638 = vmatmul.bf16.gmra.mxu0 %v1614
        %v1639 = vpop.f32.mrf.mxu0
        %v1640 = vadd.f32 %v1546, %v1639
        %v1641 = vpop.f32.mrf.mxu0
        %v1642 = vadd.f32 %v1547, %v1641
        %1643 = vdwg.mxu0
        %1646 = vrot.lane.b32.xlu0 %v1626, 124
        %v1647 = vpop.permute.xlu0 %1646
        %1648 = vrot.lane.b32.xlu0 %v1628, 124
        %v1649 = vpop.permute.xlu0 %1648
        %1652 = vrot.lane.b32.xlu0 %v1626, 120
        %v1653 = vpop.permute.xlu0 %1652
        %1654 = vrot.lane.b32.xlu0 %v1628, 120
        %v1655 = vpop.permute.xlu0 %1654
        %1658 = vrot.lane.b32.xlu0 %v1626, 116
        %v1659 = vpop.permute.xlu0 %1658
        %1660 = vrot.lane.b32.xlu0 %v1628, 116
        %v1661 = vpop.permute.xlu0 %1660
        %1664 = vrot.lane.b32.xlu0 %v1626, 112
        %v1665 = vpop.permute.xlu0 %1664
        %1666 = vrot.lane.b32.xlu0 %v1628, 112
        %v1667 = vpop.permute.xlu0 %1666
        %1670 = vrot.lane.b32.xlu0 %v1626, 108
        %v1671 = vpop.permute.xlu0 %1670
        %1672 = vrot.lane.b32.xlu0 %v1628, 108
        %v1673 = vpop.permute.xlu0 %1672
        %1676 = vrot.lane.b32.xlu0 %v1626, 104
        %v1677 = vpop.permute.xlu0 %1676
        %1678 = vrot.lane.b32.xlu0 %v1628, 104
        %v1679 = vpop.permute.xlu0 %1678
        %1682 = vrot.lane.b32.xlu0 %v1626, 100
        %v1683 = vpop.permute.xlu0 %1682
        %1684 = vrot.lane.b32.xlu0 %v1628, 100
        %v1685 = vpop.permute.xlu0 %1684
        %1688 = vrot.lane.b32.xlu0 %v1626, 96
        %v1689 = vpop.permute.xlu0 %1688
        %1690 = vrot.lane.b32.xlu0 %v1628, 96
        %v1691 = vpop.permute.xlu0 %1690
        %1694 = vrot.lane.b32.xlu0 %v1626, 92
        %v1695 = vpop.permute.xlu0 %1694
        %1696 = vrot.lane.b32.xlu0 %v1628, 92
        %v1697 = vpop.permute.xlu0 %1696
        %1700 = vrot.lane.b32.xlu0 %v1626, 88
        %v1701 = vpop.permute.xlu0 %1700
        %1702 = vrot.lane.b32.xlu0 %v1628, 88
        %v1703 = vpop.permute.xlu0 %1702
        %1706 = vrot.lane.b32.xlu0 %v1626, 84
        %v1707 = vpop.permute.xlu0 %1706
        %1708 = vrot.lane.b32.xlu0 %v1628, 84
        %v1709 = vpop.permute.xlu0 %1708
        %1712 = vrot.lane.b32.xlu0 %v1626, 80
        %v1713 = vpop.permute.xlu0 %1712
        %1714 = vrot.lane.b32.xlu0 %v1628, 80
        %v1715 = vpop.permute.xlu0 %1714
        %1718 = vrot.lane.b32.xlu0 %v1626, 76
        %v1719 = vpop.permute.xlu0 %1718
        %1720 = vrot.lane.b32.xlu0 %v1628, 76
        %v1721 = vpop.permute.xlu0 %1720
        %1724 = vrot.lane.b32.xlu0 %v1626, 72
        %v1725 = vpop.permute.xlu0 %1724
        %1726 = vrot.lane.b32.xlu0 %v1628, 72
        %v1727 = vpop.permute.xlu0 %1726
        %1730 = vrot.lane.b32.xlu0 %v1626, 68
        %v1731 = vpop.permute.xlu0 %1730
        %1732 = vrot.lane.b32.xlu0 %v1628, 68
        %v1733 = vpop.permute.xlu0 %1732
        %1736 = vrot.lane.b32.xlu0 %v1626, 64
        %v1737 = vpop.permute.xlu0 %1736
        %1738 = vrot.lane.b32.xlu0 %v1628, 64
        %v1739 = vpop.permute.xlu0 %1738
        %1742 = vrot.lane.b32.xlu0 %v1626, 60
        %v1743 = vpop.permute.xlu0 %1742
        %1744 = vrot.lane.b32.xlu0 %v1628, 60
        %v1745 = vpop.permute.xlu0 %1744
        %1748 = vrot.lane.b32.xlu0 %v1626, 56
        %v1749 = vpop.permute.xlu0 %1748
        %1750 = vrot.lane.b32.xlu0 %v1628, 56
        %v1751 = vpop.permute.xlu0 %1750
        %1754 = vrot.lane.b32.xlu0 %v1626, 52
        %v1755 = vpop.permute.xlu0 %1754
        %1756 = vrot.lane.b32.xlu0 %v1628, 52
        %v1757 = vpop.permute.xlu0 %1756
        %1760 = vrot.lane.b32.xlu0 %v1626, 48
        %v1761 = vpop.permute.xlu0 %1760
        %1762 = vrot.lane.b32.xlu0 %v1628, 48
        %v1763 = vpop.permute.xlu0 %1762
        %1766 = vrot.lane.b32.xlu0 %v1626, 44
        %v1767 = vpop.permute.xlu0 %1766
        %1768 = vrot.lane.b32.xlu0 %v1628, 44
        %v1769 = vpop.permute.xlu0 %1768
        %1772 = vrot.lane.b32.xlu0 %v1626, 40
        %v1773 = vpop.permute.xlu0 %1772
        %1774 = vrot.lane.b32.xlu0 %v1628, 40
        %v1775 = vpop.permute.xlu0 %1774
        %1778 = vrot.lane.b32.xlu0 %v1626, 36
        %v1779 = vpop.permute.xlu0 %1778
        %1780 = vrot.lane.b32.xlu0 %v1628, 36
        %v1781 = vpop.permute.xlu0 %1780
        %1784 = vrot.lane.b32.xlu0 %v1626, 32
        %v1785 = vpop.permute.xlu0 %1784
        %1786 = vrot.lane.b32.xlu0 %v1628, 32
        %v1787 = vpop.permute.xlu0 %1786
        %1790 = vrot.lane.b32.xlu0 %v1626, 28
        %v1791 = vpop.permute.xlu0 %1790
        %1792 = vrot.lane.b32.xlu0 %v1628, 28
        %v1793 = vpop.permute.xlu0 %1792
        %1796 = vrot.lane.b32.xlu0 %v1626, 24
        %v1797 = vpop.permute.xlu0 %1796
        %1798 = vrot.lane.b32.xlu0 %v1628, 24
        %v1799 = vpop.permute.xlu0 %1798
        %1802 = vrot.lane.b32.xlu0 %v1626, 20
        %v1803 = vpop.permute.xlu0 %1802
        %1804 = vrot.lane.b32.xlu0 %v1628, 20
        %v1805 = vpop.permute.xlu0 %1804
        %1808 = vrot.lane.b32.xlu0 %v1626, 16
        %v1809 = vpop.permute.xlu0 %1808
        %1810 = vrot.lane.b32.xlu0 %v1628, 16
        %v1811 = vpop.permute.xlu0 %1810
        %1814 = vrot.lane.b32.xlu0 %v1626, 12
        %v1815 = vpop.permute.xlu0 %1814
        %1816 = vrot.lane.b32.xlu0 %v1628, 12
        %v1817 = vpop.permute.xlu0 %1816
        %1820 = vrot.lane.b32.xlu0 %v1626, 8
        %v1821 = vpop.permute.xlu0 %1820
        %1822 = vrot.lane.b32.xlu0 %v1628, 8
        %v1823 = vpop.permute.xlu0 %1822
        %1826 = vrot.lane.b32.xlu0 %v1626, 4
        %v1827 = vpop.permute.xlu0 %1826
        %1828 = vrot.lane.b32.xlu0 %v1628, 4
        %v1829 = vpop.permute.xlu0 %1828
        %1834 = vrot.lane.b32.xlu0 %v1640, 124
        %v1835 = vpop.permute.xlu0 %1834
        %1836 = vrot.lane.b32.xlu0 %v1642, 124
        %v1837 = vpop.permute.xlu0 %1836
        %v1839 = vrot.slane %v1653, 4
        %v1840 = vsel %vm1406, %v1839, %v1626
        %v1841 = vrot.slane %v1626, 4
        %v1842 = vsel %vm1406, %v1653, %v1841
        %v1844 = vunpack.c.l.s4 1983009808
        %v1845 = vunpack.c.0.s8 %v1844
        %v1846 = vperm.slane %v1840, %v1845
        %v1848 = vunpack.c.l.s4 1983009808
        %v1849 = vunpack.c.0.s8 %v1848
        %v1850 = vperm.slane %v1842, %v1849
        %v1851 = vrot.slane %v1659, 4
        %v1852 = vsel %vm1406, %v1851, %v1647
        %v1853 = vrot.slane %v1647, 4
        %v1854 = vsel %vm1406, %v1659, %v1853
        %v1856 = vunpack.c.l.s4 1983009808
        %v1857 = vunpack.c.0.s8 %v1856
        %v1858 = vperm.slane %v1852, %v1857
        %v1860 = vunpack.c.l.s4 1983009808
        %v1861 = vunpack.c.0.s8 %v1860
        %v1862 = vperm.slane %v1854, %v1861
        %v1863 = vrot.slane %v1677, 4
        %v1864 = vsel %vm1406, %v1863, %v1665
        %v1865 = vrot.slane %v1665, 4
        %v1866 = vsel %vm1406, %v1677, %v1865
        %v1868 = vunpack.c.l.s4 1983009808
        %v1869 = vunpack.c.0.s8 %v1868
        %v1870 = vperm.slane %v1864, %v1869
        %v1872 = vunpack.c.l.s4 1983009808
        %v1873 = vunpack.c.0.s8 %v1872
        %v1874 = vperm.slane %v1866, %v1873
        %v1875 = vrot.slane %v1683, 4
        %v1876 = vsel %vm1406, %v1875, %v1671
        %v1877 = vrot.slane %v1671, 4
        %v1878 = vsel %vm1406, %v1683, %v1877
        %v1880 = vunpack.c.l.s4 1983009808
        %v1881 = vunpack.c.0.s8 %v1880
        %v1882 = vperm.slane %v1876, %v1881
        %v1884 = vunpack.c.l.s4 1983009808
        %v1885 = vunpack.c.0.s8 %v1884
        %v1886 = vperm.slane %v1878, %v1885
        %v1887 = vrot.slane %v1858, 4
        %v1888 = vsel %vm1406, %v1887, %v1846
        %v1889 = vrot.slane %v1846, 4
        %v1890 = vsel %vm1406, %v1858, %v1889
        %v1892 = vunpack.c.l.s4 1934713408
        %v1893 = vunpack.c.0.s8 %v1892
        %v1894 = vperm.slane %v1888, %v1893
        %v1896 = vunpack.c.l.s4 1934713408
        %v1897 = vunpack.c.0.s8 %v1896
        %v1898 = vperm.slane %v1890, %v1897
        %v1899 = vrot.slane %v1862, 4
        %v1900 = vsel %vm1406, %v1899, %v1850
        %v1901 = vrot.slane %v1850, 4
        %v1902 = vsel %vm1406, %v1862, %v1901
        %v1904 = vunpack.c.l.s4 1934713408
        %v1905 = vunpack.c.0.s8 %v1904
        %v1906 = vperm.slane %v1900, %v1905
        %v1908 = vunpack.c.l.s4 1934713408
        %v1909 = vunpack.c.0.s8 %v1908
        %v1910 = vperm.slane %v1902, %v1909
        %v1911 = vrot.slane %v1882, 4
        %v1912 = vsel %vm1406, %v1911, %v1870
        %v1913 = vrot.slane %v1870, 4
        %v1914 = vsel %vm1406, %v1882, %v1913
        %v1916 = vunpack.c.l.s4 1934713408
        %v1917 = vunpack.c.0.s8 %v1916
        %v1918 = vperm.slane %v1912, %v1917
        %v1920 = vunpack.c.l.s4 1934713408
        %v1921 = vunpack.c.0.s8 %v1920
        %v1922 = vperm.slane %v1914, %v1921
        %v1923 = vrot.slane %v1886, 4
        %v1924 = vsel %vm1406, %v1923, %v1874
        %v1925 = vrot.slane %v1874, 4
        %v1926 = vsel %vm1406, %v1886, %v1925
        %v1928 = vunpack.c.l.s4 1934713408
        %v1929 = vunpack.c.0.s8 %v1928
        %v1930 = vperm.slane %v1924, %v1929
        %v1932 = vunpack.c.l.s4 1934713408
        %v1933 = vunpack.c.0.s8 %v1932
        %v1934 = vperm.slane %v1926, %v1933
        %v1935 = vrot.slane %v1918, 4
        %v1936 = vsel %vm1406, %v1935, %v1894
        %v1937 = vrot.slane %v1894, 4
        %v1938 = vsel %vm1406, %v1918, %v1937
        %v1939 = vrot.slane %v1922, 4
        %v1940 = vsel %vm1406, %v1939, %v1898
        %v1941 = vrot.slane %v1898, 4
        %v1942 = vsel %vm1406, %v1922, %v1941
        %v1943 = vrot.slane %v1930, 4
        %v1944 = vsel %vm1406, %v1943, %v1906
        %v1945 = vrot.slane %v1906, 4
        %v1946 = vsel %vm1406, %v1930, %v1945
        %v1947 = vrot.slane %v1934, 4
        %v1948 = vsel %vm1406, %v1947, %v1910
        %v1949 = vrot.slane %v1910, 4
        %v1950 = vsel %vm1406, %v1934, %v1949
        %v1951 = vrot.slane %v1701, 4
        %v1952 = vsel %vm1406, %v1951, %v1689
        %v1953 = vrot.slane %v1689, 4
        %v1954 = vsel %vm1406, %v1701, %v1953
        %v1956 = vunpack.c.l.s4 1983009808
        %v1957 = vunpack.c.0.s8 %v1956
        %v1958 = vperm.slane %v1952, %v1957
        %v1960 = vunpack.c.l.s4 1983009808
        %v1961 = vunpack.c.0.s8 %v1960
        %v1962 = vperm.slane %v1954, %v1961
        %v1963 = vrot.slane %v1707, 4
        %v1964 = vsel %vm1406, %v1963, %v1695
        %v1965 = vrot.slane %v1695, 4
        %v1966 = vsel %vm1406, %v1707, %v1965
        %v1968 = vunpack.c.l.s4 1983009808
        %v1969 = vunpack.c.0.s8 %v1968
        %v1970 = vperm.slane %v1964, %v1969
        %v1972 = vunpack.c.l.s4 1983009808
        %v1973 = vunpack.c.0.s8 %v1972
        %v1974 = vperm.slane %v1966, %v1973
        %v1975 = vrot.slane %v1725, 4
        %v1976 = vsel %vm1406, %v1975, %v1713
        %v1977 = vrot.slane %v1713, 4
        %v1978 = vsel %vm1406, %v1725, %v1977
        %v1980 = vunpack.c.l.s4 1983009808
        %v1981 = vunpack.c.0.s8 %v1980
        %v1982 = vperm.slane %v1976, %v1981
        %v1984 = vunpack.c.l.s4 1983009808
        %v1985 = vunpack.c.0.s8 %v1984
        %v1986 = vperm.slane %v1978, %v1985
        %v1987 = vrot.slane %v1731, 4
        %v1988 = vsel %vm1406, %v1987, %v1719
        %v1989 = vrot.slane %v1719, 4
        %v1990 = vsel %vm1406, %v1731, %v1989
        %v1992 = vunpack.c.l.s4 1983009808
        %v1993 = vunpack.c.0.s8 %v1992
        %v1994 = vperm.slane %v1988, %v1993
        %v1996 = vunpack.c.l.s4 1983009808
        %v1997 = vunpack.c.0.s8 %v1996
        %v1998 = vperm.slane %v1990, %v1997
        %v1999 = vrot.slane %v1970, 4
        %v2000 = vsel %vm1406, %v1999, %v1958
        %v2001 = vrot.slane %v1958, 4
        %v2002 = vsel %vm1406, %v1970, %v2001
        %v2004 = vunpack.c.l.s4 1934713408
        %v2005 = vunpack.c.0.s8 %v2004
        %v2006 = vperm.slane %v2000, %v2005
        %v2008 = vunpack.c.l.s4 1934713408
        %v2009 = vunpack.c.0.s8 %v2008
        %v2010 = vperm.slane %v2002, %v2009
        %v2011 = vrot.slane %v1974, 4
        %v2012 = vsel %vm1406, %v2011, %v1962
        %v2013 = vrot.slane %v1962, 4
        %v2014 = vsel %vm1406, %v1974, %v2013
        %v2016 = vunpack.c.l.s4 1934713408
        %v2017 = vunpack.c.0.s8 %v2016
        %v2018 = vperm.slane %v2012, %v2017
        %v2020 = vunpack.c.l.s4 1934713408
        %v2021 = vunpack.c.0.s8 %v2020
        %v2022 = vperm.slane %v2014, %v2021
        %v2023 = vrot.slane %v1994, 4
        %v2024 = vsel %vm1406, %v2023, %v1982
        %v2025 = vrot.slane %v1982, 4
        %v2026 = vsel %vm1406, %v1994, %v2025
        %v2028 = vunpack.c.l.s4 1934713408
        %v2029 = vunpack.c.0.s8 %v2028
        %v2030 = vperm.slane %v2024, %v2029
        %v2032 = vunpack.c.l.s4 1934713408
        %v2033 = vunpack.c.0.s8 %v2032
        %v2034 = vperm.slane %v2026, %v2033
        %v2035 = vrot.slane %v1998, 4
        %v2036 = vsel %vm1406, %v2035, %v1986
        %v2037 = vrot.slane %v1986, 4
        %v2038 = vsel %vm1406, %v1998, %v2037
        %v2040 = vunpack.c.l.s4 1934713408
        %v2041 = vunpack.c.0.s8 %v2040
        %v2042 = vperm.slane %v2036, %v2041
        %v2044 = vunpack.c.l.s4 1934713408
        %v2045 = vunpack.c.0.s8 %v2044
        %v2046 = vperm.slane %v2038, %v2045
        %v2047 = vrot.slane %v2030, 4
        %v2048 = vsel %vm1406, %v2047, %v2006
        %v2049 = vrot.slane %v2006, 4
        %v2050 = vsel %vm1406, %v2030, %v2049
        %v2051 = vrot.slane %v2034, 4
        %v2052 = vsel %vm1406, %v2051, %v2010
        %v2053 = vrot.slane %v2010, 4
        %v2054 = vsel %vm1406, %v2034, %v2053
        %v2055 = vrot.slane %v2042, 4
        %v2056 = vsel %vm1406, %v2055, %v2018
        %v2057 = vrot.slane %v2018, 4
        %v2058 = vsel %vm1406, %v2042, %v2057
        %v2059 = vrot.slane %v2046, 4
        %v2060 = vsel %vm1406, %v2059, %v2022
        %v2061 = vrot.slane %v2022, 4
        %v2062 = vsel %vm1406, %v2046, %v2061
        %v2063 = vrot.slane %v1749, 4
        %v2064 = vsel %vm1406, %v2063, %v1737
        %v2065 = vrot.slane %v1737, 4
        %v2066 = vsel %vm1406, %v1749, %v2065
        %v2068 = vunpack.c.l.s4 1983009808
        %v2069 = vunpack.c.0.s8 %v2068
        %v2070 = vperm.slane %v2064, %v2069
        %v2072 = vunpack.c.l.s4 1983009808
        %v2073 = vunpack.c.0.s8 %v2072
        %v2074 = vperm.slane %v2066, %v2073
        %v2075 = vrot.slane %v1755, 4
        %v2076 = vsel %vm1406, %v2075, %v1743
        %v2077 = vrot.slane %v1743, 4
        %v2078 = vsel %vm1406, %v1755, %v2077
        %v2080 = vunpack.c.l.s4 1983009808
        %v2081 = vunpack.c.0.s8 %v2080
        %v2082 = vperm.slane %v2076, %v2081
        %v2084 = vunpack.c.l.s4 1983009808
        %v2085 = vunpack.c.0.s8 %v2084
        %v2086 = vperm.slane %v2078, %v2085
        %v2087 = vrot.slane %v1773, 4
        %v2088 = vsel %vm1406, %v2087, %v1761
        %v2089 = vrot.slane %v1761, 4
        %v2090 = vsel %vm1406, %v1773, %v2089
        %v2092 = vunpack.c.l.s4 1983009808
        %v2093 = vunpack.c.0.s8 %v2092
        %v2094 = vperm.slane %v2088, %v2093
        %v2096 = vunpack.c.l.s4 1983009808
        %v2097 = vunpack.c.0.s8 %v2096
        %v2098 = vperm.slane %v2090, %v2097
        %v2099 = vrot.slane %v1779, 4
        %v2100 = vsel %vm1406, %v2099, %v1767
        %v2101 = vrot.slane %v1767, 4
        %v2102 = vsel %vm1406, %v1779, %v2101
        %v2104 = vunpack.c.l.s4 1983009808
        %v2105 = vunpack.c.0.s8 %v2104
        %v2106 = vperm.slane %v2100, %v2105
        %v2108 = vunpack.c.l.s4 1983009808
        %v2109 = vunpack.c.0.s8 %v2108
        %v2110 = vperm.slane %v2102, %v2109
        %v2111 = vrot.slane %v2082, 4
        %v2112 = vsel %vm1406, %v2111, %v2070
        %v2113 = vrot.slane %v2070, 4
        %v2114 = vsel %vm1406, %v2082, %v2113
        %v2116 = vunpack.c.l.s4 1934713408
        %v2117 = vunpack.c.0.s8 %v2116
        %v2118 = vperm.slane %v2112, %v2117
        %v2120 = vunpack.c.l.s4 1934713408
        %v2121 = vunpack.c.0.s8 %v2120
        %v2122 = vperm.slane %v2114, %v2121
        %v2123 = vrot.slane %v2086, 4
        %v2124 = vsel %vm1406, %v2123, %v2074
        %v2125 = vrot.slane %v2074, 4
        %v2126 = vsel %vm1406, %v2086, %v2125
        %v2128 = vunpack.c.l.s4 1934713408
        %v2129 = vunpack.c.0.s8 %v2128
        %v2130 = vperm.slane %v2124, %v2129
        %v2132 = vunpack.c.l.s4 1934713408
        %v2133 = vunpack.c.0.s8 %v2132
        %v2134 = vperm.slane %v2126, %v2133
        %v2135 = vrot.slane %v2106, 4
        %v2136 = vsel %vm1406, %v2135, %v2094
        %v2137 = vrot.slane %v2094, 4
        %v2138 = vsel %vm1406, %v2106, %v2137
        %v2140 = vunpack.c.l.s4 1934713408
        %v2141 = vunpack.c.0.s8 %v2140
        %v2142 = vperm.slane %v2136, %v2141
        %v2144 = vunpack.c.l.s4 1934713408
        %v2145 = vunpack.c.0.s8 %v2144
        %v2146 = vperm.slane %v2138, %v2145
        %v2147 = vrot.slane %v2110, 4
        %v2148 = vsel %vm1406, %v2147, %v2098
        %v2149 = vrot.slane %v2098, 4
        %v2150 = vsel %vm1406, %v2110, %v2149
        %v2152 = vunpack.c.l.s4 1934713408
        %v2153 = vunpack.c.0.s8 %v2152
        %v2154 = vperm.slane %v2148, %v2153
        %v2156 = vunpack.c.l.s4 1934713408
        %v2157 = vunpack.c.0.s8 %v2156
        %v2158 = vperm.slane %v2150, %v2157
        %v2159 = vrot.slane %v2142, 4
        %v2160 = vsel %vm1406, %v2159, %v2118
        %v2161 = vrot.slane %v2118, 4
        %v2162 = vsel %vm1406, %v2142, %v2161
        %v2163 = vrot.slane %v2146, 4
        %v2164 = vsel %vm1406, %v2163, %v2122
        %v2165 = vrot.slane %v2122, 4
        %v2166 = vsel %vm1406, %v2146, %v2165
        %v2167 = vrot.slane %v2154, 4
        %v2168 = vsel %vm1406, %v2167, %v2130
        %v2169 = vrot.slane %v2130, 4
        %v2170 = vsel %vm1406, %v2154, %v2169
        %v2171 = vrot.slane %v2158, 4
        %v2172 = vsel %vm1406, %v2171, %v2134
        %v2173 = vrot.slane %v2134, 4
        %v2174 = vsel %vm1406, %v2158, %v2173
        %v2175 = vrot.slane %v1797, 4
        %v2176 = vsel %vm1406, %v2175, %v1785
        %v2177 = vrot.slane %v1785, 4
        %v2178 = vsel %vm1406, %v1797, %v2177
        %v2180 = vunpack.c.l.s4 1983009808
        %v2181 = vunpack.c.0.s8 %v2180
        %v2182 = vperm.slane %v2176, %v2181
        %v2184 = vunpack.c.l.s4 1983009808
        %v2185 = vunpack.c.0.s8 %v2184
        %v2186 = vperm.slane %v2178, %v2185
        %v2187 = vrot.slane %v1803, 4
        %v2188 = vsel %vm1406, %v2187, %v1791
        %v2189 = vrot.slane %v1791, 4
        %v2190 = vsel %vm1406, %v1803, %v2189
        %v2192 = vunpack.c.l.s4 1983009808
        %v2193 = vunpack.c.0.s8 %v2192
        %v2194 = vperm.slane %v2188, %v2193
        %v2196 = vunpack.c.l.s4 1983009808
        %v2197 = vunpack.c.0.s8 %v2196
        %v2198 = vperm.slane %v2190, %v2197
        %v2199 = vrot.slane %v1821, 4
        %v2200 = vsel %vm1406, %v2199, %v1809
        %v2201 = vrot.slane %v1809, 4
        %v2202 = vsel %vm1406, %v1821, %v2201
        %v2204 = vunpack.c.l.s4 1983009808
        %v2205 = vunpack.c.0.s8 %v2204
        %v2206 = vperm.slane %v2200, %v2205
        %v2208 = vunpack.c.l.s4 1983009808
        %v2209 = vunpack.c.0.s8 %v2208
        %v2210 = vperm.slane %v2202, %v2209
        %v2211 = vrot.slane %v1827, 4
        %v2212 = vsel %vm1406, %v2211, %v1815
        %v2213 = vrot.slane %v1815, 4
        %v2214 = vsel %vm1406, %v1827, %v2213
        %v2216 = vunpack.c.l.s4 1983009808
        %v2217 = vunpack.c.0.s8 %v2216
        %v2218 = vperm.slane %v2212, %v2217
        %v2220 = vunpack.c.l.s4 1983009808
        %v2221 = vunpack.c.0.s8 %v2220
        %v2222 = vperm.slane %v2214, %v2221
        %v2223 = vrot.slane %v2194, 4
        %v2224 = vsel %vm1406, %v2223, %v2182
        %v2225 = vrot.slane %v2182, 4
        %v2226 = vsel %vm1406, %v2194, %v2225
        %v2228 = vunpack.c.l.s4 1934713408
        %v2229 = vunpack.c.0.s8 %v2228
        %v2230 = vperm.slane %v2224, %v2229
        %v2232 = vunpack.c.l.s4 1934713408
        %v2233 = vunpack.c.0.s8 %v2232
        %v2234 = vperm.slane %v2226, %v2233
        %v2235 = vrot.slane %v2198, 4
        %v2236 = vsel %vm1406, %v2235, %v2186
        %v2237 = vrot.slane %v2186, 4
        %v2238 = vsel %vm1406, %v2198, %v2237
        %v2240 = vunpack.c.l.s4 1934713408
        %v2241 = vunpack.c.0.s8 %v2240
        %v2242 = vperm.slane %v2236, %v2241
        %v2244 = vunpack.c.l.s4 1934713408
        %v2245 = vunpack.c.0.s8 %v2244
        %v2246 = vperm.slane %v2238, %v2245
        %v2247 = vrot.slane %v2218, 4
        %v2248 = vsel %vm1406, %v2247, %v2206
        %v2249 = vrot.slane %v2206, 4
        %v2250 = vsel %vm1406, %v2218, %v2249
        %v2252 = vunpack.c.l.s4 1934713408
        %v2253 = vunpack.c.0.s8 %v2252
        %v2254 = vperm.slane %v2248, %v2253
        %v2256 = vunpack.c.l.s4 1934713408
        %v2257 = vunpack.c.0.s8 %v2256
        %v2258 = vperm.slane %v2250, %v2257
        %v2259 = vrot.slane %v2222, 4
        %v2260 = vsel %vm1406, %v2259, %v2210
        %v2261 = vrot.slane %v2210, 4
        %v2262 = vsel %vm1406, %v2222, %v2261
        %v2264 = vunpack.c.l.s4 1934713408
        %v2265 = vunpack.c.0.s8 %v2264
        %v2266 = vperm.slane %v2260, %v2265
        %v2268 = vunpack.c.l.s4 1934713408
        %v2269 = vunpack.c.0.s8 %v2268
        %v2270 = vperm.slane %v2262, %v2269
        %v2271 = vrot.slane %v2254, 4
        %v2272 = vsel %vm1406, %v2271, %v2230
        %v2273 = vrot.slane %v2230, 4
        %v2274 = vsel %vm1406, %v2254, %v2273
        %v2275 = vrot.slane %v2258, 4
        %v2276 = vsel %vm1406, %v2275, %v2234
        %v2277 = vrot.slane %v2234, 4
        %v2278 = vsel %vm1406, %v2258, %v2277
        %v2279 = vrot.slane %v2266, 4
        %v2280 = vsel %vm1406, %v2279, %v2242
        %v2281 = vrot.slane %v2242, 4
        %v2282 = vsel %vm1406, %v2266, %v2281
        %v2283 = vrot.slane %v2270, 4
        %v2284 = vsel %vm1406, %v2283, %v2246
        %v2285 = vrot.slane %v2246, 4
        %v2286 = vsel %vm1406, %v2270, %v2285
        %v2287 = vrot.slane %v1640, 4
        %v2288 = vsel %vm1406, 0.0, %v2287
        %v2290 = vunpack.c.l.s4 1983009808
        %v2291 = vunpack.c.0.s8 %v2290
        %v2292 = vperm.slane %v1640, %v2291
        %v2294 = vunpack.c.l.s4 1983009808
        %v2295 = vunpack.c.0.s8 %v2294
        %v2296 = vperm.slane %v2288, %v2295
        %v2297 = vrot.slane %v1835, 4
        %v2298 = vsel %vm1406, 0.0, %v2297
        %v2300 = vunpack.c.l.s4 1983009808
        %v2301 = vunpack.c.0.s8 %v2300
        %v2302 = vperm.slane %v1835, %v2301
        %v2304 = vunpack.c.l.s4 1983009808
        %v2305 = vunpack.c.0.s8 %v2304
        %v2306 = vperm.slane %v2298, %v2305
        %v2307 = vrot.slane %v2302, 4
        %v2308 = vsel %vm1406, %v2307, %v2292
        %v2309 = vrot.slane %v2292, 4
        %v2310 = vsel %vm1406, %v2302, %v2309
        %v2312 = vunpack.c.l.s4 1934713408
        %v2313 = vunpack.c.0.s8 %v2312
        %v2314 = vperm.slane %v2308, %v2313
        %v2316 = vunpack.c.l.s4 1934713408
        %v2317 = vunpack.c.0.s8 %v2316
        %v2318 = vperm.slane %v2310, %v2317
        %v2319 = vrot.slane %v2306, 4
        %v2320 = vsel %vm1406, %v2319, %v2296
        %v2321 = vrot.slane %v2296, 4
        %v2322 = vsel %vm1406, %v2306, %v2321
        %v2324 = vunpack.c.l.s4 1934713408
        %v2325 = vunpack.c.0.s8 %v2324
        %v2326 = vperm.slane %v2320, %v2325
        %v2328 = vunpack.c.l.s4 1934713408
        %v2329 = vunpack.c.0.s8 %v2328
        %v2330 = vperm.slane %v2322, %v2329
        %v2331 = vrot.slane %v2314, 4
        %v2332 = vsel %vm1406, 0.0, %v2331
        %v2333 = vrot.slane %v2318, 4
        %v2334 = vsel %vm1406, 0.0, %v2333
        %v2335 = vrot.slane %v2326, 4
        %v2336 = vsel %vm1406, 0.0, %v2335
        %v2337 = vrot.slane %v2330, 4
        %v2338 = vsel %vm1406, 0.0, %v2337
        %v2339 = vrot.slane %v1655, 4
        %v2340 = vsel %vm1406, %v2339, %v1628
        %v2342 = vunpack.c.l.s4 1983009808
        %v2343 = vunpack.c.0.s8 %v2342
        %v2344 = vperm.slane %v2340, %v2343
        %v2345 = vrot.slane %v1661, 4
        %v2346 = vsel %vm1406, %v2345, %v1649
        %v2348 = vunpack.c.l.s4 1983009808
        %v2349 = vunpack.c.0.s8 %v2348
        %v2350 = vperm.slane %v2346, %v2349
        %v2351 = vrot.slane %v1679, 4
        %v2352 = vsel %vm1406, %v2351, %v1667
        %v2354 = vunpack.c.l.s4 1983009808
        %v2355 = vunpack.c.0.s8 %v2354
        %v2356 = vperm.slane %v2352, %v2355
        %v2357 = vrot.slane %v1685, 4
        %v2358 = vsel %vm1406, %v2357, %v1673
        %v2360 = vunpack.c.l.s4 1983009808
        %v2361 = vunpack.c.0.s8 %v2360
        %v2362 = vperm.slane %v2358, %v2361
        %v2363 = vrot.slane %v2350, 4
        %v2364 = vsel %vm1406, %v2363, %v2344
        %v2366 = vunpack.c.l.s4 1934713408
        %v2367 = vunpack.c.0.s8 %v2366
        %v2368 = vperm.slane %v2364, %v2367
        %v2369 = vrot.slane %v2362, 4
        %v2370 = vsel %vm1406, %v2369, %v2356
        %v2372 = vunpack.c.l.s4 1934713408
        %v2373 = vunpack.c.0.s8 %v2372
        %v2374 = vperm.slane %v2370, %v2373
        %v2375 = vrot.slane %v2374, 4
        %v2376 = vsel %vm1406, %v2375, %v2368
        %v2377 = vrot.slane %v2368, 4
        %v2378 = vsel %vm1406, %v2374, %v2377
        %v2379 = vrot.slane %v1703, 4
        %v2380 = vsel %vm1406, %v2379, %v1691
        %v2382 = vunpack.c.l.s4 1983009808
        %v2383 = vunpack.c.0.s8 %v2382
        %v2384 = vperm.slane %v2380, %v2383
        %v2385 = vrot.slane %v1709, 4
        %v2386 = vsel %vm1406, %v2385, %v1697
        %v2388 = vunpack.c.l.s4 1983009808
        %v2389 = vunpack.c.0.s8 %v2388
        %v2390 = vperm.slane %v2386, %v2389
        %v2391 = vrot.slane %v1727, 4
        %v2392 = vsel %vm1406, %v2391, %v1715
        %v2394 = vunpack.c.l.s4 1983009808
        %v2395 = vunpack.c.0.s8 %v2394
        %v2396 = vperm.slane %v2392, %v2395
        %v2397 = vrot.slane %v1733, 4
        %v2398 = vsel %vm1406, %v2397, %v1721
        %v2400 = vunpack.c.l.s4 1983009808
        %v2401 = vunpack.c.0.s8 %v2400
        %v2402 = vperm.slane %v2398, %v2401
        %v2403 = vrot.slane %v2390, 4
        %v2404 = vsel %vm1406, %v2403, %v2384
        %v2406 = vunpack.c.l.s4 1934713408
        %v2407 = vunpack.c.0.s8 %v2406
        %v2408 = vperm.slane %v2404, %v2407
        %v2409 = vrot.slane %v2402, 4
        %v2410 = vsel %vm1406, %v2409, %v2396
        %v2412 = vunpack.c.l.s4 1934713408
        %v2413 = vunpack.c.0.s8 %v2412
        %v2414 = vperm.slane %v2410, %v2413
        %v2415 = vrot.slane %v2414, 4
        %v2416 = vsel %vm1406, %v2415, %v2408
        %v2417 = vrot.slane %v2408, 4
        %v2418 = vsel %vm1406, %v2414, %v2417
        %v2419 = vrot.slane %v1751, 4
        %v2420 = vsel %vm1406, %v2419, %v1739
        %v2422 = vunpack.c.l.s4 1983009808
        %v2423 = vunpack.c.0.s8 %v2422
        %v2424 = vperm.slane %v2420, %v2423
        %v2425 = vrot.slane %v1757, 4
        %v2426 = vsel %vm1406, %v2425, %v1745
        %v2428 = vunpack.c.l.s4 1983009808
        %v2429 = vunpack.c.0.s8 %v2428
        %v2430 = vperm.slane %v2426, %v2429
        %v2431 = vrot.slane %v1775, 4
        %v2432 = vsel %vm1406, %v2431, %v1763
        %v2434 = vunpack.c.l.s4 1983009808
        %v2435 = vunpack.c.0.s8 %v2434
        %v2436 = vperm.slane %v2432, %v2435
        %v2437 = vrot.slane %v1781, 4
        %v2438 = vsel %vm1406, %v2437, %v1769
        %v2440 = vunpack.c.l.s4 1983009808
        %v2441 = vunpack.c.0.s8 %v2440
        %v2442 = vperm.slane %v2438, %v2441
        %v2443 = vrot.slane %v2430, 4
        %v2444 = vsel %vm1406, %v2443, %v2424
        %v2446 = vunpack.c.l.s4 1934713408
        %v2447 = vunpack.c.0.s8 %v2446
        %v2448 = vperm.slane %v2444, %v2447
        %v2449 = vrot.slane %v2442, 4
        %v2450 = vsel %vm1406, %v2449, %v2436
        %v2452 = vunpack.c.l.s4 1934713408
        %v2453 = vunpack.c.0.s8 %v2452
        %v2454 = vperm.slane %v2450, %v2453
        %v2455 = vrot.slane %v2454, 4
        %v2456 = vsel %vm1406, %v2455, %v2448
        %v2457 = vrot.slane %v2448, 4
        %v2458 = vsel %vm1406, %v2454, %v2457
        %v2459 = vrot.slane %v1799, 4
        %v2460 = vsel %vm1406, %v2459, %v1787
        %v2462 = vunpack.c.l.s4 1983009808
        %v2463 = vunpack.c.0.s8 %v2462
        %v2464 = vperm.slane %v2460, %v2463
        %v2465 = vrot.slane %v1805, 4
        %v2466 = vsel %vm1406, %v2465, %v1793
        %v2468 = vunpack.c.l.s4 1983009808
        %v2469 = vunpack.c.0.s8 %v2468
        %v2470 = vperm.slane %v2466, %v2469
        %v2471 = vrot.slane %v1823, 4
        %v2472 = vsel %vm1406, %v2471, %v1811
        %v2474 = vunpack.c.l.s4 1983009808
        %v2475 = vunpack.c.0.s8 %v2474
        %v2476 = vperm.slane %v2472, %v2475
        %v2477 = vrot.slane %v1829, 4
        %v2478 = vsel %vm1406, %v2477, %v1817
        %v2480 = vunpack.c.l.s4 1983009808
        %v2481 = vunpack.c.0.s8 %v2480
        %v2482 = vperm.slane %v2478, %v2481
        %v2483 = vrot.slane %v2470, 4
        %v2484 = vsel %vm1406, %v2483, %v2464
        %v2486 = vunpack.c.l.s4 1934713408
        %v2487 = vunpack.c.0.s8 %v2486
        %v2488 = vperm.slane %v2484, %v2487
        %v2489 = vrot.slane %v2482, 4
        %v2490 = vsel %vm1406, %v2489, %v2476
        %v2492 = vunpack.c.l.s4 1934713408
        %v2493 = vunpack.c.0.s8 %v2492
        %v2494 = vperm.slane %v2490, %v2493
        %v2495 = vrot.slane %v2494, 4
        %v2496 = vsel %vm1406, %v2495, %v2488
        %v2497 = vrot.slane %v2488, 4
        %v2498 = vsel %vm1406, %v2494, %v2497
        %v2500 = vrot.slane %v1837, 4
        %v2501 = vsel %vm1406, %v2500, %v1642
        %v2503 = vunpack.c.l.s4 1934713408
        %v2504 = vunpack.c.0.s8 %v2503
        %v2505 = vperm.slane %v2501, %v2504
        %v2506 = vrot.slane %v2505, 4
        %v2507 = vsel %vm1406, 0.0, %v2506
        %v2508 = vpack.c.bf16 %v1936, %v1936
        %v2509 = vpack.c.bf16 %v2048, %v2048
        %v2510 = vpack.c.bf16 %v2160, %v2160
        %v2511 = vpack.c.bf16 %v2272, %v2272
        %v2512 = vpack.c.bf16 %v2314, %v2314
        %v2513 = vpack.c.bf16 %v1938, %v1938
        %v2514 = vpack.c.bf16 %v2050, %v2050
        %v2515 = vpack.c.bf16 %v2162, %v2162
        %v2516 = vpack.c.bf16 %v2274, %v2274
        %v2517 = vpack.c.bf16 %v2332, %v2332
        %v2518 = vpack.c.bf16 %v1940, %v1940
        %v2519 = vpack.c.bf16 %v2052, %v2052
        %v2520 = vpack.c.bf16 %v2164, %v2164
        %v2521 = vpack.c.bf16 %v2276, %v2276
        %v2522 = vpack.c.bf16 %v2318, %v2318
        %v2523 = vpack.c.bf16 %v1942, %v1942
        %v2524 = vpack.c.bf16 %v2054, %v2054
        %v2525 = vpack.c.bf16 %v2166, %v2166
        %v2526 = vpack.c.bf16 %v2278, %v2278
        %v2527 = vpack.c.bf16 %v2334, %v2334
        %v2528 = vpack.c.bf16 %v1944, %v1944
        %v2529 = vpack.c.bf16 %v2056, %v2056
        %v2530 = vpack.c.bf16 %v2168, %v2168
        %v2531 = vpack.c.bf16 %v2280, %v2280
        %v2532 = vpack.c.bf16 %v2326, %v2326
        %v2533 = vpack.c.bf16 %v1946, %v1946
        %v2534 = vpack.c.bf16 %v2058, %v2058
        %v2535 = vpack.c.bf16 %v2170, %v2170
        %v2536 = vpack.c.bf16 %v2282, %v2282
        %v2537 = vpack.c.bf16 %v2336, %v2336
        %v2538 = vpack.c.bf16 %v1948, %v1948
        %v2539 = vpack.c.bf16 %v2060, %v2060
        %v2540 = vpack.c.bf16 %v2172, %v2172
        %v2541 = vpack.c.bf16 %v2284, %v2284
        %v2542 = vpack.c.bf16 %v2330, %v2330
        %v2543 = vpack.c.bf16 %v1950, %v1950
        %v2544 = vpack.c.bf16 %v2062, %v2062
        %v2545 = vpack.c.bf16 %v2174, %v2174
        %v2546 = vpack.c.bf16 %v2286, %v2286
        %v2547 = vpack.c.bf16 %v2338, %v2338
        %v2548 = vpack.c.bf16 %v2376, %v2376
        %v2549 = vpack.c.bf16 %v2416, %v2416
        %v2550 = vpack.c.bf16 %v2456, %v2456
        %v2551 = vpack.c.bf16 %v2496, %v2496
        %v2552 = vpack.c.bf16 %v2505, %v2505
        %v2553 = vpack.c.bf16 %v2378, %v2378
        %v2554 = vpack.c.bf16 %v2418, %v2418
        %v2555 = vpack.c.bf16 %v2458, %v2458
        %v2556 = vpack.c.bf16 %v2498, %v2498
        %v2557 = vpack.c.bf16 %v2507, %v2507
        %v2598 = vunpack.c.l.b16 %v2508
        %v2599 = vunpack.c.l.b16 %v2509
        %v2600 = vunpack.c.l.b16 %v2510
        %v2601 = vunpack.c.l.b16 %v2511
        %v2602 = vunpack.c.l.b16 %v2513
        %v2603 = vunpack.c.l.b16 %v2514
        %v2604 = vunpack.c.l.b16 %v2515
        %v2605 = vunpack.c.l.b16 %v2516
        %v2606 = vunpack.c.l.b16 %v2518
        %v2607 = vunpack.c.l.b16 %v2519
        %v2608 = vunpack.c.l.b16 %v2520
        %v2609 = vunpack.c.l.b16 %v2521
        %v2610 = vunpack.c.l.b16 %v2523
        %v2611 = vunpack.c.l.b16 %v2524
        %v2612 = vunpack.c.l.b16 %v2525
        %v2613 = vunpack.c.l.b16 %v2526
        %v2614 = vunpack.c.l.b16 %v2528
        %v2615 = vunpack.c.l.b16 %v2529
        %v2616 = vunpack.c.l.b16 %v2530
        %v2617 = vunpack.c.l.b16 %v2531
        %v2618 = vunpack.c.l.b16 %v2533
        %v2619 = vunpack.c.l.b16 %v2534
        %v2620 = vunpack.c.l.b16 %v2535
        %v2621 = vunpack.c.l.b16 %v2536
        %v2622 = vunpack.c.l.b16 %v2538
        %v2623 = vunpack.c.l.b16 %v2539
        %v2624 = vunpack.c.l.b16 %v2540
        %v2625 = vunpack.c.l.b16 %v2541
        %v2626 = vunpack.c.l.b16 %v2543
        %v2627 = vunpack.c.l.b16 %v2544
        %v2628 = vunpack.c.l.b16 %v2545
        %v2629 = vunpack.c.l.b16 %v2546
        %v2630 = vunpack.c.l.b16 %v2548
        %v2631 = vunpack.c.l.b16 %v2549
        %v2632 = vunpack.c.l.b16 %v2550
        %v2633 = vunpack.c.l.b16 %v2551
        %v2634 = vunpack.c.l.b16 %v2553
        %v2635 = vunpack.c.l.b16 %v2554
        %v2636 = vunpack.c.l.b16 %v2555
        %v2637 = vunpack.c.l.b16 %v2556
        %v2638 = vpack.c.b16 %v2599, %v2598
        %v2639 = vpack.c.b16 %v2601, %v2600
        %v2640 = vpack.c.b16 %v2603, %v2602
        %v2641 = vpack.c.b16 %v2605, %v2604
        %v2642 = vpack.c.b16 %v2607, %v2606
        %v2643 = vpack.c.b16 %v2609, %v2608
        %v2644 = vpack.c.b16 %v2611, %v2610
        %v2645 = vpack.c.b16 %v2613, %v2612
        %v2646 = vpack.c.b16 %v2615, %v2614
        %v2647 = vpack.c.b16 %v2617, %v2616
        %v2648 = vpack.c.b16 %v2619, %v2618
        %v2649 = vpack.c.b16 %v2621, %v2620
        %v2650 = vpack.c.b16 %v2623, %v2622
        %v2651 = vpack.c.b16 %v2625, %v2624
        %v2652 = vpack.c.b16 %v2627, %v2626
        %v2653 = vpack.c.b16 %v2629, %v2628
        %v2654 = vpack.c.b16 %v2631, %v2630
        %v2655 = vpack.c.b16 %v2633, %v2632
        %v2656 = vpack.c.b16 %v2635, %v2634
        %v2657 = vpack.c.b16 %v2637, %v2636
        %v2668 = vunpack.c.l.b16 %v2512
        %v2669 = vunpack.c.l.b16 %v2517
        %v2670 = vunpack.c.l.b16 %v2522
        %v2671 = vunpack.c.l.b16 %v2527
        %v2672 = vunpack.c.l.b16 %v2532
        %v2673 = vunpack.c.l.b16 %v2537
        %v2674 = vunpack.c.l.b16 %v2542
        %v2675 = vunpack.c.l.b16 %v2547
        %v2676 = vunpack.c.l.b16 %v2552
        %v2677 = vunpack.c.l.b16 %v2557
        %v2678 = vpack.c.b16 %v2668, %v2668
        %v2679 = vpack.c.b16 %v2669, %v2669
        %v2680 = vpack.c.b16 %v2670, %v2670
        %v2681 = vpack.c.b16 %v2671, %v2671
        %v2682 = vpack.c.b16 %v2672, %v2672
        %v2683 = vpack.c.b16 %v2673, %v2673
        %v2684 = vpack.c.b16 %v2674, %v2674
        %v2685 = vpack.c.b16 %v2675, %v2675
        %v2686 = vpack.c.b16 %v2676, %v2676
        %v2687 = vpack.c.b16 %v2677, %v2677
        %vm2688 = vsmask.f32 7424
        %v2690 = vshrl.u32 %v2638, 16
        %v2692 = vshll.u32 %v2638, 16
        %v2694 = vrot.slane %v2692, 1
        %v2695 = vor.u32 %v2690, %v2694
        %v2697 = vshll.u32 %v2639, 16
        %v2699 = vrot.slane %v2697, 1
        %v2700 = vsel %vm2688, %v2695, %v2699
        %v2701 = vshrl.u32 %v2639, 16
        %v2703 = vor.u32 %v2701, %v2699
        %v2705 = vshll.u32 %v2678, 16
        %v2707 = vrot.slane %v2705, 1
        %v2708 = vsel %vm2688, %v2703, %v2707
        %v2710 = vshrl.u32 %v2640, 16
        %v2712 = vshll.u32 %v2640, 16
        %v2714 = vrot.slane %v2712, 1
        %v2715 = vor.u32 %v2710, %v2714
        %v2717 = vshll.u32 %v2641, 16
        %v2719 = vrot.slane %v2717, 1
        %v2720 = vsel %vm2688, %v2715, %v2719
        %v2721 = vshrl.u32 %v2641, 16
        %v2723 = vor.u32 %v2721, %v2719
        %v2725 = vshll.u32 %v2679, 16
        %v2727 = vrot.slane %v2725, 1
        %v2728 = vsel %vm2688, %v2723, %v2727
        %v2730 = vshrl.u32 %v2642, 16
        %v2732 = vshll.u32 %v2642, 16
        %v2734 = vrot.slane %v2732, 1
        %v2735 = vor.u32 %v2730, %v2734
        %v2737 = vshll.u32 %v2643, 16
        %v2739 = vrot.slane %v2737, 1
        %v2740 = vsel %vm2688, %v2735, %v2739
        %v2741 = vshrl.u32 %v2643, 16
        %v2743 = vor.u32 %v2741, %v2739
        %v2745 = vshll.u32 %v2680, 16
        %v2747 = vrot.slane %v2745, 1
        %v2748 = vsel %vm2688, %v2743, %v2747
        %v2750 = vshrl.u32 %v2644, 16
        %v2752 = vshll.u32 %v2644, 16
        %v2754 = vrot.slane %v2752, 1
        %v2755 = vor.u32 %v2750, %v2754
        %v2757 = vshll.u32 %v2645, 16
        %v2759 = vrot.slane %v2757, 1
        %v2760 = vsel %vm2688, %v2755, %v2759
        %v2761 = vshrl.u32 %v2645, 16
        %v2763 = vor.u32 %v2761, %v2759
        %v2765 = vshll.u32 %v2681, 16
        %v2767 = vrot.slane %v2765, 1
        %v2768 = vsel %vm2688, %v2763, %v2767
        %v2770 = vshrl.u32 %v2646, 16
        %v2772 = vshll.u32 %v2646, 16
        %v2774 = vrot.slane %v2772, 1
        %v2775 = vor.u32 %v2770, %v2774
        %v2777 = vshll.u32 %v2647, 16
        %v2779 = vrot.slane %v2777, 1
        %v2780 = vsel %vm2688, %v2775, %v2779
        %v2781 = vshrl.u32 %v2647, 16
        %v2783 = vor.u32 %v2781, %v2779
        %v2785 = vshll.u32 %v2682, 16
        %v2787 = vrot.slane %v2785, 1
        %v2788 = vsel %vm2688, %v2783, %v2787
        %v2790 = vshrl.u32 %v2648, 16
        %v2792 = vshll.u32 %v2648, 16
        %v2794 = vrot.slane %v2792, 1
        %v2795 = vor.u32 %v2790, %v2794
        %v2797 = vshll.u32 %v2649, 16
        %v2799 = vrot.slane %v2797, 1
        %v2800 = vsel %vm2688, %v2795, %v2799
        %v2801 = vshrl.u32 %v2649, 16
        %v2803 = vor.u32 %v2801, %v2799
        %v2805 = vshll.u32 %v2683, 16
        %v2807 = vrot.slane %v2805, 1
        %v2808 = vsel %vm2688, %v2803, %v2807
        %v2810 = vshrl.u32 %v2650, 16
        %v2812 = vshll.u32 %v2650, 16
        %v2814 = vrot.slane %v2812, 1
        %v2815 = vor.u32 %v2810, %v2814
        %v2817 = vshll.u32 %v2651, 16
        %v2819 = vrot.slane %v2817, 1
        %v2820 = vsel %vm2688, %v2815, %v2819
        %v2821 = vshrl.u32 %v2651, 16
        %v2823 = vor.u32 %v2821, %v2819
        %v2825 = vshll.u32 %v2684, 16
        %v2827 = vrot.slane %v2825, 1
        %v2828 = vsel %vm2688, %v2823, %v2827
        %v2830 = vshrl.u32 %v2652, 16
        %v2832 = vshll.u32 %v2652, 16
        %v2834 = vrot.slane %v2832, 1
        %v2835 = vor.u32 %v2830, %v2834
        %v2837 = vshll.u32 %v2653, 16
        %v2839 = vrot.slane %v2837, 1
        %v2840 = vsel %vm2688, %v2835, %v2839
        %v2841 = vshrl.u32 %v2653, 16
        %v2843 = vor.u32 %v2841, %v2839
        %v2845 = vshll.u32 %v2685, 16
        %v2847 = vrot.slane %v2845, 1
        %v2848 = vsel %vm2688, %v2843, %v2847
        %v2850 = vshrl.u32 %v2654, 16
        %v2852 = vshll.u32 %v2654, 16
        %v2854 = vrot.slane %v2852, 1
        %v2855 = vor.u32 %v2850, %v2854
        %v2857 = vshll.u32 %v2655, 16
        %v2859 = vrot.slane %v2857, 1
        %v2860 = vsel %vm2688, %v2855, %v2859
        %v2861 = vshrl.u32 %v2655, 16
        %v2863 = vor.u32 %v2861, %v2859
        %v2865 = vshll.u32 %v2686, 16
        %v2867 = vrot.slane %v2865, 1
        %v2868 = vsel %vm2688, %v2863, %v2867
        %v2870 = vshrl.u32 %v2656, 16
        %v2872 = vshll.u32 %v2656, 16
        %v2874 = vrot.slane %v2872, 1
        %v2875 = vor.u32 %v2870, %v2874
        %v2877 = vshll.u32 %v2657, 16
        %v2879 = vrot.slane %v2877, 1
        %v2880 = vsel %vm2688, %v2875, %v2879
        %v2881 = vshrl.u32 %v2657, 16
        %v2883 = vor.u32 %v2881, %v2879
        %v2885 = vshll.u32 %v2687, 16
        %v2887 = vrot.slane %v2885, 1
        %v2888 = vsel %vm2688, %v2883, %v2887
        %2889 = vrot.lane.b32.xlu0 %v2700, 4
        %v2890 = vpop.permute.xlu0 %2889
        %2891 = vrot.lane.b32.xlu0 %v2708, 4
        %v2892 = vpop.permute.xlu0 %2891
        %2893 = vrot.lane.b32.xlu0 %v2720, 4
        %v2894 = vpop.permute.xlu0 %2893
        %2895 = vrot.lane.b32.xlu0 %v2728, 4
        %v2896 = vpop.permute.xlu0 %2895
        %2897 = vrot.lane.b32.xlu0 %v2740, 4
        %v2898 = vpop.permute.xlu0 %2897
        %2899 = vrot.lane.b32.xlu0 %v2748, 4
        %v2900 = vpop.permute.xlu0 %2899
        %2901 = vrot.lane.b32.xlu0 %v2760, 4
        %v2902 = vpop.permute.xlu0 %2901
        %2903 = vrot.lane.b32.xlu0 %v2768, 4
        %v2904 = vpop.permute.xlu0 %2903
        %2905 = vrot.lane.b32.xlu0 %v2780, 4
        %v2906 = vpop.permute.xlu0 %2905
        %2907 = vrot.lane.b32.xlu0 %v2788, 4
        %v2908 = vpop.permute.xlu0 %2907
        %2909 = vrot.lane.b32.xlu0 %v2800, 4
        %v2910 = vpop.permute.xlu0 %2909
        %2911 = vrot.lane.b32.xlu0 %v2808, 4
        %v2912 = vpop.permute.xlu0 %2911
        %2913 = vrot.lane.b32.xlu0 %v2820, 4
        %v2914 = vpop.permute.xlu0 %2913
        %2915 = vrot.lane.b32.xlu0 %v2828, 4
        %v2916 = vpop.permute.xlu0 %2915
        %2917 = vrot.lane.b32.xlu0 %v2840, 4
        %v2918 = vpop.permute.xlu0 %2917
        %2919 = vrot.lane.b32.xlu0 %v2848, 4
        %v2920 = vpop.permute.xlu0 %2919
        %2921 = vrot.lane.b32.xlu0 %v2860, 4
        %v2922 = vpop.permute.xlu0 %2921
        %2923 = vrot.lane.b32.xlu0 %v2868, 4
        %v2924 = vpop.permute.xlu0 %2923
        %2925 = vrot.lane.b32.xlu0 %v2880, 4
        %v2926 = vpop.permute.xlu0 %2925
        %2927 = vrot.lane.b32.xlu0 %v2888, 4
        %v2928 = vpop.permute.xlu0 %2927
        %vm2929 = vcmask 1046528
        %v2930 = vrot.slane %v2638, 1
        %v2931 = vrot.slane %v2639, 1
        %v2932 = vsel %vm2929, %v2930, %v2931
        %v2933 = vrot.slane %v2678, 1
        %v2934 = vsel %vm2929, %v2931, %v2933
        %v2935 = vrot.slane %v2640, 1
        %v2936 = vrot.slane %v2641, 1
        %v2937 = vsel %vm2929, %v2935, %v2936
        %v2938 = vrot.slane %v2679, 1
        %v2939 = vsel %vm2929, %v2936, %v2938
        %v2940 = vrot.slane %v2642, 1
        %v2941 = vrot.slane %v2643, 1
        %v2942 = vsel %vm2929, %v2940, %v2941
        %v2943 = vrot.slane %v2680, 1
        %v2944 = vsel %vm2929, %v2941, %v2943
        %v2945 = vrot.slane %v2644, 1
        %v2946 = vrot.slane %v2645, 1
        %v2947 = vsel %vm2929, %v2945, %v2946
        %v2948 = vrot.slane %v2681, 1
        %v2949 = vsel %vm2929, %v2946, %v2948
        %v2950 = vrot.slane %v2646, 1
        %v2951 = vrot.slane %v2647, 1
        %v2952 = vsel %vm2929, %v2950, %v2951
        %v2953 = vrot.slane %v2682, 1
        %v2954 = vsel %vm2929, %v2951, %v2953
        %v2955 = vrot.slane %v2648, 1
        %v2956 = vrot.slane %v2649, 1
        %v2957 = vsel %vm2929, %v2955, %v2956
        %v2958 = vrot.slane %v2683, 1
        %v2959 = vsel %vm2929, %v2956, %v2958
        %v2960 = vrot.slane %v2650, 1
        %v2961 = vrot.slane %v2651, 1
        %v2962 = vsel %vm2929, %v2960, %v2961
        %v2963 = vrot.slane %v2684, 1
        %v2964 = vsel %vm2929, %v2961, %v2963
        %v2965 = vrot.slane %v2652, 1
        %v2966 = vrot.slane %v2653, 1
        %v2967 = vsel %vm2929, %v2965, %v2966
        %v2968 = vrot.slane %v2685, 1
        %v2969 = vsel %vm2929, %v2966, %v2968
        %v2970 = vrot.slane %v2654, 1
        %v2971 = vrot.slane %v2655, 1
        %v2972 = vsel %vm2929, %v2970, %v2971
        %v2973 = vrot.slane %v2686, 1
        %v2974 = vsel %vm2929, %v2971, %v2973
        %v2975 = vrot.slane %v2656, 1
        %v2976 = vrot.slane %v2657, 1
        %v2977 = vsel %vm2929, %v2975, %v2976
        %v2978 = vrot.slane %v2687, 1
        %v2979 = vsel %vm2929, %v2976, %v2978
        %2980 = vrot.lane.b32.xlu0 %v2932, 8
        %v2981 = vpop.permute.xlu0 %2980
        %2982 = vrot.lane.b32.xlu0 %v2934, 8
        %v2983 = vpop.permute.xlu0 %2982
        %2984 = vrot.lane.b32.xlu0 %v2937, 8
        %v2985 = vpop.permute.xlu0 %2984
        %2986 = vrot.lane.b32.xlu0 %v2939, 8
        %v2987 = vpop.permute.xlu0 %2986
        %2988 = vrot.lane.b32.xlu0 %v2942, 8
        %v2989 = vpop.permute.xlu0 %2988
        %2990 = vrot.lane.b32.xlu0 %v2944, 8
        %v2991 = vpop.permute.xlu0 %2990
        %2992 = vrot.lane.b32.xlu0 %v2947, 8
        %v2993 = vpop.permute.xlu0 %2992
        %2994 = vrot.lane.b32.xlu0 %v2949, 8
        %v2995 = vpop.permute.xlu0 %2994
        %2996 = vrot.lane.b32.xlu0 %v2952, 8
        %v2997 = vpop.permute.xlu0 %2996
        %2998 = vrot.lane.b32.xlu0 %v2954, 8
        %v2999 = vpop.permute.xlu0 %2998
        %3000 = vrot.lane.b32.xlu0 %v2957, 8
        %v3001 = vpop.permute.xlu0 %3000
        %3002 = vrot.lane.b32.xlu0 %v2959, 8
        %v3003 = vpop.permute.xlu0 %3002
        %3004 = vrot.lane.b32.xlu0 %v2962, 8
        %v3005 = vpop.permute.xlu0 %3004
        %3006 = vrot.lane.b32.xlu0 %v2964, 8
        %v3007 = vpop.permute.xlu0 %3006
        %3008 = vrot.lane.b32.xlu0 %v2967, 8
        %v3009 = vpop.permute.xlu0 %3008
        %3010 = vrot.lane.b32.xlu0 %v2969, 8
        %v3011 = vpop.permute.xlu0 %3010
        %3012 = vrot.lane.b32.xlu0 %v2972, 8
        %v3013 = vpop.permute.xlu0 %3012
        %3014 = vrot.lane.b32.xlu0 %v2974, 8
        %v3015 = vpop.permute.xlu0 %3014
        %3016 = vrot.lane.b32.xlu0 %v2977, 8
        %v3017 = vpop.permute.xlu0 %3016
        %3018 = vrot.lane.b32.xlu0 %v2979, 8
        %v3019 = vpop.permute.xlu0 %3018
        %v3021 = vsel %vm1307, %v2638, %v2890
        %v3023 = vsel %vm1307, %v2639, %v2892
        %v3025 = vsel %vm1307, %v2640, %v2894
        %v3027 = vsel %vm1307, %v2641, %v2896
        %v3029 = vsel %vm1307, %v2642, %v2898
        %v3031 = vsel %vm1307, %v2643, %v2900
        %v3033 = vsel %vm1307, %v2644, %v2902
        %v3035 = vsel %vm1307, %v2645, %v2904
        %v3037 = vsel %vm1307, %v2646, %v2906
        %v3039 = vsel %vm1307, %v2647, %v2908
        %v3041 = vsel %vm1307, %v2648, %v2910
        %v3043 = vsel %vm1307, %v2649, %v2912
        %v3045 = vsel %vm1307, %v2650, %v2914
        %v3047 = vsel %vm1307, %v2651, %v2916
        %v3049 = vsel %vm1307, %v2652, %v2918
        %v3051 = vsel %vm1307, %v2653, %v2920
        %v3053 = vsel %vm1307, %v2654, %v2922
        %v3055 = vsel %vm1307, %v2655, %v2924
        %v3057 = vsel %vm1307, %v2656, %v2926
        %v3059 = vsel %vm1307, %v2657, %v2928
        %v3061 = vsel %vm1311, %v3021, %v2981
        %v3063 = vsel %vm1311, %v3023, %v2983
        %v3065 = vsel %vm1311, %v3025, %v2985
        %v3067 = vsel %vm1311, %v3027, %v2987
        %v3069 = vsel %vm1311, %v3029, %v2989
        %v3071 = vsel %vm1311, %v3031, %v2991
        %v3073 = vsel %vm1311, %v3033, %v2993
        %v3075 = vsel %vm1311, %v3035, %v2995
        %v3077 = vsel %vm1311, %v3037, %v2997
        %v3079 = vsel %vm1311, %v3039, %v2999
        %v3081 = vsel %vm1311, %v3041, %v3001
        %v3083 = vsel %vm1311, %v3043, %v3003
        %v3085 = vsel %vm1311, %v3045, %v3005
        %v3087 = vsel %vm1311, %v3047, %v3007
        %v3089 = vsel %vm1311, %v3049, %v3009
        %v3091 = vsel %vm1311, %v3051, %v3011
        %v3093 = vsel %vm1311, %v3053, %v3013
        %v3095 = vsel %vm1311, %v3055, %v3015
        %v3097 = vsel %vm1311, %v3057, %v3017
        %v3099 = vsel %vm1311, %v3059, %v3019
        %v3100 = vld [vmem:[%s3] sm:$0xf]
        %v3101 = vld [vmem:[%s3 + $0x4] sm:$0x3]
        %s3102 = scalar_lea.vmem %s3, 8
        %v3103 = vld [vmem:[%s3102] sm:$0xf]
        %v3104 = vld [vmem:[%s3102 + $0x4] sm:$0x3]
        %v3107 = vunpack.c.l.b16 %v3103
        %v3108 = vunpack.c.l.b16 %v3104
        %v3109 = vpack.c.b16 %v3108, %v3107
        %v3110 = vsel %vm1314, %v3065, 0
        %v3112 = vsel %vm1314, %v3067, 0
        %v3114 = vsel %vm1314, %v3069, 0
        %v3116 = vsel %vm1314, %v3071, 0
        %v3118 = vsel %vm1314, %v3073, 0
        %v3120 = vsel %vm1314, %v3075, 0
        %v3122 = vsel %vm1314, %v3077, 0
        %v3124 = vsel %vm1314, %v3079, 0
        %v3126 = vsel %vm1314, %v3081, 0
        %v3128 = vsel %vm1314, %v3083, 0
        %v3130 = vsel %vm1314, %v3085, 0
        %v3132 = vsel %vm1314, %v3087, 0
        %v3134 = vsel %vm1314, %v3089, 0
        %v3136 = vsel %vm1314, %v3091, 0
        %v3138 = vsel %vm1314, %v3093, 0
        %v3140 = vsel %vm1314, %v3095, 0
        %vm3142 = vcmask 1045504
        %v3144 = vsel %vm3142, %v3109, 0
        %3146 = vmatpush.bf16.msra.mxu0 0
        %3147 = vmatpush.bf16.msra.mxu0 0
        %3148 = vmatpush.bf16.msra.mxu0 0
        %3149 = vmatpush.bf16.msra.mxu0 0
        %3150 = vmatpush.bf16.msra.mxu0 0
        %3151 = vmatpush.bf16.msra.mxu0 0
        %3152 = vmatpush.bf16.msra.mxu0 0
        %3153 = vmatpush.bf16.msra.mxu0 %v3144
        %3154 = vmatmul.bf16.gmra.mxu0 %v3110
        %v3155 = vpop.f32.mrf.mxu0
        %v3156 = vadd.f32 0.0, %v3155
        %v3157 = vpop.f32.mrf.mxu0
        %v3158 = vadd.f32 0.0, %v3157
        %3159 = vmatmul.bf16.gmra.mxu0 %v3112
        %v3160 = vpop.f32.mrf.mxu0
        %v3161 = vadd.f32 0.0, %v3160
        %v3162 = vpop.f32.mrf.mxu0
        %v3163 = vadd.f32 0.0, %v3162
        %3164 = vmatmul.bf16.gmra.mxu0 %v3114
        %v3165 = vpop.f32.mrf.mxu0
        %v3166 = vadd.f32 0.0, %v3165
        %v3167 = vpop.f32.mrf.mxu0
        %v3168 = vadd.f32 0.0, %v3167
        %3169 = vmatmul.bf16.gmra.mxu0 %v3116
        %v3170 = vpop.f32.mrf.mxu0
        %v3171 = vadd.f32 0.0, %v3170
        %v3172 = vpop.f32.mrf.mxu0
        %v3173 = vadd.f32 0.0, %v3172
        %3174 = vmatmul.bf16.gmra.mxu0 %v3118
        %v3175 = vpop.f32.mrf.mxu0
        %v3176 = vadd.f32 0.0, %v3175
        %v3177 = vpop.f32.mrf.mxu0
        %v3178 = vadd.f32 0.0, %v3177
        %3179 = vmatmul.bf16.gmra.mxu0 %v3120
        %v3180 = vpop.f32.mrf.mxu0
        %v3181 = vadd.f32 0.0, %v3180
        %v3182 = vpop.f32.mrf.mxu0
        %v3183 = vadd.f32 0.0, %v3182
        %3184 = vmatmul.bf16.gmra.mxu0 %v3122
        %v3185 = vpop.f32.mrf.mxu0
        %v3186 = vadd.f32 0.0, %v3185
        %v3187 = vpop.f32.mrf.mxu0
        %v3188 = vadd.f32 0.0, %v3187
        %3189 = vmatmul.bf16.gmra.mxu0 %v3124
        %v3190 = vpop.f32.mrf.mxu0
        %v3191 = vadd.f32 0.0, %v3190
        %v3192 = vpop.f32.mrf.mxu0
        %v3193 = vadd.f32 0.0, %v3192
        %3194 = vmatmul.bf16.gmra.mxu0 %v3126
        %v3195 = vpop.f32.mrf.mxu0
        %v3196 = vadd.f32 0.0, %v3195
        %v3197 = vpop.f32.mrf.mxu0
        %v3198 = vadd.f32 0.0, %v3197
        %3199 = vmatmul.bf16.gmra.mxu0 %v3128
        %v3200 = vpop.f32.mrf.mxu0
        %v3201 = vadd.f32 0.0, %v3200
        %v3202 = vpop.f32.mrf.mxu0
        %v3203 = vadd.f32 0.0, %v3202
        %3204 = vmatmul.bf16.gmra.mxu0 %v3130
        %v3205 = vpop.f32.mrf.mxu0
        %v3206 = vadd.f32 0.0, %v3205
        %v3207 = vpop.f32.mrf.mxu0
        %v3208 = vadd.f32 0.0, %v3207
        %3209 = vmatmul.bf16.gmra.mxu0 %v3132
        %v3210 = vpop.f32.mrf.mxu0
        %v3211 = vadd.f32 0.0, %v3210
        %v3212 = vpop.f32.mrf.mxu0
        %v3213 = vadd.f32 0.0, %v3212
        %3214 = vmatmul.bf16.gmra.mxu0 %v3134
        %v3215 = vpop.f32.mrf.mxu0
        %v3216 = vadd.f32 0.0, %v3215
        %v3217 = vpop.f32.mrf.mxu0
        %v3218 = vadd.f32 0.0, %v3217
        %3219 = vmatmul.bf16.gmra.mxu0 %v3136
        %v3220 = vpop.f32.mrf.mxu0
        %v3221 = vadd.f32 0.0, %v3220
        %v3222 = vpop.f32.mrf.mxu0
        %v3223 = vadd.f32 0.0, %v3222
        %3224 = vmatmul.bf16.gmra.mxu0 %v3138
        %v3225 = vpop.f32.mrf.mxu0
        %v3226 = vadd.f32 0.0, %v3225
        %v3227 = vpop.f32.mrf.mxu0
        %v3228 = vadd.f32 0.0, %v3227
        %3229 = vmatmul.bf16.gmra.mxu0 %v3140
        %v3230 = vpop.f32.mrf.mxu0
        %v3231 = vadd.f32 0.0, %v3230
        %v3232 = vpop.f32.mrf.mxu0
        %v3233 = vadd.f32 0.0, %v3232
        %3234 = vdwg.mxu0
        %v3237 = vunpack.c.l.b16 %v3100
        %v3238 = vunpack.c.l.b16 %v3101
        %v3239 = vpack.c.b16 %v3238, %v3237
        %v3240 = vsel %vm1314, %v3061, 0
        %v3242 = vsel %vm1314, %v3063, 0
        %v3245 = vsel %vm3142, %v3239, 0
        %3247 = vmatpush.bf16.msra.mxu0 0
        %3248 = vmatpush.bf16.msra.mxu0 0
        %3249 = vmatpush.bf16.msra.mxu0 0
        %3250 = vmatpush.bf16.msra.mxu0 0
        %3251 = vmatpush.bf16.msra.mxu0 0
        %3252 = vmatpush.bf16.msra.mxu0 0
        %3253 = vmatpush.bf16.msra.mxu0 0
        %3254 = vmatpush.bf16.msra.mxu0 %v3245
        %3255 = vmatmul.bf16.gmra.mxu0 %v3240
        %v3256 = vpop.f32.mrf.mxu0
        %v3257 = vadd.f32 %v3156, %v3256
        %v3258 = vpop.f32.mrf.mxu0
        %v3259 = vadd.f32 %v3158, %v3258
        %3260 = vmatmul.bf16.gmra.mxu0 %v3242
        %v3261 = vpop.f32.mrf.mxu0
        %v3262 = vadd.f32 %v3161, %v3261
        %v3263 = vpop.f32.mrf.mxu0
        %v3264 = vadd.f32 %v3163, %v3263
        %3265 = vmatmul.bf16.gmra.mxu0 %v3110
        %v3266 = vpop.f32.mrf.mxu0
        %v3267 = vadd.f32 %v3166, %v3266
        %v3268 = vpop.f32.mrf.mxu0
        %v3269 = vadd.f32 %v3168, %v3268
        %3270 = vmatmul.bf16.gmra.mxu0 %v3112
        %v3271 = vpop.f32.mrf.mxu0
        %v3272 = vadd.f32 %v3171, %v3271
        %v3273 = vpop.f32.mrf.mxu0
        %v3274 = vadd.f32 %v3173, %v3273
        %3275 = vmatmul.bf16.gmra.mxu0 %v3114
        %v3276 = vpop.f32.mrf.mxu0
        %v3277 = vadd.f32 %v3176, %v3276
        %v3278 = vpop.f32.mrf.mxu0
        %v3279 = vadd.f32 %v3178, %v3278
        %3280 = vmatmul.bf16.gmra.mxu0 %v3116
        %v3281 = vpop.f32.mrf.mxu0
        %v3282 = vadd.f32 %v3181, %v3281
        %v3283 = vpop.f32.mrf.mxu0
        %v3284 = vadd.f32 %v3183, %v3283
        %3285 = vmatmul.bf16.gmra.mxu0 %v3118
        %v3286 = vpop.f32.mrf.mxu0
        %v3287 = vadd.f32 %v3186, %v3286
        %v3288 = vpop.f32.mrf.mxu0
        %v3289 = vadd.f32 %v3188, %v3288
        %3290 = vmatmul.bf16.gmra.mxu0 %v3120
        %v3291 = vpop.f32.mrf.mxu0
        %v3292 = vadd.f32 %v3191, %v3291
        %v3293 = vpop.f32.mrf.mxu0
        %v3294 = vadd.f32 %v3193, %v3293
        %3295 = vmatmul.bf16.gmra.mxu0 %v3122
        %v3296 = vpop.f32.mrf.mxu0
        %v3297 = vadd.f32 %v3196, %v3296
        %v3298 = vpop.f32.mrf.mxu0
        %v3299 = vadd.f32 %v3198, %v3298
        %3300 = vmatmul.bf16.gmra.mxu0 %v3124
        %v3301 = vpop.f32.mrf.mxu0
        %v3302 = vadd.f32 %v3201, %v3301
        %v3303 = vpop.f32.mrf.mxu0
        %v3304 = vadd.f32 %v3203, %v3303
        %3305 = vmatmul.bf16.gmra.mxu0 %v3126
        %v3306 = vpop.f32.mrf.mxu0
        %v3307 = vadd.f32 %v3206, %v3306
        %v3308 = vpop.f32.mrf.mxu0
        %v3309 = vadd.f32 %v3208, %v3308
        %3310 = vmatmul.bf16.gmra.mxu0 %v3128
        %v3311 = vpop.f32.mrf.mxu0
        %v3312 = vadd.f32 %v3211, %v3311
        %v3313 = vpop.f32.mrf.mxu0
        %v3314 = vadd.f32 %v3213, %v3313
        %3315 = vmatmul.bf16.gmra.mxu0 %v3130
        %v3316 = vpop.f32.mrf.mxu0
        %v3317 = vadd.f32 %v3216, %v3316
        %v3318 = vpop.f32.mrf.mxu0
        %v3319 = vadd.f32 %v3218, %v3318
        %3320 = vmatmul.bf16.gmra.mxu0 %v3132
        %v3321 = vpop.f32.mrf.mxu0
        %v3322 = vadd.f32 %v3221, %v3321
        %v3323 = vpop.f32.mrf.mxu0
        %v3324 = vadd.f32 %v3223, %v3323
        %3325 = vmatmul.bf16.gmra.mxu0 %v3134
        %v3326 = vpop.f32.mrf.mxu0
        %v3327 = vadd.f32 %v3226, %v3326
        %v3328 = vpop.f32.mrf.mxu0
        %v3329 = vadd.f32 %v3228, %v3328
        %3330 = vmatmul.bf16.gmra.mxu0 %v3136
        %v3331 = vpop.f32.mrf.mxu0
        %v3332 = vadd.f32 %v3231, %v3331
        %v3333 = vpop.f32.mrf.mxu0
        %v3334 = vadd.f32 %v3233, %v3333
        %3335 = vdwg.mxu0
        %s3336 = scalar_lea.vmem %s3, 16
        %v3337 = vld [vmem:[%s3336] sm:$0xf]
        %v3338 = vld [vmem:[%s3336 + $0x4] sm:$0x3]
        %v3341 = vunpack.c.l.b16 %v3337
        %v3342 = vunpack.c.l.b16 %v3338
        %v3343 = vpack.c.b16 %v3342, %v3341
        %v3344 = vsel %vm1314, %v3097, 0
        %v3346 = vsel %vm1314, %v3099, 0
        %v3349 = vsel %vm3142, %v3343, 0
        %3351 = vmatpush.bf16.msra.mxu0 0
        %3352 = vmatpush.bf16.msra.mxu0 0
        %3353 = vmatpush.bf16.msra.mxu0 0
        %3354 = vmatpush.bf16.msra.mxu0 0
        %3355 = vmatpush.bf16.msra.mxu0 0
        %3356 = vmatpush.bf16.msra.mxu0 0
        %3357 = vmatpush.bf16.msra.mxu0 0
        %3358 = vmatpush.bf16.msra.mxu0 %v3349
        %3359 = vmatmul.bf16.gmra.mxu0 %v3114
        %v3360 = vpop.f32.mrf.mxu0
        %v3361 = vadd.f32 0.0, %v3360
        %v3362 = vpop.f32.mrf.mxu0
        %v3363 = vadd.f32 0.0, %v3362
        %3364 = vmatmul.bf16.gmra.mxu0 %v3116
        %v3365 = vpop.f32.mrf.mxu0
        %v3366 = vadd.f32 0.0, %v3365
        %v3367 = vpop.f32.mrf.mxu0
        %v3368 = vadd.f32 0.0, %v3367
        %3369 = vmatmul.bf16.gmra.mxu0 %v3118
        %v3370 = vpop.f32.mrf.mxu0
        %v3371 = vadd.f32 0.0, %v3370
        %v3372 = vpop.f32.mrf.mxu0
        %v3373 = vadd.f32 0.0, %v3372
        %3374 = vmatmul.bf16.gmra.mxu0 %v3120
        %v3375 = vpop.f32.mrf.mxu0
        %v3376 = vadd.f32 0.0, %v3375
        %v3377 = vpop.f32.mrf.mxu0
        %v3378 = vadd.f32 0.0, %v3377
        %3379 = vmatmul.bf16.gmra.mxu0 %v3122
        %v3380 = vpop.f32.mrf.mxu0
        %v3381 = vadd.f32 0.0, %v3380
        %v3382 = vpop.f32.mrf.mxu0
        %v3383 = vadd.f32 0.0, %v3382
        %3384 = vmatmul.bf16.gmra.mxu0 %v3124
        %v3385 = vpop.f32.mrf.mxu0
        %v3386 = vadd.f32 0.0, %v3385
        %v3387 = vpop.f32.mrf.mxu0
        %v3388 = vadd.f32 0.0, %v3387
        %3389 = vmatmul.bf16.gmra.mxu0 %v3126
        %v3390 = vpop.f32.mrf.mxu0
        %v3391 = vadd.f32 0.0, %v3390
        %v3392 = vpop.f32.mrf.mxu0
        %v3393 = vadd.f32 0.0, %v3392
        %3394 = vmatmul.bf16.gmra.mxu0 %v3128
        %v3395 = vpop.f32.mrf.mxu0
        %v3396 = vadd.f32 0.0, %v3395
        %v3397 = vpop.f32.mrf.mxu0
        %v3398 = vadd.f32 0.0, %v3397
        %3399 = vmatmul.bf16.gmra.mxu0 %v3130
        %v3400 = vpop.f32.mrf.mxu0
        %v3401 = vadd.f32 0.0, %v3400
        %v3402 = vpop.f32.mrf.mxu0
        %v3403 = vadd.f32 0.0, %v3402
        %3404 = vmatmul.bf16.gmra.mxu0 %v3132
        %v3405 = vpop.f32.mrf.mxu0
        %v3406 = vadd.f32 0.0, %v3405
        %v3407 = vpop.f32.mrf.mxu0
        %v3408 = vadd.f32 0.0, %v3407
        %3409 = vmatmul.bf16.gmra.mxu0 %v3134
        %v3410 = vpop.f32.mrf.mxu0
        %v3411 = vadd.f32 0.0, %v3410
        %v3412 = vpop.f32.mrf.mxu0
        %v3413 = vadd.f32 0.0, %v3412
        %3414 = vmatmul.bf16.gmra.mxu0 %v3136
        %v3415 = vpop.f32.mrf.mxu0
        %v3416 = vadd.f32 0.0, %v3415
        %v3417 = vpop.f32.mrf.mxu0
        %v3418 = vadd.f32 0.0, %v3417
        %3419 = vmatmul.bf16.gmra.mxu0 %v3138
        %v3420 = vpop.f32.mrf.mxu0
        %v3421 = vadd.f32 0.0, %v3420
        %v3422 = vpop.f32.mrf.mxu0
        %v3423 = vadd.f32 0.0, %v3422
        %3424 = vmatmul.bf16.gmra.mxu0 %v3140
        %v3425 = vpop.f32.mrf.mxu0
        %v3426 = vadd.f32 0.0, %v3425
        %v3427 = vpop.f32.mrf.mxu0
        %v3428 = vadd.f32 0.0, %v3427
        %3429 = vmatmul.bf16.gmra.mxu0 %v3344
        %v3430 = vpop.f32.mrf.mxu0
        %v3431 = vadd.f32 0.0, %v3430
        %v3432 = vpop.f32.mrf.mxu0
        %v3433 = vadd.f32 0.0, %v3432
        %3434 = vmatmul.bf16.gmra.mxu0 %v3346
        %v3435 = vpop.f32.mrf.mxu0
        %v3436 = vadd.f32 0.0, %v3435
        %v3437 = vpop.f32.mrf.mxu0
        %v3438 = vadd.f32 0.0, %v3437
        %3439 = vdwg.mxu0
        %v3440 = vadd.f32 %v3257, %v3361
        %v3441 = vadd.f32 %v3259, %v3363
        %v3442 = vadd.f32 %v3262, %v3366
        %v3443 = vadd.f32 %v3264, %v3368
        %v3444 = vadd.f32 %v3267, %v3371
        %v3445 = vadd.f32 %v3269, %v3373
        %v3446 = vadd.f32 %v3272, %v3376
        %v3447 = vadd.f32 %v3274, %v3378
        %v3448 = vadd.f32 %v3277, %v3381
        %v3449 = vadd.f32 %v3279, %v3383
        %v3450 = vadd.f32 %v3282, %v3386
        %v3451 = vadd.f32 %v3284, %v3388
        %v3452 = vadd.f32 %v3287, %v3391
        %v3453 = vadd.f32 %v3289, %v3393
        %v3454 = vadd.f32 %v3292, %v3396
        %v3455 = vadd.f32 %v3294, %v3398
        %v3456 = vadd.f32 %v3297, %v3401
        %v3457 = vadd.f32 %v3299, %v3403
        %v3458 = vadd.f32 %v3302, %v3406
        %v3459 = vadd.f32 %v3304, %v3408
        %v3460 = vadd.f32 %v3307, %v3411
        %v3461 = vadd.f32 %v3309, %v3413
        %v3462 = vadd.f32 %v3312, %v3416
        %v3463 = vadd.f32 %v3314, %v3418
        %v3464 = vadd.f32 %v3317, %v3421
        %v3465 = vadd.f32 %v3319, %v3423
        %v3466 = vadd.f32 %v3322, %v3426
        %v3467 = vadd.f32 %v3324, %v3428
        %v3468 = vadd.f32 %v3327, %v3431
        %v3469 = vadd.f32 %v3329, %v3433
        %v3470 = vadd.f32 %v3332, %v3436
        %v3471 = vadd.f32 %v3334, %v3438
        %s3472 = smul.u32 %s333, 4
        %s3473 = smul.addr %s3472, 4
        %s3474 = scalar_lea.vmem %s330, %s3473
        %v3475 = vld [vmem:[%s3474] sm:$0xf]
        %v3476 = vld [vmem:[%s3474 + $0x4] sm:$0xf]
        %v3477 = vld [vmem:[%s3474 + $0x8] sm:$0xf]
        %v3478 = vld [vmem:[%s3474 + $0xc] sm:$0xf]
        %v3479 = vld [vmem:[%s3474 + $0x10] sm:$0xf]
        %v3480 = vld [vmem:[%s3474 + $0x14] sm:$0xf]
        %v3481 = vld [vmem:[%s3474 + $0x18] sm:$0xf]
        %v3482 = vld [vmem:[%s3474 + $0x1c] sm:$0xf]
        %v3483 = vld [vmem:[%s3474 + $0x20] sm:$0xf]
        %v3484 = vld [vmem:[%s3474 + $0x24] sm:$0xf]
        %v3485 = vld [vmem:[%s3474 + $0x28] sm:$0xf]
        %v3486 = vld [vmem:[%s3474 + $0x2c] sm:$0xf]
        %v3487 = vld [vmem:[%s3474 + $0x30] sm:$0xf]
        %v3488 = vld [vmem:[%s3474 + $0x34] sm:$0xf]
        %v3489 = vld [vmem:[%s3474 + $0x38] sm:$0xf]
        %v3490 = vld [vmem:[%s3474 + $0x3c] sm:$0xf]
        %v3491 = vld [vmem:[%s3474 + $0x40] sm:$0xf]
        %v3492 = vld [vmem:[%s3474 + $0x44] sm:$0xf]
        %v3493 = vld [vmem:[%s3474 + $0x48] sm:$0xf]
        %v3494 = vld [vmem:[%s3474 + $0x4c] sm:$0xf]
        %v3495 = vld [vmem:[%s3474 + $0x50] sm:$0xf]
        %v3496 = vld [vmem:[%s3474 + $0x54] sm:$0xf]
        %v3497 = vld [vmem:[%s3474 + $0x58] sm:$0xf]
        %v3498 = vld [vmem:[%s3474 + $0x5c] sm:$0xf]
        %v3499 = vld [vmem:[%s3474 + $0x60] sm:$0xf]
        %v3500 = vld [vmem:[%s3474 + $0x64] sm:$0xf]
        %v3501 = vld [vmem:[%s3474 + $0x68] sm:$0xf]
        %v3502 = vld [vmem:[%s3474 + $0x6c] sm:$0xf]
        %v3503 = vld [vmem:[%s3474 + $0x70] sm:$0xf]
        %v3504 = vld [vmem:[%s3474 + $0x74] sm:$0xf]
        %v3505 = vld [vmem:[%s3474 + $0x78] sm:$0xf]
        %v3506 = vld [vmem:[%s3474 + $0x7c] sm:$0xf]
        %s3507 = ssub.s32 %s333, 1
        %p3508 = scmp.gt.s32.totalorder %s3507, 0
        %s3509 = scalar_select %p3508, %s3507, 0
        %s3510 = smul.u32 %s3509, 4
        %s3511 = smul.addr %s3510, 4
        %s3512 = scalar_lea.vmem %s330, %s3511
        %v3513 = vld [vmem:[%s3512] sm:$0xf]
        %v3514 = vld [vmem:[%s3512 + $0x4] sm:$0xf]
        %v3515 = vld [vmem:[%s3512 + $0x8] sm:$0xf]
        %v3516 = vld [vmem:[%s3512 + $0xc] sm:$0xf]
        %p3517 = scmp.gt.s32.totalorder %s333, 0
        %s3518 = scalar_select %p3517, 1, 0
        %v3519 = vstv %s3518
        %vm3520 = vcmp.eq.s32.totalorder %v3519, 1
        %v3521 = vsel %vm3520, %v3513, 0
        %v3522 = vsel %vm3520, %v3514, 0
        %v3523 = vsel %vm3520, %v3515, 0
        %v3524 = vsel %vm3520, %v3516, 0
        %s3525 = sadd.s32 %s333, 8
        %p3526 = scmp.lt.s32.totalorder %s3525, 31
        %s3527 = scalar_select %p3526, %s3525, 31
        %s3528 = smul.u32 %s3527, 4
        %s3529 = smul.addr %s3528, 4
        %s3530 = scalar_lea.vmem %s330, %s3529
        %v3531 = vld [vmem:[%s3530] sm:$0xf]
        %v3532 = vld [vmem:[%s3530 + $0x4] sm:$0xf]
        %v3533 = vld [vmem:[%s3530 + $0x8] sm:$0xf]
        %v3534 = vld [vmem:[%s3530 + $0xc] sm:$0xf]
        %p3535 = scmp.lt.s32.totalorder %s3525, 32
        %s3536 = scalar_select %p3535, 1, 0
        %v3537 = vstv %s3536
        %vm3538 = vcmp.eq.s32.totalorder %v3537, 1
        %v3539 = vsel %vm3538, %v3531, 0
        %v3540 = vsel %vm3538, %v3532, 0
        %v3541 = vsel %vm3538, %v3533, 0
        %v3542 = vsel %vm3538, %v3534, 0
        %v3583 = vunpack.c.l.b16 %v3521
        %v3584 = vunpack.c.l.b16 %v3522
        %v3585 = vunpack.c.l.b16 %v3523
        %v3586 = vunpack.c.l.b16 %v3524
        %v3587 = vunpack.c.l.b16 %v3475
        %v3588 = vunpack.c.l.b16 %v3476
        %v3589 = vunpack.c.l.b16 %v3477
        %v3590 = vunpack.c.l.b16 %v3478
        %v3591 = vunpack.c.l.b16 %v3479
        %v3592 = vunpack.c.l.b16 %v3480
        %v3593 = vunpack.c.l.b16 %v3481
        %v3594 = vunpack.c.l.b16 %v3482
        %v3595 = vunpack.c.l.b16 %v3483
        %v3596 = vunpack.c.l.b16 %v3484
        %v3597 = vunpack.c.l.b16 %v3485
        %v3598 = vunpack.c.l.b16 %v3486
        %v3599 = vunpack.c.l.b16 %v3487
        %v3600 = vunpack.c.l.b16 %v3488
        %v3601 = vunpack.c.l.b16 %v3489
        %v3602 = vunpack.c.l.b16 %v3490
        %v3603 = vunpack.c.l.b16 %v3491
        %v3604 = vunpack.c.l.b16 %v3492
        %v3605 = vunpack.c.l.b16 %v3493
        %v3606 = vunpack.c.l.b16 %v3494
        %v3607 = vunpack.c.l.b16 %v3495
        %v3608 = vunpack.c.l.b16 %v3496
        %v3609 = vunpack.c.l.b16 %v3497
        %v3610 = vunpack.c.l.b16 %v3498
        %v3611 = vunpack.c.l.b16 %v3499
        %v3612 = vunpack.c.l.b16 %v3500
        %v3613 = vunpack.c.l.b16 %v3501
        %v3614 = vunpack.c.l.b16 %v3502
        %v3615 = vunpack.c.l.b16 %v3503
        %v3616 = vunpack.c.l.b16 %v3504
        %v3617 = vunpack.c.l.b16 %v3505
        %v3618 = vunpack.c.l.b16 %v3506
        %v3619 = vunpack.c.l.b16 %v3539
        %v3620 = vunpack.c.l.b16 %v3540
        %v3621 = vunpack.c.l.b16 %v3541
        %v3622 = vunpack.c.l.b16 %v3542
        %v3623 = vpack.c.b16 %v3584, %v3583
        %v3624 = vpack.c.b16 %v3586, %v3585
        %v3625 = vpack.c.b16 %v3588, %v3587
        %v3626 = vpack.c.b16 %v3590, %v3589
        %v3627 = vpack.c.b16 %v3592, %v3591
        %v3628 = vpack.c.b16 %v3594, %v3593
        %v3629 = vpack.c.b16 %v3596, %v3595
        %v3630 = vpack.c.b16 %v3598, %v3597
        %v3631 = vpack.c.b16 %v3600, %v3599
        %v3632 = vpack.c.b16 %v3602, %v3601
        %v3633 = vpack.c.b16 %v3604, %v3603
        %v3634 = vpack.c.b16 %v3606, %v3605
        %v3635 = vpack.c.b16 %v3608, %v3607
        %v3636 = vpack.c.b16 %v3610, %v3609
        %v3637 = vpack.c.b16 %v3612, %v3611
        %v3638 = vpack.c.b16 %v3614, %v3613
        %v3639 = vpack.c.b16 %v3616, %v3615
        %v3640 = vpack.c.b16 %v3618, %v3617
        %v3641 = vpack.c.b16 %v3620, %v3619
        %v3642 = vpack.c.b16 %v3622, %v3621
        %vm3643 = vsmask.f32 256
        %v3645 = vshrl.u32 %v3623, 16
        %v3647 = vrot.slane %v3645, 7
        %v3648 = vshll.u32 %v3623, 16
        %v3650 = vor.u32 %v3647, %v3648
        %v3652 = vshrl.u32 %v3624, 16
        %v3654 = vrot.slane %v3652, 7
        %v3655 = vshll.u32 %v3624, 16
        %v3657 = vor.u32 %v3654, %v3655
        %v3658 = vsel %vm3643, %v3647, %v3657
        %v3660 = vshrl.u32 %v3625, 16
        %v3662 = vrot.slane %v3660, 7
        %v3663 = vshll.u32 %v3625, 16
        %v3665 = vor.u32 %v3662, %v3663
        %v3667 = vshrl.u32 %v3626, 16
        %v3669 = vrot.slane %v3667, 7
        %v3670 = vshll.u32 %v3626, 16
        %v3672 = vor.u32 %v3669, %v3670
        %v3673 = vsel %vm3643, %v3662, %v3672
        %v3675 = vshrl.u32 %v3627, 16
        %v3677 = vrot.slane %v3675, 7
        %v3678 = vshll.u32 %v3627, 16
        %v3680 = vor.u32 %v3677, %v3678
        %v3682 = vshrl.u32 %v3628, 16
        %v3684 = vrot.slane %v3682, 7
        %v3685 = vshll.u32 %v3628, 16
        %v3687 = vor.u32 %v3684, %v3685
        %v3688 = vsel %vm3643, %v3677, %v3687
        %v3690 = vshrl.u32 %v3629, 16
        %v3692 = vrot.slane %v3690, 7
        %v3693 = vshll.u32 %v3629, 16
        %v3695 = vor.u32 %v3692, %v3693
        %v3697 = vshrl.u32 %v3630, 16
        %v3699 = vrot.slane %v3697, 7
        %v3700 = vshll.u32 %v3630, 16
        %v3702 = vor.u32 %v3699, %v3700
        %v3703 = vsel %vm3643, %v3692, %v3702
        %v3705 = vshrl.u32 %v3631, 16
        %v3707 = vrot.slane %v3705, 7
        %v3708 = vshll.u32 %v3631, 16
        %v3710 = vor.u32 %v3707, %v3708
        %v3712 = vshrl.u32 %v3632, 16
        %v3714 = vrot.slane %v3712, 7
        %v3715 = vshll.u32 %v3632, 16
        %v3717 = vor.u32 %v3714, %v3715
        %v3718 = vsel %vm3643, %v3707, %v3717
        %v3720 = vshrl.u32 %v3633, 16
        %v3722 = vrot.slane %v3720, 7
        %v3723 = vshll.u32 %v3633, 16
        %v3725 = vor.u32 %v3722, %v3723
        %v3727 = vshrl.u32 %v3634, 16
        %v3729 = vrot.slane %v3727, 7
        %v3730 = vshll.u32 %v3634, 16
        %v3732 = vor.u32 %v3729, %v3730
        %v3733 = vsel %vm3643, %v3722, %v3732
        %v3735 = vshrl.u32 %v3635, 16
        %v3737 = vrot.slane %v3735, 7
        %v3738 = vshll.u32 %v3635, 16
        %v3740 = vor.u32 %v3737, %v3738
        %v3742 = vshrl.u32 %v3636, 16
        %v3744 = vrot.slane %v3742, 7
        %v3745 = vshll.u32 %v3636, 16
        %v3747 = vor.u32 %v3744, %v3745
        %v3748 = vsel %vm3643, %v3737, %v3747
        %v3750 = vshrl.u32 %v3637, 16
        %v3752 = vrot.slane %v3750, 7
        %v3753 = vshll.u32 %v3637, 16
        %v3755 = vor.u32 %v3752, %v3753
        %v3757 = vshrl.u32 %v3638, 16
        %v3759 = vrot.slane %v3757, 7
        %v3760 = vshll.u32 %v3638, 16
        %v3762 = vor.u32 %v3759, %v3760
        %v3763 = vsel %vm3643, %v3752, %v3762
        %v3765 = vshrl.u32 %v3639, 16
        %v3767 = vrot.slane %v3765, 7
        %v3768 = vshll.u32 %v3639, 16
        %v3770 = vor.u32 %v3767, %v3768
        %v3772 = vshrl.u32 %v3640, 16
        %v3774 = vrot.slane %v3772, 7
        %v3775 = vshll.u32 %v3640, 16
        %v3777 = vor.u32 %v3774, %v3775
        %v3778 = vsel %vm3643, %v3767, %v3777
        %v3780 = vshrl.u32 %v3641, 16
        %v3782 = vrot.slane %v3780, 7
        %v3783 = vshll.u32 %v3641, 16
        %v3785 = vor.u32 %v3782, %v3783
        %v3787 = vshrl.u32 %v3642, 16
        %v3789 = vrot.slane %v3787, 7
        %v3790 = vshll.u32 %v3642, 16
        %v3792 = vor.u32 %v3789, %v3790
        %v3793 = vsel %vm3643, %v3782, %v3792
        %vm3814 = vcmask 1040384
        %vm3815 = vmand %vm3814, %vm3643
        %v3816 = vsel %vm3815, 0, %v3650
        %v3817 = vsel %vm3815, 0, %v3665
        %v3818 = vsel %vm3815, 0, %v3680
        %v3819 = vsel %vm3815, 0, %v3695
        %v3820 = vsel %vm3815, 0, %v3710
        %v3821 = vsel %vm3815, 0, %v3725
        %v3822 = vsel %vm3815, 0, %v3740
        %v3823 = vsel %vm3815, 0, %v3755
        %v3824 = vsel %vm3815, 0, %v3770
        %v3825 = vsel %vm3815, 0, %v3785
        %v3826 = vsel %vm3815, %v3654, 0
        %v3827 = vsel %vm3815, %v3669, 0
        %v3828 = vsel %vm3815, %v3684, 0
        %v3829 = vsel %vm3815, %v3699, 0
        %v3830 = vsel %vm3815, %v3714, 0
        %v3831 = vsel %vm3815, %v3729, 0
        %v3832 = vsel %vm3815, %v3744, 0
        %v3833 = vsel %vm3815, %v3759, 0
        %v3834 = vsel %vm3815, %v3774, 0
        %v3835 = vsel %vm3815, %v3789, 0
        %v3837 = vshrl.u32 %v3816, 16
        %v3839 = vshll.u32 %v3816, 16
        %v3841 = vrot.slane %v3839, 1
        %v3842 = vor.u32 %v3837, %v3841
        %v3844 = vshll.u32 %v3658, 16
        %v3846 = vrot.slane %v3844, 1
        %v3847 = vsel %vm2688, %v3842, %v3846
        %v3848 = vshrl.u32 %v3658, 16
        %v3850 = vor.u32 %v3848, %v3846
        %v3852 = vshll.u32 %v3826, 16
        %v3854 = vrot.slane %v3852, 1
        %v3855 = vsel %vm2688, %v3850, %v3854
        %v3857 = vshrl.u32 %v3817, 16
        %v3859 = vshll.u32 %v3817, 16
        %v3861 = vrot.slane %v3859, 1
        %v3862 = vor.u32 %v3857, %v3861
        %v3864 = vshll.u32 %v3673, 16
        %v3866 = vrot.slane %v3864, 1
        %v3867 = vsel %vm2688, %v3862, %v3866
        %v3868 = vshrl.u32 %v3673, 16
        %v3870 = vor.u32 %v3868, %v3866
        %v3872 = vshll.u32 %v3827, 16
        %v3874 = vrot.slane %v3872, 1
        %v3875 = vsel %vm2688, %v3870, %v3874
        %v3877 = vshrl.u32 %v3818, 16
        %v3879 = vshll.u32 %v3818, 16
        %v3881 = vrot.slane %v3879, 1
        %v3882 = vor.u32 %v3877, %v3881
        %v3884 = vshll.u32 %v3688, 16
        %v3886 = vrot.slane %v3884, 1
        %v3887 = vsel %vm2688, %v3882, %v3886
        %v3888 = vshrl.u32 %v3688, 16
        %v3890 = vor.u32 %v3888, %v3886
        %v3892 = vshll.u32 %v3828, 16
        %v3894 = vrot.slane %v3892, 1
        %v3895 = vsel %vm2688, %v3890, %v3894
        %v3897 = vshrl.u32 %v3819, 16
        %v3899 = vshll.u32 %v3819, 16
        %v3901 = vrot.slane %v3899, 1
        %v3902 = vor.u32 %v3897, %v3901
        %v3904 = vshll.u32 %v3703, 16
        %v3906 = vrot.slane %v3904, 1
        %v3907 = vsel %vm2688, %v3902, %v3906
        %v3908 = vshrl.u32 %v3703, 16
        %v3910 = vor.u32 %v3908, %v3906
        %v3912 = vshll.u32 %v3829, 16
        %v3914 = vrot.slane %v3912, 1
        %v3915 = vsel %vm2688, %v3910, %v3914
        %v3917 = vshrl.u32 %v3820, 16
        %v3919 = vshll.u32 %v3820, 16
        %v3921 = vrot.slane %v3919, 1
        %v3922 = vor.u32 %v3917, %v3921
        %v3924 = vshll.u32 %v3718, 16
        %v3926 = vrot.slane %v3924, 1
        %v3927 = vsel %vm2688, %v3922, %v3926
        %v3928 = vshrl.u32 %v3718, 16
        %v3930 = vor.u32 %v3928, %v3926
        %v3932 = vshll.u32 %v3830, 16
        %v3934 = vrot.slane %v3932, 1
        %v3935 = vsel %vm2688, %v3930, %v3934
        %v3937 = vshrl.u32 %v3821, 16
        %v3939 = vshll.u32 %v3821, 16
        %v3941 = vrot.slane %v3939, 1
        %v3942 = vor.u32 %v3937, %v3941
        %v3944 = vshll.u32 %v3733, 16
        %v3946 = vrot.slane %v3944, 1
        %v3947 = vsel %vm2688, %v3942, %v3946
        %v3948 = vshrl.u32 %v3733, 16
        %v3950 = vor.u32 %v3948, %v3946
        %v3952 = vshll.u32 %v3831, 16
        %v3954 = vrot.slane %v3952, 1
        %v3955 = vsel %vm2688, %v3950, %v3954
        %v3957 = vshrl.u32 %v3822, 16
        %v3959 = vshll.u32 %v3822, 16
        %v3961 = vrot.slane %v3959, 1
        %v3962 = vor.u32 %v3957, %v3961
        %v3964 = vshll.u32 %v3748, 16
        %v3966 = vrot.slane %v3964, 1
        %v3967 = vsel %vm2688, %v3962, %v3966
        %v3968 = vshrl.u32 %v3748, 16
        %v3970 = vor.u32 %v3968, %v3966
        %v3972 = vshll.u32 %v3832, 16
        %v3974 = vrot.slane %v3972, 1
        %v3975 = vsel %vm2688, %v3970, %v3974
        %v3977 = vshrl.u32 %v3823, 16
        %v3979 = vshll.u32 %v3823, 16
        %v3981 = vrot.slane %v3979, 1
        %v3982 = vor.u32 %v3977, %v3981
        %v3984 = vshll.u32 %v3763, 16
        %v3986 = vrot.slane %v3984, 1
        %v3987 = vsel %vm2688, %v3982, %v3986
        %v3988 = vshrl.u32 %v3763, 16
        %v3990 = vor.u32 %v3988, %v3986
        %v3992 = vshll.u32 %v3833, 16
        %v3994 = vrot.slane %v3992, 1
        %v3995 = vsel %vm2688, %v3990, %v3994
        %v3997 = vshrl.u32 %v3824, 16
        %v3999 = vshll.u32 %v3824, 16
        %v4001 = vrot.slane %v3999, 1
        %v4002 = vor.u32 %v3997, %v4001
        %v4004 = vshll.u32 %v3778, 16
        %v4006 = vrot.slane %v4004, 1
        %v4007 = vsel %vm2688, %v4002, %v4006
        %v4008 = vshrl.u32 %v3778, 16
        %v4010 = vor.u32 %v4008, %v4006
        %v4012 = vshll.u32 %v3834, 16
        %v4014 = vrot.slane %v4012, 1
        %v4015 = vsel %vm2688, %v4010, %v4014
        %v4017 = vshrl.u32 %v3825, 16
        %v4019 = vshll.u32 %v3825, 16
        %v4021 = vrot.slane %v4019, 1
        %v4022 = vor.u32 %v4017, %v4021
        %v4024 = vshll.u32 %v3793, 16
        %v4026 = vrot.slane %v4024, 1
        %v4027 = vsel %vm2688, %v4022, %v4026
        %v4028 = vshrl.u32 %v3793, 16
        %v4030 = vor.u32 %v4028, %v4026
        %v4032 = vshll.u32 %v3835, 16
        %v4034 = vrot.slane %v4032, 1
        %v4035 = vsel %vm2688, %v4030, %v4034
        %4036 = vrot.lane.b32.xlu0 %v3847, 4
        %v4037 = vpop.permute.xlu0 %4036
        %4038 = vrot.lane.b32.xlu0 %v3855, 4
        %v4039 = vpop.permute.xlu0 %4038
        %4040 = vrot.lane.b32.xlu0 %v3867, 4
        %v4041 = vpop.permute.xlu0 %4040
        %4042 = vrot.lane.b32.xlu0 %v3875, 4
        %v4043 = vpop.permute.xlu0 %4042
        %4044 = vrot.lane.b32.xlu0 %v3887, 4
        %v4045 = vpop.permute.xlu0 %4044
        %4046 = vrot.lane.b32.xlu0 %v3895, 4
        %v4047 = vpop.permute.xlu0 %4046
        %4048 = vrot.lane.b32.xlu0 %v3907, 4
        %v4049 = vpop.permute.xlu0 %4048
        %4050 = vrot.lane.b32.xlu0 %v3915, 4
        %v4051 = vpop.permute.xlu0 %4050
        %4052 = vrot.lane.b32.xlu0 %v3927, 4
        %v4053 = vpop.permute.xlu0 %4052
        %4054 = vrot.lane.b32.xlu0 %v3935, 4
        %v4055 = vpop.permute.xlu0 %4054
        %4056 = vrot.lane.b32.xlu0 %v3947, 4
        %v4057 = vpop.permute.xlu0 %4056
        %4058 = vrot.lane.b32.xlu0 %v3955, 4
        %v4059 = vpop.permute.xlu0 %4058
        %4060 = vrot.lane.b32.xlu0 %v3967, 4
        %v4061 = vpop.permute.xlu0 %4060
        %4062 = vrot.lane.b32.xlu0 %v3975, 4
        %v4063 = vpop.permute.xlu0 %4062
        %4064 = vrot.lane.b32.xlu0 %v3987, 4
        %v4065 = vpop.permute.xlu0 %4064
        %4066 = vrot.lane.b32.xlu0 %v3995, 4
        %v4067 = vpop.permute.xlu0 %4066
        %4068 = vrot.lane.b32.xlu0 %v4007, 4
        %v4069 = vpop.permute.xlu0 %4068
        %4070 = vrot.lane.b32.xlu0 %v4015, 4
        %v4071 = vpop.permute.xlu0 %4070
        %4072 = vrot.lane.b32.xlu0 %v4027, 4
        %v4073 = vpop.permute.xlu0 %4072
        %4074 = vrot.lane.b32.xlu0 %v4035, 4
        %v4075 = vpop.permute.xlu0 %4074
        %v4096 = vrot.slane %v3816, 1
        %v4097 = vrot.slane %v3658, 1
        %v4098 = vsel %vm2929, %v4096, %v4097
        %v4099 = vrot.slane %v3826, 1
        %v4100 = vsel %vm2929, %v4097, %v4099
        %v4101 = vrot.slane %v3817, 1
        %v4102 = vrot.slane %v3673, 1
        %v4103 = vsel %vm2929, %v4101, %v4102
        %v4104 = vrot.slane %v3827, 1
        %v4105 = vsel %vm2929, %v4102, %v4104
        %v4106 = vrot.slane %v3818, 1
        %v4107 = vrot.slane %v3688, 1
        %v4108 = vsel %vm2929, %v4106, %v4107
        %v4109 = vrot.slane %v3828, 1
        %v4110 = vsel %vm2929, %v4107, %v4109
        %v4111 = vrot.slane %v3819, 1
        %v4112 = vrot.slane %v3703, 1
        %v4113 = vsel %vm2929, %v4111, %v4112
        %v4114 = vrot.slane %v3829, 1
        %v4115 = vsel %vm2929, %v4112, %v4114
        %v4116 = vrot.slane %v3820, 1
        %v4117 = vrot.slane %v3718, 1
        %v4118 = vsel %vm2929, %v4116, %v4117
        %v4119 = vrot.slane %v3830, 1
        %v4120 = vsel %vm2929, %v4117, %v4119
        %v4121 = vrot.slane %v3821, 1
        %v4122 = vrot.slane %v3733, 1
        %v4123 = vsel %vm2929, %v4121, %v4122
        %v4124 = vrot.slane %v3831, 1
        %v4125 = vsel %vm2929, %v4122, %v4124
        %v4126 = vrot.slane %v3822, 1
        %v4127 = vrot.slane %v3748, 1
        %v4128 = vsel %vm2929, %v4126, %v4127
        %v4129 = vrot.slane %v3832, 1
        %v4130 = vsel %vm2929, %v4127, %v4129
        %v4131 = vrot.slane %v3823, 1
        %v4132 = vrot.slane %v3763, 1
        %v4133 = vsel %vm2929, %v4131, %v4132
        %v4134 = vrot.slane %v3833, 1
        %v4135 = vsel %vm2929, %v4132, %v4134
        %v4136 = vrot.slane %v3824, 1
        %v4137 = vrot.slane %v3778, 1
        %v4138 = vsel %vm2929, %v4136, %v4137
        %v4139 = vrot.slane %v3834, 1
        %v4140 = vsel %vm2929, %v4137, %v4139
        %v4141 = vrot.slane %v3825, 1
        %v4142 = vrot.slane %v3793, 1
        %v4143 = vsel %vm2929, %v4141, %v4142
        %v4144 = vrot.slane %v3835, 1
        %v4145 = vsel %vm2929, %v4142, %v4144
        %4146 = vrot.lane.b32.xlu0 %v4098, 8
        %v4147 = vpop.permute.xlu0 %4146
        %4148 = vrot.lane.b32.xlu0 %v4100, 8
        %v4149 = vpop.permute.xlu0 %4148
        %4150 = vrot.lane.b32.xlu0 %v4103, 8
        %v4151 = vpop.permute.xlu0 %4150
        %4152 = vrot.lane.b32.xlu0 %v4105, 8
        %v4153 = vpop.permute.xlu0 %4152
        %4154 = vrot.lane.b32.xlu0 %v4108, 8
        %v4155 = vpop.permute.xlu0 %4154
        %4156 = vrot.lane.b32.xlu0 %v4110, 8
        %v4157 = vpop.permute.xlu0 %4156
        %4158 = vrot.lane.b32.xlu0 %v4113, 8
        %v4159 = vpop.permute.xlu0 %4158
        %4160 = vrot.lane.b32.xlu0 %v4115, 8
        %v4161 = vpop.permute.xlu0 %4160
        %4162 = vrot.lane.b32.xlu0 %v4118, 8
        %v4163 = vpop.permute.xlu0 %4162
        %4164 = vrot.lane.b32.xlu0 %v4120, 8
        %v4165 = vpop.permute.xlu0 %4164
        %4166 = vrot.lane.b32.xlu0 %v4123, 8
        %v4167 = vpop.permute.xlu0 %4166
        %4168 = vrot.lane.b32.xlu0 %v4125, 8
        %v4169 = vpop.permute.xlu0 %4168
        %4170 = vrot.lane.b32.xlu0 %v4128, 8
        %v4171 = vpop.permute.xlu0 %4170
        %4172 = vrot.lane.b32.xlu0 %v4130, 8
        %v4173 = vpop.permute.xlu0 %4172
        %4174 = vrot.lane.b32.xlu0 %v4133, 8
        %v4175 = vpop.permute.xlu0 %4174
        %4176 = vrot.lane.b32.xlu0 %v4135, 8
        %v4177 = vpop.permute.xlu0 %4176
        %4178 = vrot.lane.b32.xlu0 %v4138, 8
        %v4179 = vpop.permute.xlu0 %4178
        %4180 = vrot.lane.b32.xlu0 %v4140, 8
        %v4181 = vpop.permute.xlu0 %4180
        %4182 = vrot.lane.b32.xlu0 %v4143, 8
        %v4183 = vpop.permute.xlu0 %4182
        %4184 = vrot.lane.b32.xlu0 %v4145, 8
        %v4185 = vpop.permute.xlu0 %4184
        %v4187 = vsel %vm1307, %v3816, %v4037
        %v4189 = vsel %vm1307, %v3658, %v4039
        %v4191 = vsel %vm1307, %v3817, %v4041
        %v4193 = vsel %vm1307, %v3673, %v4043
        %v4195 = vsel %vm1307, %v3818, %v4045
        %v4197 = vsel %vm1307, %v3688, %v4047
        %v4199 = vsel %vm1307, %v3819, %v4049
        %v4201 = vsel %vm1307, %v3703, %v4051
        %v4203 = vsel %vm1307, %v3820, %v4053
        %v4205 = vsel %vm1307, %v3718, %v4055
        %v4207 = vsel %vm1307, %v3821, %v4057
        %v4209 = vsel %vm1307, %v3733, %v4059
        %v4211 = vsel %vm1307, %v3822, %v4061
        %v4213 = vsel %vm1307, %v3748, %v4063
        %v4215 = vsel %vm1307, %v3823, %v4065
        %v4217 = vsel %vm1307, %v3763, %v4067
        %v4219 = vsel %vm1307, %v3824, %v4069
        %v4221 = vsel %vm1307, %v3778, %v4071
        %v4223 = vsel %vm1307, %v3825, %v4073
        %v4225 = vsel %vm1307, %v3793, %v4075
        %v4227 = vsel %vm1311, %v4187, %v4147
        %v4229 = vsel %vm1311, %v4189, %v4149
        %v4231 = vsel %vm1311, %v4191, %v4151
        %v4233 = vsel %vm1311, %v4193, %v4153
        %v4235 = vsel %vm1311, %v4195, %v4155
        %v4237 = vsel %vm1311, %v4197, %v4157
        %v4239 = vsel %vm1311, %v4199, %v4159
        %v4241 = vsel %vm1311, %v4201, %v4161
        %v4243 = vsel %vm1311, %v4203, %v4163
        %v4245 = vsel %vm1311, %v4205, %v4165
        %v4247 = vsel %vm1311, %v4207, %v4167
        %v4249 = vsel %vm1311, %v4209, %v4169
        %v4251 = vsel %vm1311, %v4211, %v4171
        %v4253 = vsel %vm1311, %v4213, %v4173
        %v4255 = vsel %vm1311, %v4215, %v4175
        %v4257 = vsel %vm1311, %v4217, %v4177
        %v4259 = vsel %vm1311, %v4219, %v4179
        %v4261 = vsel %vm1311, %v4221, %v4181
        %v4263 = vsel %vm1311, %v4223, %v4183
        %v4265 = vsel %vm1311, %v4225, %v4185
        %v4266 = vld [vmem:[%s4] sm:$0xf]
        %v4267 = vld [vmem:[%s4 + $0x4] sm:$0x3]
        %v4270 = vunpack.c.l.b16 %v4266
        %v4271 = vunpack.c.l.b16 %v4267
        %v4272 = vpack.c.b16 %v4271, %v4270
        %v4273 = vsel %vm1314, %v4227, 0
        %v4275 = vsel %vm1314, %v4229, 0
        %v4277 = vsel %vm1314, %v4231, 0
        %v4279 = vsel %vm1314, %v4233, 0
        %v4281 = vsel %vm1314, %v4235, 0
        %v4283 = vsel %vm1314, %v4237, 0
        %v4285 = vsel %vm1314, %v4239, 0
        %v4287 = vsel %vm1314, %v4241, 0
        %v4289 = vsel %vm1314, %v4243, 0
        %v4291 = vsel %vm1314, %v4245, 0
        %v4293 = vsel %vm1314, %v4247, 0
        %v4295 = vsel %vm1314, %v4249, 0
        %v4297 = vsel %vm1314, %v4251, 0
        %v4299 = vsel %vm1314, %v4253, 0
        %v4301 = vsel %vm1314, %v4255, 0
        %v4303 = vsel %vm1314, %v4257, 0
        %v4306 = vsel %vm3142, %v4272, 0
        %4308 = vmatpush.bf16.msra.mxu0 0
        %4309 = vmatpush.bf16.msra.mxu0 0
        %4310 = vmatpush.bf16.msra.mxu0 0
        %4311 = vmatpush.bf16.msra.mxu0 0
        %4312 = vmatpush.bf16.msra.mxu0 0
        %4313 = vmatpush.bf16.msra.mxu0 0
        %4314 = vmatpush.bf16.msra.mxu0 0
        %4315 = vmatpush.bf16.msra.mxu0 %v4306
        %4316 = vmatmul.bf16.gmra.mxu0 %v4273
        %v4317 = vpop.f32.mrf.mxu0
        %v4318 = vadd.f32 0.0, %v4317
        %v4319 = vpop.f32.mrf.mxu0
        %v4320 = vadd.f32 0.0, %v4319
        %4321 = vmatmul.bf16.gmra.mxu0 %v4275
        %v4322 = vpop.f32.mrf.mxu0
        %v4323 = vadd.f32 0.0, %v4322
        %v4324 = vpop.f32.mrf.mxu0
        %v4325 = vadd.f32 0.0, %v4324
        %4326 = vmatmul.bf16.gmra.mxu0 %v4277
        %v4327 = vpop.f32.mrf.mxu0
        %v4328 = vadd.f32 0.0, %v4327
        %v4329 = vpop.f32.mrf.mxu0
        %v4330 = vadd.f32 0.0, %v4329
        %4331 = vmatmul.bf16.gmra.mxu0 %v4279
        %v4332 = vpop.f32.mrf.mxu0
        %v4333 = vadd.f32 0.0, %v4332
        %v4334 = vpop.f32.mrf.mxu0
        %v4335 = vadd.f32 0.0, %v4334
        %4336 = vmatmul.bf16.gmra.mxu0 %v4281
        %v4337 = vpop.f32.mrf.mxu0
        %v4338 = vadd.f32 0.0, %v4337
        %v4339 = vpop.f32.mrf.mxu0
        %v4340 = vadd.f32 0.0, %v4339
        %4341 = vmatmul.bf16.gmra.mxu0 %v4283
        %v4342 = vpop.f32.mrf.mxu0
        %v4343 = vadd.f32 0.0, %v4342
        %v4344 = vpop.f32.mrf.mxu0
        %v4345 = vadd.f32 0.0, %v4344
        %4346 = vmatmul.bf16.gmra.mxu0 %v4285
        %v4347 = vpop.f32.mrf.mxu0
        %v4348 = vadd.f32 0.0, %v4347
        %v4349 = vpop.f32.mrf.mxu0
        %v4350 = vadd.f32 0.0, %v4349
        %4351 = vmatmul.bf16.gmra.mxu0 %v4287
        %v4352 = vpop.f32.mrf.mxu0
        %v4353 = vadd.f32 0.0, %v4352
        %v4354 = vpop.f32.mrf.mxu0
        %v4355 = vadd.f32 0.0, %v4354
        %4356 = vmatmul.bf16.gmra.mxu0 %v4289
        %v4357 = vpop.f32.mrf.mxu0
        %v4358 = vadd.f32 0.0, %v4357
        %v4359 = vpop.f32.mrf.mxu0
        %v4360 = vadd.f32 0.0, %v4359
        %4361 = vmatmul.bf16.gmra.mxu0 %v4291
        %v4362 = vpop.f32.mrf.mxu0
        %v4363 = vadd.f32 0.0, %v4362
        %v4364 = vpop.f32.mrf.mxu0
        %v4365 = vadd.f32 0.0, %v4364
        %4366 = vmatmul.bf16.gmra.mxu0 %v4293
        %v4367 = vpop.f32.mrf.mxu0
        %v4368 = vadd.f32 0.0, %v4367
        %v4369 = vpop.f32.mrf.mxu0
        %v4370 = vadd.f32 0.0, %v4369
        %4371 = vmatmul.bf16.gmra.mxu0 %v4295
        %v4372 = vpop.f32.mrf.mxu0
        %v4373 = vadd.f32 0.0, %v4372
        %v4374 = vpop.f32.mrf.mxu0
        %v4375 = vadd.f32 0.0, %v4374
        %4376 = vmatmul.bf16.gmra.mxu0 %v4297
        %v4377 = vpop.f32.mrf.mxu0
        %v4378 = vadd.f32 0.0, %v4377
        %v4379 = vpop.f32.mrf.mxu0
        %v4380 = vadd.f32 0.0, %v4379
        %4381 = vmatmul.bf16.gmra.mxu0 %v4299
        %v4382 = vpop.f32.mrf.mxu0
        %v4383 = vadd.f32 0.0, %v4382
        %v4384 = vpop.f32.mrf.mxu0
        %v4385 = vadd.f32 0.0, %v4384
        %4386 = vmatmul.bf16.gmra.mxu0 %v4301
        %v4387 = vpop.f32.mrf.mxu0
        %v4388 = vadd.f32 0.0, %v4387
        %v4389 = vpop.f32.mrf.mxu0
        %v4390 = vadd.f32 0.0, %v4389
        %4391 = vmatmul.bf16.gmra.mxu0 %v4303
        %v4392 = vpop.f32.mrf.mxu0
        %v4393 = vadd.f32 0.0, %v4392
        %v4394 = vpop.f32.mrf.mxu0
        %v4395 = vadd.f32 0.0, %v4394
        %4396 = vdwg.mxu0
        %v4397 = vadd.f32 %v3440, %v4318
        %v4398 = vadd.f32 %v3441, %v4320
        %v4399 = vadd.f32 %v3442, %v4323
        %v4400 = vadd.f32 %v3443, %v4325
        %v4401 = vadd.f32 %v3444, %v4328
        %v4402 = vadd.f32 %v3445, %v4330
        %v4403 = vadd.f32 %v3446, %v4333
        %v4404 = vadd.f32 %v3447, %v4335
        %v4405 = vadd.f32 %v3448, %v4338
        %v4406 = vadd.f32 %v3449, %v4340
        %v4407 = vadd.f32 %v3450, %v4343
        %v4408 = vadd.f32 %v3451, %v4345
        %v4409 = vadd.f32 %v3452, %v4348
        %v4410 = vadd.f32 %v3453, %v4350
        %v4411 = vadd.f32 %v3454, %v4353
        %v4412 = vadd.f32 %v3455, %v4355
        %v4413 = vadd.f32 %v3456, %v4358
        %v4414 = vadd.f32 %v3457, %v4360
        %v4415 = vadd.f32 %v3458, %v4363
        %v4416 = vadd.f32 %v3459, %v4365
        %v4417 = vadd.f32 %v3460, %v4368
        %v4418 = vadd.f32 %v3461, %v4370
        %v4419 = vadd.f32 %v3462, %v4373
        %v4420 = vadd.f32 %v3463, %v4375
        %v4421 = vadd.f32 %v3464, %v4378
        %v4422 = vadd.f32 %v3465, %v4380
        %v4423 = vadd.f32 %v3466, %v4383
        %v4424 = vadd.f32 %v3467, %v4385
        %v4425 = vadd.f32 %v3468, %v4388
        %v4426 = vadd.f32 %v3469, %v4390
        %v4427 = vadd.f32 %v3470, %v4393
        %v4428 = vadd.f32 %v3471, %v4395
        %s4429 = scalar_lea.vmem %s4, 8
        %v4430 = vld [vmem:[%s4429] sm:$0xf]
        %v4431 = vld [vmem:[%s4429 + $0x4] sm:$0x3]
        %v4434 = vunpack.c.l.b16 %v4430
        %v4435 = vunpack.c.l.b16 %v4431
        %v4436 = vpack.c.b16 %v4435, %v4434
        %v4437 = vsel %vm1314, %v4259, 0
        %v4439 = vsel %vm1314, %v4261, 0
        %v4442 = vsel %vm3142, %v4436, 0
        %4444 = vmatpush.bf16.msra.mxu0 0
        %4445 = vmatpush.bf16.msra.mxu0 0
        %4446 = vmatpush.bf16.msra.mxu0 0
        %4447 = vmatpush.bf16.msra.mxu0 0
        %4448 = vmatpush.bf16.msra.mxu0 0
        %4449 = vmatpush.bf16.msra.mxu0 0
        %4450 = vmatpush.bf16.msra.mxu0 0
        %4451 = vmatpush.bf16.msra.mxu0 %v4442
        %4452 = vmatmul.bf16.gmra.mxu0 %v4277
        %v4453 = vpop.f32.mrf.mxu0
        %v4454 = vadd.f32 0.0, %v4453
        %v4455 = vpop.f32.mrf.mxu0
        %v4456 = vadd.f32 0.0, %v4455
        %4457 = vmatmul.bf16.gmra.mxu0 %v4279
        %v4458 = vpop.f32.mrf.mxu0
        %v4459 = vadd.f32 0.0, %v4458
        %v4460 = vpop.f32.mrf.mxu0
        %v4461 = vadd.f32 0.0, %v4460
        %4462 = vmatmul.bf16.gmra.mxu0 %v4281
        %v4463 = vpop.f32.mrf.mxu0
        %v4464 = vadd.f32 0.0, %v4463
        %v4465 = vpop.f32.mrf.mxu0
        %v4466 = vadd.f32 0.0, %v4465
        %4467 = vmatmul.bf16.gmra.mxu0 %v4283
        %v4468 = vpop.f32.mrf.mxu0
        %v4469 = vadd.f32 0.0, %v4468
        %v4470 = vpop.f32.mrf.mxu0
        %v4471 = vadd.f32 0.0, %v4470
        %4472 = vmatmul.bf16.gmra.mxu0 %v4285
        %v4473 = vpop.f32.mrf.mxu0
        %v4474 = vadd.f32 0.0, %v4473
        %v4475 = vpop.f32.mrf.mxu0
        %v4476 = vadd.f32 0.0, %v4475
        %4477 = vmatmul.bf16.gmra.mxu0 %v4287
        %v4478 = vpop.f32.mrf.mxu0
        %v4479 = vadd.f32 0.0, %v4478
        %v4480 = vpop.f32.mrf.mxu0
        %v4481 = vadd.f32 0.0, %v4480
        %4482 = vmatmul.bf16.gmra.mxu0 %v4289
        %v4483 = vpop.f32.mrf.mxu0
        %v4484 = vadd.f32 0.0, %v4483
        %v4485 = vpop.f32.mrf.mxu0
        %v4486 = vadd.f32 0.0, %v4485
        %4487 = vmatmul.bf16.gmra.mxu0 %v4291
        %v4488 = vpop.f32.mrf.mxu0
        %v4489 = vadd.f32 0.0, %v4488
        %v4490 = vpop.f32.mrf.mxu0
        %v4491 = vadd.f32 0.0, %v4490
        %4492 = vmatmul.bf16.gmra.mxu0 %v4293
        %v4493 = vpop.f32.mrf.mxu0
        %v4494 = vadd.f32 0.0, %v4493
        %v4495 = vpop.f32.mrf.mxu0
        %v4496 = vadd.f32 0.0, %v4495
        %4497 = vmatmul.bf16.gmra.mxu0 %v4295
        %v4498 = vpop.f32.mrf.mxu0
        %v4499 = vadd.f32 0.0, %v4498
        %v4500 = vpop.f32.mrf.mxu0
        %v4501 = vadd.f32 0.0, %v4500
        %4502 = vmatmul.bf16.gmra.mxu0 %v4297
        %v4503 = vpop.f32.mrf.mxu0
        %v4504 = vadd.f32 0.0, %v4503
        %v4505 = vpop.f32.mrf.mxu0
        %v4506 = vadd.f32 0.0, %v4505
        %4507 = vmatmul.bf16.gmra.mxu0 %v4299
        %v4508 = vpop.f32.mrf.mxu0
        %v4509 = vadd.f32 0.0, %v4508
        %v4510 = vpop.f32.mrf.mxu0
        %v4511 = vadd.f32 0.0, %v4510
        %4512 = vmatmul.bf16.gmra.mxu0 %v4301
        %v4513 = vpop.f32.mrf.mxu0
        %v4514 = vadd.f32 0.0, %v4513
        %v4515 = vpop.f32.mrf.mxu0
        %v4516 = vadd.f32 0.0, %v4515
        %4517 = vmatmul.bf16.gmra.mxu0 %v4303
        %v4518 = vpop.f32.mrf.mxu0
        %v4519 = vadd.f32 0.0, %v4518
        %v4520 = vpop.f32.mrf.mxu0
        %v4521 = vadd.f32 0.0, %v4520
        %4522 = vmatmul.bf16.gmra.mxu0 %v4437
        %v4523 = vpop.f32.mrf.mxu0
        %v4524 = vadd.f32 0.0, %v4523
        %v4525 = vpop.f32.mrf.mxu0
        %v4526 = vadd.f32 0.0, %v4525
        %4527 = vmatmul.bf16.gmra.mxu0 %v4439
        %v4528 = vpop.f32.mrf.mxu0
        %v4529 = vadd.f32 0.0, %v4528
        %v4530 = vpop.f32.mrf.mxu0
        %v4531 = vadd.f32 0.0, %v4530
        %4532 = vdwg.mxu0
        %v4533 = vadd.f32 %v4397, %v4454
        %v4534 = vadd.f32 %v4398, %v4456
        %v4535 = vadd.f32 %v4399, %v4459
        %v4536 = vadd.f32 %v4400, %v4461
        %v4537 = vadd.f32 %v4401, %v4464
        %v4538 = vadd.f32 %v4402, %v4466
        %v4539 = vadd.f32 %v4403, %v4469
        %v4540 = vadd.f32 %v4404, %v4471
        %v4541 = vadd.f32 %v4405, %v4474
        %v4542 = vadd.f32 %v4406, %v4476
        %v4543 = vadd.f32 %v4407, %v4479
        %v4544 = vadd.f32 %v4408, %v4481
        %v4545 = vadd.f32 %v4409, %v4484
        %v4546 = vadd.f32 %v4410, %v4486
        %v4547 = vadd.f32 %v4411, %v4489
        %v4548 = vadd.f32 %v4412, %v4491
        %v4549 = vadd.f32 %v4413, %v4494
        %v4550 = vadd.f32 %v4414, %v4496
        %v4551 = vadd.f32 %v4415, %v4499
        %v4552 = vadd.f32 %v4416, %v4501
        %v4553 = vadd.f32 %v4417, %v4504
        %v4554 = vadd.f32 %v4418, %v4506
        %v4555 = vadd.f32 %v4419, %v4509
        %v4556 = vadd.f32 %v4420, %v4511
        %v4557 = vadd.f32 %v4421, %v4514
        %v4558 = vadd.f32 %v4422, %v4516
        %v4559 = vadd.f32 %v4423, %v4519
        %v4560 = vadd.f32 %v4424, %v4521
        %v4561 = vadd.f32 %v4425, %v4524
        %v4562 = vadd.f32 %v4426, %v4526
        %v4563 = vadd.f32 %v4427, %v4529
        %v4564 = vadd.f32 %v4428, %v4531
        %s4565 = scalar_lea.vmem %s4, 16
        %v4566 = vld [vmem:[%s4565] sm:$0xf]
        %v4567 = vld [vmem:[%s4565 + $0x4] sm:$0x3]
        %v4570 = vunpack.c.l.b16 %v4566
        %v4571 = vunpack.c.l.b16 %v4567
        %v4572 = vpack.c.b16 %v4571, %v4570
        %v4573 = vsel %vm1314, %v4263, 0
        %v4575 = vsel %vm1314, %v4265, 0
        %v4578 = vsel %vm3142, %v4572, 0
        %4580 = vmatpush.bf16.msra.mxu0 0
        %4581 = vmatpush.bf16.msra.mxu0 0
        %4582 = vmatpush.bf16.msra.mxu0 0
        %4583 = vmatpush.bf16.msra.mxu0 0
        %4584 = vmatpush.bf16.msra.mxu0 0
        %4585 = vmatpush.bf16.msra.mxu0 0
        %4586 = vmatpush.bf16.msra.mxu0 0
        %4587 = vmatpush.bf16.msra.mxu0 %v4578
        %4588 = vmatmul.bf16.gmra.mxu0 %v4281
        %v4589 = vpop.f32.mrf.mxu0
        %v4590 = vadd.f32 0.0, %v4589
        %v4591 = vpop.f32.mrf.mxu0
        %v4592 = vadd.f32 0.0, %v4591
        %4593 = vmatmul.bf16.gmra.mxu0 %v4283
        %v4594 = vpop.f32.mrf.mxu0
        %v4595 = vadd.f32 0.0, %v4594
        %v4596 = vpop.f32.mrf.mxu0
        %v4597 = vadd.f32 0.0, %v4596
        %4598 = vmatmul.bf16.gmra.mxu0 %v4285
        %v4599 = vpop.f32.mrf.mxu0
        %v4600 = vadd.f32 0.0, %v4599
        %v4601 = vpop.f32.mrf.mxu0
        %v4602 = vadd.f32 0.0, %v4601
        %4603 = vmatmul.bf16.gmra.mxu0 %v4287
        %v4604 = vpop.f32.mrf.mxu0
        %v4605 = vadd.f32 0.0, %v4604
        %v4606 = vpop.f32.mrf.mxu0
        %v4607 = vadd.f32 0.0, %v4606
        %4608 = vmatmul.bf16.gmra.mxu0 %v4289
        %v4609 = vpop.f32.mrf.mxu0
        %v4610 = vadd.f32 0.0, %v4609
        %v4611 = vpop.f32.mrf.mxu0
        %v4612 = vadd.f32 0.0, %v4611
        %4613 = vmatmul.bf16.gmra.mxu0 %v4291
        %v4614 = vpop.f32.mrf.mxu0
        %v4615 = vadd.f32 0.0, %v4614
        %v4616 = vpop.f32.mrf.mxu0
        %v4617 = vadd.f32 0.0, %v4616
        %4618 = vmatmul.bf16.gmra.mxu0 %v4293
        %v4619 = vpop.f32.mrf.mxu0
        %v4620 = vadd.f32 0.0, %v4619
        %v4621 = vpop.f32.mrf.mxu0
        %v4622 = vadd.f32 0.0, %v4621
        %4623 = vmatmul.bf16.gmra.mxu0 %v4295
        %v4624 = vpop.f32.mrf.mxu0
        %v4625 = vadd.f32 0.0, %v4624
        %v4626 = vpop.f32.mrf.mxu0
        %v4627 = vadd.f32 0.0, %v4626
        %4628 = vmatmul.bf16.gmra.mxu0 %v4297
        %v4629 = vpop.f32.mrf.mxu0
        %v4630 = vadd.f32 0.0, %v4629
        %v4631 = vpop.f32.mrf.mxu0
        %v4632 = vadd.f32 0.0, %v4631
        %4633 = vmatmul.bf16.gmra.mxu0 %v4299
        %v4634 = vpop.f32.mrf.mxu0
        %v4635 = vadd.f32 0.0, %v4634
        %v4636 = vpop.f32.mrf.mxu0
        %v4637 = vadd.f32 0.0, %v4636
        %4638 = vmatmul.bf16.gmra.mxu0 %v4301
        %v4639 = vpop.f32.mrf.mxu0
        %v4640 = vadd.f32 0.0, %v4639
        %v4641 = vpop.f32.mrf.mxu0
        %v4642 = vadd.f32 0.0, %v4641
        %4643 = vmatmul.bf16.gmra.mxu0 %v4303
        %v4644 = vpop.f32.mrf.mxu0
        %v4645 = vadd.f32 0.0, %v4644
        %v4646 = vpop.f32.mrf.mxu0
        %v4647 = vadd.f32 0.0, %v4646
        %4648 = vmatmul.bf16.gmra.mxu0 %v4437
        %v4649 = vpop.f32.mrf.mxu0
        %v4650 = vadd.f32 0.0, %v4649
        %v4651 = vpop.f32.mrf.mxu0
        %v4652 = vadd.f32 0.0, %v4651
        %4653 = vmatmul.bf16.gmra.mxu0 %v4439
        %v4654 = vpop.f32.mrf.mxu0
        %v4655 = vadd.f32 0.0, %v4654
        %v4656 = vpop.f32.mrf.mxu0
        %v4657 = vadd.f32 0.0, %v4656
        %4658 = vmatmul.bf16.gmra.mxu0 %v4573
        %v4659 = vpop.f32.mrf.mxu0
        %v4660 = vadd.f32 0.0, %v4659
        %v4661 = vpop.f32.mrf.mxu0
        %v4662 = vadd.f32 0.0, %v4661
        %4663 = vmatmul.bf16.gmra.mxu0 %v4575
        %v4664 = vpop.f32.mrf.mxu0
        %v4665 = vadd.f32 0.0, %v4664
        %v4666 = vpop.f32.mrf.mxu0
        %v4667 = vadd.f32 0.0, %v4666
        %4668 = vdwg.mxu0
        %v4669 = vadd.f32 %v4533, %v4590
        %v4670 = vadd.f32 %v4534, %v4592
        %v4671 = vadd.f32 %v4535, %v4595
        %v4672 = vadd.f32 %v4536, %v4597
        %v4673 = vadd.f32 %v4537, %v4600
        %v4674 = vadd.f32 %v4538, %v4602
        %v4675 = vadd.f32 %v4539, %v4605
        %v4676 = vadd.f32 %v4540, %v4607
        %v4677 = vadd.f32 %v4541, %v4610
        %v4678 = vadd.f32 %v4542, %v4612
        %v4679 = vadd.f32 %v4543, %v4615
        %v4680 = vadd.f32 %v4544, %v4617
        %v4681 = vadd.f32 %v4545, %v4620
        %v4682 = vadd.f32 %v4546, %v4622
        %v4683 = vadd.f32 %v4547, %v4625
        %v4684 = vadd.f32 %v4548, %v4627
        %v4685 = vadd.f32 %v4549, %v4630
        %v4686 = vadd.f32 %v4550, %v4632
        %v4687 = vadd.f32 %v4551, %v4635
        %v4688 = vadd.f32 %v4552, %v4637
        %v4689 = vadd.f32 %v4553, %v4640
        %v4690 = vadd.f32 %v4554, %v4642
        %v4691 = vadd.f32 %v4555, %v4645
        %v4692 = vadd.f32 %v4556, %v4647
        %v4693 = vadd.f32 %v4557, %v4650
        %v4694 = vadd.f32 %v4558, %v4652
        %v4695 = vadd.f32 %v4559, %v4655
        %v4696 = vadd.f32 %v4560, %v4657
        %v4697 = vadd.f32 %v4561, %v4660
        %v4698 = vadd.f32 %v4562, %v4662
        %v4699 = vadd.f32 %v4563, %v4665
        %v4700 = vadd.f32 %v4564, %v4667
        %v4701 = vld [vmem:[%s5] sm:$0x1]
        %v4703 = vperm.slane %v4701, 0
        %v4705 = vmul.f32 %v4669, %v4703
        %v4706 = vmul.f32 %v4670, %v4703
        %v4707 = vmul.f32 %v4671, %v4703
        %v4708 = vmul.f32 %v4672, %v4703
        %v4709 = vmul.f32 %v4673, %v4703
        %v4710 = vmul.f32 %v4674, %v4703
        %v4711 = vmul.f32 %v4675, %v4703
        %v4712 = vmul.f32 %v4676, %v4703
        %v4713 = vmul.f32 %v4677, %v4703
        %v4714 = vmul.f32 %v4678, %v4703
        %v4715 = vmul.f32 %v4679, %v4703
        %v4716 = vmul.f32 %v4680, %v4703
        %v4717 = vmul.f32 %v4681, %v4703
        %v4718 = vmul.f32 %v4682, %v4703
        %v4719 = vmul.f32 %v4683, %v4703
        %v4720 = vmul.f32 %v4684, %v4703
        %v4721 = vmul.f32 %v4685, %v4703
        %v4722 = vmul.f32 %v4686, %v4703
        %v4723 = vmul.f32 %v4687, %v4703
        %v4724 = vmul.f32 %v4688, %v4703
        %v4725 = vmul.f32 %v4689, %v4703
        %v4726 = vmul.f32 %v4690, %v4703
        %v4727 = vmul.f32 %v4691, %v4703
        %v4728 = vmul.f32 %v4692, %v4703
        %v4729 = vmul.f32 %v4693, %v4703
        %v4730 = vmul.f32 %v4694, %v4703
        %v4731 = vmul.f32 %v4695, %v4703
        %v4732 = vmul.f32 %v4696, %v4703
        %v4733 = vmul.f32 %v4697, %v4703
        %v4734 = vmul.f32 %v4698, %v4703
        %v4735 = vmul.f32 %v4699, %v4703
        %v4736 = vmul.f32 %v4700, %v4703
        %v4737 = vld [vmem:[%s6] sm:$0x1]
        %v4739 = vperm.slane %v4737, 0
        %v4741 = vadd.f32 %v4705, %v4739
        %v4742 = vadd.f32 %v4706, %v4739
        %v4743 = vadd.f32 %v4707, %v4739
        %v4744 = vadd.f32 %v4708, %v4739
        %v4745 = vadd.f32 %v4709, %v4739
        %v4746 = vadd.f32 %v4710, %v4739
        %v4747 = vadd.f32 %v4711, %v4739
        %v4748 = vadd.f32 %v4712, %v4739
        %v4749 = vadd.f32 %v4713, %v4739
        %v4750 = vadd.f32 %v4714, %v4739
        %v4751 = vadd.f32 %v4715, %v4739
        %v4752 = vadd.f32 %v4716, %v4739
        %v4753 = vadd.f32 %v4717, %v4739
        %v4754 = vadd.f32 %v4718, %v4739
        %v4755 = vadd.f32 %v4719, %v4739
        %v4756 = vadd.f32 %v4720, %v4739
        %v4757 = vadd.f32 %v4721, %v4739
        %v4758 = vadd.f32 %v4722, %v4739
        %v4759 = vadd.f32 %v4723, %v4739
        %v4760 = vadd.f32 %v4724, %v4739
        %v4761 = vadd.f32 %v4725, %v4739
        %v4762 = vadd.f32 %v4726, %v4739
        %v4763 = vadd.f32 %v4727, %v4739
        %v4764 = vadd.f32 %v4728, %v4739
        %v4765 = vadd.f32 %v4729, %v4739
        %v4766 = vadd.f32 %v4730, %v4739
        %v4767 = vadd.f32 %v4731, %v4739
        %v4768 = vadd.f32 %v4732, %v4739
        %v4769 = vadd.f32 %v4733, %v4739
        %v4770 = vadd.f32 %v4734, %v4739
        %v4771 = vadd.f32 %v4735, %v4739
        %v4772 = vadd.f32 %v4736, %v4739
        %v4773 = vmax.f32 %v4741, 0.0
        %v4774 = vmax.f32 %v4742, 0.0
        %v4775 = vmax.f32 %v4743, 0.0
        %v4776 = vmax.f32 %v4744, 0.0
        %v4777 = vmax.f32 %v4745, 0.0
        %v4778 = vmax.f32 %v4746, 0.0
        %v4779 = vmax.f32 %v4747, 0.0
        %v4780 = vmax.f32 %v4748, 0.0
        %v4781 = vmax.f32 %v4749, 0.0
        %v4782 = vmax.f32 %v4750, 0.0
        %v4783 = vmax.f32 %v4751, 0.0
        %v4784 = vmax.f32 %v4752, 0.0
        %v4785 = vmax.f32 %v4753, 0.0
        %v4786 = vmax.f32 %v4754, 0.0
        %v4787 = vmax.f32 %v4755, 0.0
        %v4788 = vmax.f32 %v4756, 0.0
        %v4789 = vmax.f32 %v4757, 0.0
        %v4790 = vmax.f32 %v4758, 0.0
        %v4791 = vmax.f32 %v4759, 0.0
        %v4792 = vmax.f32 %v4760, 0.0
        %v4793 = vmax.f32 %v4761, 0.0
        %v4794 = vmax.f32 %v4762, 0.0
        %v4795 = vmax.f32 %v4763, 0.0
        %v4796 = vmax.f32 %v4764, 0.0
        %v4797 = vmax.f32 %v4765, 0.0
        %v4798 = vmax.f32 %v4766, 0.0
        %v4799 = vmax.f32 %v4767, 0.0
        %v4800 = vmax.f32 %v4768, 0.0
        %v4801 = vmax.f32 %v4769, 0.0
        %v4802 = vmax.f32 %v4770, 0.0
        %v4803 = vmax.f32 %v4771, 0.0
        %v4804 = vmax.f32 %v4772, 0.0
        %v4805 = vpack.c.bf16 %v4773, %v4773
        %v4806 = vpack.c.bf16 %v4774, %v4774
        %v4807 = vpack.c.bf16 %v4775, %v4775
        %v4808 = vpack.c.bf16 %v4776, %v4776
        %v4809 = vpack.c.bf16 %v4777, %v4777
        %v4810 = vpack.c.bf16 %v4778, %v4778
        %v4811 = vpack.c.bf16 %v4779, %v4779
        %v4812 = vpack.c.bf16 %v4780, %v4780
        %v4813 = vpack.c.bf16 %v4781, %v4781
        %v4814 = vpack.c.bf16 %v4782, %v4782
        %v4815 = vpack.c.bf16 %v4783, %v4783
        %v4816 = vpack.c.bf16 %v4784, %v4784
        %v4817 = vpack.c.bf16 %v4785, %v4785
        %v4818 = vpack.c.bf16 %v4786, %v4786
        %v4819 = vpack.c.bf16 %v4787, %v4787
        %v4820 = vpack.c.bf16 %v4788, %v4788
        %v4821 = vpack.c.bf16 %v4789, %v4789
        %v4822 = vpack.c.bf16 %v4790, %v4790
        %v4823 = vpack.c.bf16 %v4791, %v4791
        %v4824 = vpack.c.bf16 %v4792, %v4792
        %v4825 = vpack.c.bf16 %v4793, %v4793
        %v4826 = vpack.c.bf16 %v4794, %v4794
        %v4827 = vpack.c.bf16 %v4795, %v4795
        %v4828 = vpack.c.bf16 %v4796, %v4796
        %v4829 = vpack.c.bf16 %v4797, %v4797
        %v4830 = vpack.c.bf16 %v4798, %v4798
        %v4831 = vpack.c.bf16 %v4799, %v4799
        %v4832 = vpack.c.bf16 %v4800, %v4800
        %v4833 = vpack.c.bf16 %v4801, %v4801
        %v4834 = vpack.c.bf16 %v4802, %v4802
        %v4835 = vpack.c.bf16 %v4803, %v4803
        %v4836 = vpack.c.bf16 %v4804, %v4804
        %4837 = vst [vmem:[%s315] sm:$0xf] %v4805
        %4838 = vst [vmem:[%s315 + $0x4] sm:$0xf] %v4806
        %4839 = vst [vmem:[%s315 + $0x8] sm:$0xf] %v4807
        %4840 = vst [vmem:[%s315 + $0xc] sm:$0xf] %v4808
        %4841 = vst [vmem:[%s315 + $0x10] sm:$0xf] %v4809
        %4842 = vst [vmem:[%s315 + $0x14] sm:$0xf] %v4810
        %4843 = vst [vmem:[%s315 + $0x18] sm:$0xf] %v4811
        %4844 = vst [vmem:[%s315 + $0x1c] sm:$0xf] %v4812
        %4845 = vst [vmem:[%s315 + $0x20] sm:$0xf] %v4813
        %4846 = vst [vmem:[%s315 + $0x24] sm:$0xf] %v4814
        %4847 = vst [vmem:[%s315 + $0x28] sm:$0xf] %v4815
        %4848 = vst [vmem:[%s315 + $0x2c] sm:$0xf] %v4816
        %4849 = vst [vmem:[%s315 + $0x30] sm:$0xf] %v4817
        %4850 = vst [vmem:[%s315 + $0x34] sm:$0xf] %v4818
        %4851 = vst [vmem:[%s315 + $0x38] sm:$0xf] %v4819
        %4852 = vst [vmem:[%s315 + $0x3c] sm:$0xf] %v4820
        %4853 = vst [vmem:[%s315 + $0x40] sm:$0xf] %v4821
        %4854 = vst [vmem:[%s315 + $0x44] sm:$0xf] %v4822
        %4855 = vst [vmem:[%s315 + $0x48] sm:$0xf] %v4823
        %4856 = vst [vmem:[%s315 + $0x4c] sm:$0xf] %v4824
        %4857 = vst [vmem:[%s315 + $0x50] sm:$0xf] %v4825
        %4858 = vst [vmem:[%s315 + $0x54] sm:$0xf] %v4826
        %4859 = vst [vmem:[%s315 + $0x58] sm:$0xf] %v4827
        %4860 = vst [vmem:[%s315 + $0x5c] sm:$0xf] %v4828
        %4861 = vst [vmem:[%s315 + $0x60] sm:$0xf] %v4829
        %4862 = vst [vmem:[%s315 + $0x64] sm:$0xf] %v4830
        %4863 = vst [vmem:[%s315 + $0x68] sm:$0xf] %v4831
        %4864 = vst [vmem:[%s315 + $0x6c] sm:$0xf] %v4832
        %4865 = vst [vmem:[%s315 + $0x70] sm:$0xf] %v4833
        %4866 = vst [vmem:[%s315 + $0x74] sm:$0xf] %v4834
        %4867 = vst [vmem:[%s315 + $0x78] sm:$0xf] %v4835
        %4868 = vst [vmem:[%s315 + $0x7c] sm:$0xf] %v4836
        %s4869 = sand.u32 %s205, 1
        %s4870 = scalar_lea.sflag [#allocation3], %s4869
        %s4871 = sand.u32 %s205, 1
        %s4872 = smul.addr %s4871, 128
        %s4873 = scalar_lea.vmem [#allocation2], %s4872
        // Predicated region
        $region49: #{tpu_custom_call.1} parent=47 // pred_check
          %p4874 = pneg %p215
        $region50: #{tpu_custom_call.1} parent=47 // pred_check_branch
          %4876 = sbr.rel (%p4874) target = $region52
        $region51: #{tpu_custom_call.1} parent=47 // pred_region
          %s4877 = smul.u32 8, %s26
          %4879 = vsyncadd %s4870, 0
          %s4880 = smul.addr %s4877, 4
          %s4881 = smul.addr %s25, 128
          %s4882 = sadd.s32 %s4880, %s4881
          %s4883 = smul.addr %s4882, 4
          %s4884 = scalar_lea.hbm %s7, %s4883
          %s4885 = sshll.u32 %s4873, 4
          %s4886 = int_to_ptr.vmem [resolvable:$true] %s4885
          %s4887 = sshll.u32 %s4884, 4
          %s4888 = int_to_ptr.hbm [resolvable:$true] %s4887
          %4893 = dma.vmem_to_hbm [thread:$0]  %s4886, 2048, %s4888, %s4870, 64, 64, 4
        $region52: #{tpu_custom_call.1} parent=47 // pred_fallthru
          _
      $region48: #{tpu_custom_call.1} parent=5 // pred_fallthru
        _
      %p4894 = scmp.le.s32.totalorder 2, %s16
      // Predicated region
      $region53: #{tpu_custom_call.1} parent=5 // pred_check
        %p4895 = pneg %p4894
      $region54: #{tpu_custom_call.1} parent=5 // pred_check_branch
        %4897 = sbr.rel (%p4895) target = $region56
      $region55: #{tpu_custom_call.1} parent=5 // pred_region
        %s4898 = ssub.s32 %s16, 2
        // Predicated region
        $region57: #{tpu_custom_call.1} parent=55 // pred_check
          %p4899 = pneg %p221
        $region58: #{tpu_custom_call.1} parent=55 // pred_check_branch
          %4901 = sbr.rel (%p4899) target = $region60
        $region59: #{tpu_custom_call.1} parent=55 // pred_region
          %s4902 = sand.u32 %s206, 1
          %s4903 = scalar_lea.sflag [#allocation3], %s4902
          %s4904 = sand.u32 %s206, 1
          %s4905 = smul.addr %s4904, 128
          %s4906 = scalar_lea.vmem [#allocation2], %s4905
          %4908 = dma.done %s4903, 2048
        $region60: #{tpu_custom_call.1} parent=55 // pred_fallthru
          _
      $region56: #{tpu_custom_call.1} parent=5 // pred_fallthru
        _
    $region6: #{tpu_custom_call.1} parent=1 // loop_footer
      %s20 = sadd.s32 1, %s16
    $region7: #{tpu_custom_call.1} parent=1 // loop_footer_branch
      %15 = sbr.rel target = $region3
    $region8: #{tpu_custom_call.1} parent=1 // loop_exit
      _
    %4909 = vsyncpa [#allocation3], 1
    %s4910 = scalar_lea.sflag [#allocation3], 1
    %4911 = vsyncpa %s4910, 1

</llo_original>
